<compile_context>
chip_gen: v5e
topology: v5e:2x2
jax: 0.10.0
libtpu: 0.0.40
codegen_flags: <defaults>
</compile_context>

<pallas_src>
import math
import functools

import jax
import jax.numpy as jnp
from jax.experimental import pallas as pl
from jax.experimental.pallas import tpu as pltpu

D_MODEL = 256
N_HEADS = 8
N_LEVELS = 4
N_POINTS = 4
HEAD_DIM = D_MODEL // N_HEADS
ATTN_SCALE = 1.0 / math.sqrt(HEAD_DIM)
NEG_INF = -1e30

_PAR1 = pltpu.CompilerParams(dimension_semantics=("parallel",))


# --------------------------- in-kernel helpers -------------------------------

def _ln(x, g, b):
    """LayerNorm (eps=1e-5), f32 math."""
    m = jnp.mean(x, axis=-1, keepdims=True)
    xc = x - m
    v = jnp.mean(xc * xc, axis=-1, keepdims=True)
    return xc * jax.lax.rsqrt(v + 1e-5) * g + b


def _attend(q, k, v, bias, wo, bo, *, n_heads):
    """Multi-head masked softmax attention incl. output projection.

    q,k,v are f32 (Lq,E)/(S,E); bias is (1,S) additive key bias; wo is bf16
    (E,E).  Per-head context is accumulated straight into the out-projection
    (no lane concatenation); q/k/v are cast to bf16 once.
    """
    E = q.shape[-1]
    hd = E // n_heads
    qb = (q * ATTN_SCALE).astype(jnp.bfloat16)   # scale folded into the cast
    kb = k.astype(jnp.bfloat16)
    vb = v.astype(jnp.bfloat16)
    acc = jnp.zeros((q.shape[0], E), jnp.float32)
    for h in range(n_heads):                     # unrolled; scores live in VMEM
        lo = h * hd
        qh = qb[:, lo:lo + hd]
        kh = kb[:, lo:lo + hd]
        vh = vb[:, lo:lo + hd]
        s = jax.lax.dot_general(qh, kh, (((1,), (1,)), ((), ())),
                                preferred_element_type=jnp.float32)   # (Lq, S)
        s = s + bias
        s = s - jnp.max(s, axis=-1, keepdims=True)
        p = jnp.exp(s)
        p = p * pl.reciprocal(jnp.sum(p, axis=-1, keepdims=True), approx=True)
        ctx = jnp.dot(p.astype(jnp.bfloat16), vh,
                      preferred_element_type=jnp.float32)             # (Lq, hd)
        acc = acc + jnp.dot(ctx.astype(jnp.bfloat16), wo[lo:lo + hd, :],
                            preferred_element_type=jnp.float32)
    return acc + bo


# ------------------ kernel 1: img2text MHA + verify + residual ---------------

def _img_text_verify_kernel(img1_ref, pos1_ref, word_ref, wbias_ref,
                            wq_ref, bq_ref, wkv_ref, bkv_ref, wo_ref, bo_ref,
                            worig_ref, borig_ref, wadapt_ref, badapt_ref,
                            scale_ref, sigma_ref,
                            qk_ref, verify_ref, *, n_heads):
    img1 = img1_ref[0]                                        # (L1, E) f32
    xq = (img1 + pos1_ref[0]).astype(jnp.bfloat16)
    xw = word_ref[0].astype(jnp.bfloat16)                     # (Sp, E)
    bias = wbias_ref[0]                                       # (1, Sp)
    E = img1.shape[-1]

    q = jnp.dot(xq, wq_ref[...], preferred_element_type=jnp.float32) + bq_ref[...]
    kv = jnp.dot(xw, wkv_ref[...], preferred_element_type=jnp.float32) + bkv_ref[...]
    adapt = _attend(q, kv[:, :E], kv[:, E:], bias, wo_ref[...], bo_ref[...],
                    n_heads=n_heads)                          # (L1, E)

    qk_ref[0] = img1 + adapt                                  # residual out

    eo = jnp.dot(img1.astype(jnp.bfloat16), worig_ref[...],
                 preferred_element_type=jnp.float32) + borig_ref[...]
    ea = jnp.dot(adapt.astype(jnp.bfloat16), wadapt_ref[...],
                 preferred_element_type=jnp.float32) + badapt_ref[...]
    eo = eo * jax.lax.rsqrt(jnp.maximum(jnp.sum(eo * eo, axis=-1, keepdims=True),
                                        1e-24))
    ea = ea * jax.lax.rsqrt(jnp.maximum(jnp.sum(ea * ea, axis=-1, keepdims=True),
                                        1e-24))
    sim = jnp.sum(eo * ea, axis=-1, keepdims=True)            # (L1, 1)
    tf_scale = scale_ref[0, 0]
    tf_sigma = sigma_ref[0, 0]
    d = 1.0 - sim
    verify_ref[0] = tf_scale * jnp.exp(-(d * d) / (2.0 * tf_sigma * tf_sigma))


def img_text_verify(p_attn, p_orig, p_adapt, tf_scale, tf_sigma,
                    img1, pos1, wordp, wbias):
    B, L1, E = img1.shape
    Sp = wordp.shape[1]
    kern = functools.partial(_img_text_verify_kernel, n_heads=N_HEADS)
    return pl.pallas_call(
        kern,
        grid=(B,),
        in_specs=[pl.BlockSpec((1, L1, E), lambda b: (b, 0, 0)),
                  pl.BlockSpec((1, L1, E), lambda b: (b, 0, 0)),
                  pl.BlockSpec((1, Sp, E), lambda b: (b, 0, 0)),
                  pl.BlockSpec((1, 1, Sp), lambda b: (b, 0, 0)),
                  pl.BlockSpec((E, E), lambda b: (0, 0)),
                  pl.BlockSpec((1, E), lambda b: (0, 0)),
                  pl.BlockSpec((E, 2 * E), lambda b: (0, 0)),
                  pl.BlockSpec((1, 2 * E), lambda b: (0, 0)),
                  pl.BlockSpec((E, E), lambda b: (0, 0)),
                  pl.BlockSpec((1, E), lambda b: (0, 0)),
                  pl.BlockSpec((E, E), lambda b: (0, 0)),
                  pl.BlockSpec((1, E), lambda b: (0, 0)),
                  pl.BlockSpec((E, E), lambda b: (0, 0)),
                  pl.BlockSpec((1, E), lambda b: (0, 0)),
                  pl.BlockSpec(memory_space=pltpu.MemorySpace.SMEM),
                  pl.BlockSpec(memory_space=pltpu.MemorySpace.SMEM)],
        out_specs=(pl.BlockSpec((1, L1, E), lambda b: (b, 0, 0)),
                   pl.BlockSpec((1, L1, 1), lambda b: (b, 0, 0))),
        out_shape=(jax.ShapeDtypeStruct((B, L1, E), jnp.float32),
                   jax.ShapeDtypeStruct((B, L1, 1), jnp.float32)),
        compiler_params=_PAR1,
    )(img1, pos1, wordp, wbias,
      p_attn['wq'], p_attn['bq'], p_attn['wkv'], p_attn['bkv'],
      p_attn['wo'], p_attn['bo'],
      p_orig['w'], p_orig['b'], p_adapt['w'], p_adapt['b'],
      tf_scale, tf_sigma)


# ---------------- kernel 2: full depth path (MHA -> MHA -> LN) ----------------

def _depth_path_kernel(depth_ref, word_ref, wbias_ref, dbias_ref, score_ref,
                       wq1_ref, bq1_ref, wkv1_ref, bkv1_ref, wo1_ref, bo1_ref,
                       wqk2_ref, bqk2_ref, wv2_ref, bv2_ref, wo2_ref, bo2_ref,
                       g1_ref, b1_ref, g2_ref, b2_ref, out_ref, *, n_heads):
    xd = depth_ref[0]                                          # (Ld, E) f32
    xw = word_ref[0].astype(jnp.bfloat16)                      # (Sp, E)
    E = xd.shape[-1]

    # depth2textcross attention: query = depth, key = value = word_feat
    q1 = jnp.dot(xd.astype(jnp.bfloat16), wq1_ref[...],
                 preferred_element_type=jnp.float32) + bq1_ref[...]
    kv1 = jnp.dot(xw, wkv1_ref[...],
                  preferred_element_type=jnp.float32) + bkv1_ref[...]
    attn1 = _attend(q1, kv1[:, :E], kv1[:, E:], wbias_ref[0],
                    wo1_ref[...], bo1_ref[...], n_heads=n_heads)

    q2 = xd + attn1                                            # query == key

    # depth2depth attention: query = key = q2, value = depth
    qk2 = jnp.dot(q2.astype(jnp.bfloat16), wqk2_ref[...],
                  preferred_element_type=jnp.float32) + bqk2_ref[...]
    v2 = jnp.dot(xd.astype(jnp.bfloat16), wv2_ref[...],
                 preferred_element_type=jnp.float32) + bv2_ref[...]
    attn2 = _attend(qk2[:, :E], qk2[:, E:], v2, dbias_ref[0],
                    wo2_ref[...], bo2_ref[...], n_heads=n_heads)

    out_ref[0] = (_ln(xd, g1_ref[...], b1_ref[...]) +
                  _ln(attn2, g2_ref[...], b2_ref[...])) * score_ref[0]


def depth_path(p1, p2, ln_d, ln_td, depth_bf, wordp, wbias, dbias, score):
    B, Ld, E = depth_bf.shape
    Sp = wordp.shape[1]
    kern = functools.partial(_depth_path_kernel, n_heads=N_HEADS)
    return pl.pallas_call(
        kern,
        grid=(B,),
        in_specs=[pl.BlockSpec((1, Ld, E), lambda b: (b, 0, 0)),
                  pl.BlockSpec((1, Sp, E), lambda b: (b, 0, 0)),
                  pl.BlockSpec((1, 1, Sp), lambda b: (b, 0, 0)),
                  pl.BlockSpec((1, 1, Ld), lambda b: (b, 0, 0)),
                  pl.BlockSpec((1, Ld, 1), lambda b: (b, 0, 0)),
                  pl.BlockSpec((E, E), lambda b: (0, 0)),
                  pl.BlockSpec((1, E), lambda b: (0, 0)),
                  pl.BlockSpec((E, 2 * E), lambda b: (0, 0)),
                  pl.BlockSpec((1, 2 * E), lambda b: (0, 0)),
                  pl.BlockSpec((E, E), lambda b: (0, 0)),
                  pl.BlockSpec((1, E), lambda b: (0, 0)),
                  pl.BlockSpec((E, 2 * E), lambda b: (0, 0)),
                  pl.BlockSpec((1, 2 * E), lambda b: (0, 0)),
                  pl.BlockSpec((E, E), lambda b: (0, 0)),
                  pl.BlockSpec((1, E), lambda b: (0, 0)),
                  pl.BlockSpec((E, E), lambda b: (0, 0)),
                  pl.BlockSpec((1, E), lambda b: (0, 0)),
                  pl.BlockSpec((1, E), lambda b: (0, 0)),
                  pl.BlockSpec((1, E), lambda b: (0, 0)),
                  pl.BlockSpec((1, E), lambda b: (0, 0)),
                  pl.BlockSpec((1, E), lambda b: (0, 0))],
        out_specs=pl.BlockSpec((1, Ld, E), lambda b: (b, 0, 0)),
        out_shape=jax.ShapeDtypeStruct((B, Ld, E), jnp.float32),
        compiler_params=_PAR1,
    )(depth_bf, wordp, wbias, dbias, score,
      p1['wq'], p1['bq'], p1['wkv'], p1['bkv'], p1['wo'], p1['bo'],
      p2['wqk'], p2['bqk'], p2['wv'], p2['bv'], p2['wo'], p2['bo'],
      ln_d['g'], ln_d['b'], ln_td['g'], ln_td['b'])


# --------- kernel 3: MSDeformAttn input projections (batch folded) -----------

def _msdeform_in_kernel(xq_ref, xv_ref, keep_ref, woff_ref, boff_ref,
                        wval_ref, bval_ref, off_ref, aw_ref, val_ref,
                        *, n_heads, n_lp, n_off):
    # fused sampling-offset + attention-weight projection (lane-dense 384 out)
    offaw = jnp.dot(xq_ref[...].astype(jnp.bfloat16), woff_ref[...],
                    preferred_element_type=jnp.float32) + boff_ref[...]
    off_ref[...] = offaw[:, :n_off]
    # per-head softmax over the 16 (levels*points) attention-weight lanes
    for h in range(n_heads):
        lo = n_off + h * n_lp
        seg = offaw[:, lo:lo + n_lp]
        seg = seg - jnp.max(seg, axis=-1, keepdims=True)
        e = jnp.exp(seg)
        aw_ref[:, h * n_lp:(h + 1) * n_lp] = e * pl.reciprocal(
            jnp.sum(e, axis=-1, keepdims=True), approx=True)
    # masked value projection (padding-mask zeroing folded in)
    val = jnp.dot(xv_ref[...].astype(jnp.bfloat16), wval_ref[...],
                  preferred_element_type=jnp.float32) + bval_ref[...]
    val_ref[...] = val * keep_ref[...]


def msdeform_in(p, x_query, x_value, keep):
    M, E = x_query.shape
    n_off = N_HEADS * N_LEVELS * N_POINTS * 2       # 256
    n_aw = N_HEADS * N_LEVELS * N_POINTS            # 128
    kern = functools.partial(_msdeform_in_kernel, n_heads=N_HEADS,
                             n_lp=N_LEVELS * N_POINTS, n_off=n_off)
    return pl.pallas_call(
        kern,
        grid=(1,),
        in_specs=[pl.BlockSpec((M, E), lambda i: (0, 0)),
                  pl.BlockSpec((M, E), lambda i: (0, 0)),
                  pl.BlockSpec((M, 1), lambda i: (0, 0)),
                  pl.BlockSpec((E, n_off + n_aw), lambda i: (0, 0)),
                  pl.BlockSpec((1, n_off + n_aw), lambda i: (0, 0)),
                  pl.BlockSpec((E, E), lambda i: (0, 0)),
                  pl.BlockSpec((1, E), lambda i: (0, 0))],
        out_specs=(pl.BlockSpec((M, n_off), lambda i: (0, 0)),
                   pl.BlockSpec((M, n_aw), lambda i: (0, 0)),
                   pl.BlockSpec((M, E), lambda i: (0, 0))),
        out_shape=(jax.ShapeDtypeStruct((M, n_off), jnp.float32),
                   jax.ShapeDtypeStruct((M, n_aw), jnp.float32),
                   jax.ShapeDtypeStruct((M, E), jnp.float32)),
    )(x_query, x_value, keep, p['offaw_w'], p['offaw_b'], p['val_w'], p['val_b'])


# -------- kernel 4: MSDeformAttn output proj + dual LayerNorm + scale --------

def _out_ln_kernel(sampled_ref, orig_ref, wout_ref, bout_ref,
                   g1_ref, b1_ref, g2_ref, b2_ref, s_ref, o_ref):
    ctx = jnp.dot(sampled_ref[0].astype(jnp.bfloat16), wout_ref[...],
                  preferred_element_type=jnp.float32) + bout_ref[...]
    o_ref[0] = (_ln(orig_ref[0], g1_ref[...], b1_ref[...]) +
                _ln(ctx, g2_ref[...], b2_ref[...])) * s_ref[0]


def msdeform_out_ln(p, ln1, ln2, sampled, orig, score):
    B, L, E = orig.shape
    return pl.pallas_call(
        _out_ln_kernel,
        grid=(B,),
        in_specs=[pl.BlockSpec((1, L, E), lambda b: (b, 0, 0)),
                  pl.BlockSpec((1, L, E), lambda b: (b, 0, 0)),
                  pl.BlockSpec((E, E), lambda b: (0, 0)),
                  pl.BlockSpec((1, E), lambda b: (0, 0)),
                  pl.BlockSpec((1, E), lambda b: (0, 0)),
                  pl.BlockSpec((1, E), lambda b: (0, 0)),
                  pl.BlockSpec((1, E), lambda b: (0, 0)),
                  pl.BlockSpec((1, E), lambda b: (0, 0)),
                  pl.BlockSpec((1, L, 1), lambda b: (b, 0, 0))],
        out_specs=pl.BlockSpec((1, L, E), lambda b: (b, 0, 0)),
        out_shape=jax.ShapeDtypeStruct((B, L, E), jnp.float32),
        compiler_params=_PAR1,
    )(sampled, orig, p['out_w'], p['out_b'],
      ln1['g'], ln1['b'], ln2['g'], ln2['b'], score)


# ---------------------- MSDeformAttn bilinear sampling ----------------------

def _ms_deform_sample(value, sampling_locations, attention_weights,
                      spatial_shapes, level_start_index):
    """F.grid_sample(bilinear, zeros, align_corners=False) + weighted sum over
    levels/points, done as ONE batched gather across all levels & corners."""
    # TODO(synk): data-dependent bilinear gather kept in plain JAX; a
    # scalar-prefetch Pallas gather fused with the out projection is the next
    # optimization step.
    N, Lin, nH, hd = value.shape
    idx_all, w_all = [], []
    for lid, (H, W) in enumerate(spatial_shapes):
        loc = sampling_locations[:, :, :, lid]           # (N, Lq, h, P, 2)
        aw_l = attention_weights[:, :, :, lid]           # (N, Lq, h, P)
        x = loc[..., 0] * W - 0.5
        y = loc[..., 1] * H - 0.5
        x0 = jnp.floor(x)
        y0 = jnp.floor(y)
        fx = x - x0
        fy = y - y0
        for dx, dy in ((0, 0), (1, 0), (0, 1), (1, 1)):
            xf = x0 + dx
            yf = y0 + dy
            wc = (fx if dx else 1.0 - fx) * (fy if dy else 1.0 - fy)
            valid = ((xf >= 0) & (xf <= W - 1) & (yf >= 0) & (yf <= H - 1))
            xi = jnp.clip(xf, 0, W - 1).astype(jnp.int32)
            yi = jnp.clip(yf, 0, H - 1).astype(jnp.int32)
            idx_all.append(level_start_index[lid] + yi * W + xi)
            w_all.append(wc * valid.astype(jnp.float32) * aw_l)

    Lq = sampling_locations.shape[1]
    idx = jnp.stack(idx_all, axis=-1).reshape(N, Lq, nH, -1)   # (N,Lq,h,K)
    wgt = jnp.stack(w_all, axis=-1).reshape(N, Lq, nH, -1)     # (N,Lq,h,K)
    K = idx.shape[-1]

    v_t = value.transpose(0, 2, 1, 3).reshape(N * nH, Lin, hd)
    idx_t = jnp.transpose(idx, (0, 2, 1, 3)).reshape(N * nH, Lq * K)
    g = jax.vmap(lambda v, i: v[i])(v_t, idx_t).reshape(N * nH, Lq, K, hd)
    w_t = jnp.transpose(wgt, (0, 2, 1, 3)).reshape(N * nH, Lq, K)
    out = jnp.einsum('bqk,bqkd->bqd', w_t, g)
    return out.reshape(N, nH, Lq, hd).transpose(0, 2, 1, 3).reshape(N, Lq, nH * hd)


# --------------------------- score-map resampling ---------------------------

def upsample2x_bilinear(x):
    """nn.Upsample(scale_factor=2, mode='bilinear', align_corners=False) on (B,H,W)."""
    # TODO(synk): tiny 8x8 score-map resampling done in plain JAX glue.
    def interp(x, axis):
        in_size = x.shape[axis]
        out_size = 2 * in_size
        src = jnp.maximum((jnp.arange(out_size) + 0.5) * 0.5 - 0.5, 0.0)
        i0 = jnp.floor(src).astype(jnp.int32)
        i1 = jnp.minimum(i0 + 1, in_size - 1)
        w = src - i0.astype(jnp.float32)
        g0 = jnp.take(x, i0, axis=axis)
        g1 = jnp.take(x, i1, axis=axis)
        shp = [1] * x.ndim
        shp[axis] = out_size
        w = w.reshape(shp)
        return g0 * (1.0 - w) + g1 * w
    return interp(interp(x, 1), 2)


def maxpool3x3s2p1(x):
    """nn.MaxPool2d(kernel_size=3, stride=2, padding=1) on (B,H,W)."""
    return jax.lax.reduce_window(
        x, jnp.array(-jnp.inf, x.dtype), jax.lax.max,
        window_dimensions=(1, 3, 3), window_strides=(1, 2, 2),
        padding=((0, 0), (1, 1), (1, 1)))


# ----------------------------- full forward ---------------------------------

def text_guided_adapter(params, img_feat_src, masks, img_pos_embeds,
                        reference_points, spatial_shapes, level_start_index,
                        src_valid_ratios, word_feat, word_key_padding_mask,
                        depth_pos_embed, mask_depth, word_pos=None):
    bs, total, d = img_feat_src.shape
    sizes = [h * w for h, w in spatial_shapes]

    def split_levels(x):
        return [x[:, s:s + n] for s, n in zip(level_start_index, sizes)]

    feat_l = split_levels(img_feat_src)
    pos_l = split_levels(img_pos_embeds)
    img1, pos1 = feat_l[1], pos_l[1]

    # Key/value source for both cross attentions; the fused [Wk|Wv] matmul
    # assumes key-source == value-source, which holds because word_pos is None
    # in this module's call path.
    # TODO(synk): if word_pos is ever non-None, split the K/V projection again.
    word_src = word_feat if word_pos is None else word_feat + word_pos

    # pad word key/value length to a lane-dense multiple of 128
    Sw = word_feat.shape[1]
    sp = max(128, ((Sw + 127) // 128) * 128)
    wordp = jnp.pad(word_src, ((0, 0), (0, sp - Sw), (0, 0)))
    wmask = jnp.pad(word_key_padding_mask, ((0, 0), (0, sp - Sw)),
                    constant_values=True)
    wbias = jnp.where(wmask, NEG_INF, 0.0).astype(jnp.float32)[:, None, :]

    # fused img2text attention + orig/adapt proj + verify score + residual
    qk, verify = img_text_verify(params['img2text_attn'], params['orig_proj'],
                                 params['adapt_proj'], params['tf_scale'],
                                 params['tf_sigma'], img1, pos1, wordp, wbias)

    H1, W1 = spatial_shapes[1]
    vs16 = verify.reshape(bs, H1, W1)
    vs8 = upsample2x_bilinear(vs16)
    vs32 = maxpool3x3s2p1(vs16)
    vs64 = maxpool3x3s2p1(vs32)
    verify_all = jnp.concatenate(
        [vs8.reshape(bs, -1), vs16.reshape(bs, -1),
         vs32.reshape(bs, -1), vs64.reshape(bs, -1)], axis=1)[..., None]

    src = jnp.concatenate([feat_l[0], qk, feat_l[2], feat_l[3]], axis=1)
    ref_in = reference_points[:, :, None, :] * src_valid_ratios[:, None, :, :]

    # ---- MSDeformAttn (value/offset/weight projections batch-folded) ----
    query = src + img_pos_embeds
    keep = (1.0 - masks.astype(jnp.float32)).reshape(bs * total, 1)
    offs_flat, aw_flat, val_flat = msdeform_in(
        params['msdeform'], query.reshape(bs * total, d),
        img_feat_src.reshape(bs * total, d), keep)

    value = val_flat.reshape(bs, total, N_HEADS, HEAD_DIM)
    offs = offs_flat.reshape(bs, total, N_HEADS, N_LEVELS, N_POINTS, 2)
    aw = aw_flat.reshape(bs, total, N_HEADS, N_LEVELS, N_POINTS)
    norm = jnp.array([[w, h] for (h, w) in spatial_shapes], jnp.float32)
    sampling_locations = (ref_in[:, :, None, :, None, :] +
                          offs / norm[None, None, None, :, None, :])
    sampled = _ms_deform_sample(value, sampling_locations, aw,
                                spatial_shapes, level_start_index)

    # fused MSDeformAttn output proj + dual LayerNorm + verify-score scaling
    adapt_img_feat = msdeform_out_ln(params['msdeform'], params['norm_img'],
                                     params['norm_text_cond_img'],
                                     sampled, img_feat_src, verify_all)

    # ---- depth path: two MHAs + dual LayerNorm fused in one pallas_call ----
    depth_bf = depth_pos_embed.transpose(1, 0, 2)            # (bs, Ld, d)
    dbias = jnp.where(mask_depth, NEG_INF, 0.0).astype(jnp.float32)[:, None, :]
    adapt_depth_bf = depth_path(params['depth2textcross_attn'],
                                params['depth2depth_attn'],
                                params['norm_depth'],
                                params['norm_text_cond_depth'],
                                depth_bf, wordp, wbias, dbias, verify)
    adapt_depth = adapt_depth_bf.transpose(1, 0, 2)

    out_img = jnp.concatenate([img_feat_src, adapt_img_feat], axis=-1)
    out_depth = jnp.concatenate([depth_pos_embed, adapt_depth], axis=-1)
    return out_img, out_depth


# ----------------------------- parameter init -------------------------------

def init_params(key):
    d = D_MODEL
    keys = iter(jax.random.split(key, 64))

    def lin(din, dout):
        # weights stored bf16 (MXU-native), biases f32, shaped (1, dout)
        w = (jax.random.normal(next(keys), (din, dout), jnp.float32)
             / math.sqrt(din)).astype(jnp.bfloat16)
        b = jax.random.normal(next(keys), (1, dout), jnp.float32) * 0.01
        return w, b

    params = {}
    # cross attentions: Wq separate, fused [Wk | Wv] -> (d, 2d)
    # (when loading real checkpoints, keep this exact column concat order)
    for name in ['img2text_attn', 'depth2textcross_attn']:
        wq, bq = lin(d, d)
        wkv, bkv = lin(d, 2 * d)
        wo, bo = lin(d, d)
        params[name] = dict(wq=wq, bq=bq, wkv=wkv, bkv=bkv, wo=wo, bo=bo)

    # self attention (query == key): fused [Wq | Wk] -> (d, 2d), separate Wv
    wqk, bqk = lin(d, 2 * d)
    wv, bv = lin(d, d)
    wo, bo = lin(d, d)
    params['depth2depth_attn'] = dict(wqk=wqk, bqk=bqk, wv=wv, bv=bv,
                                      wo=wo, bo=bo)

    for name in ['adapt_proj', 'orig_proj']:
        w, b = lin(d, d)
        params[name] = dict(w=w, b=b)

    params['tf_scale'] = jnp.array([[1.0]], jnp.float32)
    params['tf_sigma'] = jnp.array([[0.5]], jnp.float32)

    ms = {}
    # concatenated sampling-offset (256) + attention-weight (128) projection
    # (column order invariant: [sampling_offsets | attention_weights])
    ms['offaw_w'], ms['offaw_b'] = lin(
        d, N_HEADS * N_LEVELS * N_POINTS * 2 + N_HEADS * N_LEVELS * N_POINTS)
    ms['val_w'], ms['val_b'] = lin(d, d)
    ms['out_w'], ms['out_b'] = lin(d, d)
    params['msdeform'] = ms

    for name in ['norm_img', 'norm_text_cond_img', 'norm_depth',
                 'norm_text_cond_depth']:
        params[name] = dict(g=jnp.ones((1, d), jnp.float32),
                            b=jnp.zeros((1, d), jnp.float32))
    return params


# --------------------------------- main --------------------------------------

if __name__ == "__main__":
    bs = 2
    spatial_shapes = [(16, 16), (8, 8), (4, 4), (2, 2)]
    sizes = [h * w for h, w in spatial_shapes]
    total = sum(sizes)
    level_start_index = [0]
    for n in sizes[:-1]:
        level_start_index.append(level_start_index[-1] + n)
    Sw = 8
    Ld = spatial_shapes[1][0] * spatial_shapes[1][1]

    key = jax.random.PRNGKey(0)
    ks = jax.random.split(key, 8)
    img_feat_src = jax.random.normal(ks[0], (bs, total, D_MODEL), jnp.float32)
    img_pos_embeds = jax.random.normal(ks[1], (bs, total, D_MODEL), jnp.float32) * 0.1
    masks = jnp.zeros((bs, total), bool).at[:, -3:].set(True)
    reference_points = jax.random.uniform(ks[2], (bs, total, 2), jnp.float32)
    src_valid_ratios = jax.random.uniform(ks[3], (bs, N_LEVELS, 2), jnp.float32,
                                          minval=0.7, maxval=1.0)
    word_feat = jax.random.normal(ks[4], (bs, Sw, D_MODEL), jnp.float32)
    word_key_padding_mask = jnp.zeros((bs, Sw), bool).at[:, -2:].set(True)
    depth_pos_embed = jax.random.normal(ks[5], (Ld, bs, D_MODEL), jnp.float32)
    mask_depth = jnp.zeros((bs, Ld), bool)

    params = init_params(jax.random.PRNGKey(1))

    out_img, out_depth = text_guided_adapter(
        params, img_feat_src, masks, img_pos_embeds, reference_points,
        spatial_shapes, level_start_index, src_valid_ratios, word_feat,
        word_key_padding_mask, depth_pos_embed, mask_depth, word_pos=None)

    jax.block_until_ready((out_img, out_depth))
    assert out_img.shape == (bs, total, 2 * D_MODEL)
    assert out_depth.shape == (Ld, bs, 2 * D_MODEL)
    assert bool(jnp.isfinite(out_img).all()) and bool(jnp.isfinite(out_depth).all())
    print("KERNEL_OK")
</pallas_src>

<mosaic_0001>
module attributes {stable_mosaic.version = 11 : i64} {
  func.func @_img_text_verify_kernel(%arg0: i32, %arg1: memref<1x64x256xf32, #tpu.memory_space<vmem>>, %arg2: memref<1x64x256xf32, #tpu.memory_space<vmem>>, %arg3: memref<1x128x256xf32, #tpu.memory_space<vmem>>, %arg4: memref<1x1x128xf32, #tpu.memory_space<vmem>>, %arg5: memref<256x256xbf16, #tpu.memory_space<vmem>>, %arg6: memref<1x256xf32, #tpu.memory_space<vmem>>, %arg7: memref<256x512xbf16, #tpu.memory_space<vmem>>, %arg8: memref<1x512xf32, #tpu.memory_space<vmem>>, %arg9: memref<256x256xbf16, #tpu.memory_space<vmem>>, %arg10: memref<1x256xf32, #tpu.memory_space<vmem>>, %arg11: memref<256x256xbf16, #tpu.memory_space<vmem>>, %arg12: memref<1x256xf32, #tpu.memory_space<vmem>>, %arg13: memref<256x256xbf16, #tpu.memory_space<vmem>>, %arg14: memref<1x256xf32, #tpu.memory_space<vmem>>, %arg15: memref<1x1xf32, #tpu.memory_space<smem>>, %arg16: memref<1x1xf32, #tpu.memory_space<smem>>, %arg17: memref<1x64x256xf32, #tpu.memory_space<vmem>>, %arg18: memref<1x64x1xf32, #tpu.memory_space<vmem>>) attributes {dimension_semantics = [#tpu.dimension_semantics<parallel>], iteration_bounds = array<i64: 2>, scalar_prefetch = 0 : i64, scratch_operands = 0 : i64, tpu.core_type = #tpu.core_type<tc>, window_params = [{transform_indices = @transform_0, window_bounds = array<i64: 1, 64, 256>}, {transform_indices = @transform_1, window_bounds = array<i64: 1, 64, 256>}, {transform_indices = @transform_2, window_bounds = array<i64: 1, 128, 256>}, {transform_indices = @transform_3, window_bounds = array<i64: 1, 1, 128>}, {pipeline_mode = #tpu.pipeline_mode<synchronous>, transform_indices = @transform_4, window_bounds = array<i64: 256, 256>}, {pipeline_mode = #tpu.pipeline_mode<synchronous>, transform_indices = @transform_5, window_bounds = array<i64: 1, 256>}, {pipeline_mode = #tpu.pipeline_mode<synchronous>, transform_indices = @transform_6, window_bounds = array<i64: 256, 512>}, {pipeline_mode = #tpu.pipeline_mode<synchronous>, transform_indices = @transform_7, window_bounds = array<i64: 1, 512>}, {pipeline_mode = #tpu.pipeline_mode<synchronous>, transform_indices = @transform_8, window_bounds = array<i64: 256, 256>}, {pipeline_mode = #tpu.pipeline_mode<synchronous>, transform_indices = @transform_9, window_bounds = array<i64: 1, 256>}, {pipeline_mode = #tpu.pipeline_mode<synchronous>, transform_indices = @transform_10, window_bounds = array<i64: 256, 256>}, {pipeline_mode = #tpu.pipeline_mode<synchronous>, transform_indices = @transform_11, window_bounds = array<i64: 1, 256>}, {pipeline_mode = #tpu.pipeline_mode<synchronous>, transform_indices = @transform_12, window_bounds = array<i64: 256, 256>}, {pipeline_mode = #tpu.pipeline_mode<synchronous>, transform_indices = @transform_13, window_bounds = array<i64: 1, 256>}, {transform_indices = @transform_14, window_bounds = array<i64: 1, 1>}, {transform_indices = @transform_15, window_bounds = array<i64: 1, 1>}, {transform_indices = @transform_16, window_bounds = array<i64: 1, 64, 256>}, {transform_indices = @transform_17, window_bounds = array<i64: 1, 64, 1>}]} {
    %c0 = arith.constant 0 : index
    %c0_0 = arith.constant 0 : index
    %c0_1 = arith.constant 0 : index
    %0 = vector.load %arg1[%c0, %c0_0, %c0_1] : memref<1x64x256xf32, #tpu.memory_space<vmem>>, vector<1x64x256xf32>
    %1 = vector.shape_cast %0 : vector<1x64x256xf32> to vector<64x256xf32>
    %c0_2 = arith.constant 0 : index
    %c0_3 = arith.constant 0 : index
    %c0_4 = arith.constant 0 : index
    %2 = vector.load %arg2[%c0_2, %c0_3, %c0_4] : memref<1x64x256xf32, #tpu.memory_space<vmem>>, vector<1x64x256xf32>
    %3 = vector.shape_cast %2 : vector<1x64x256xf32> to vector<64x256xf32>
    %4 = arith.addf %1, %3 : vector<64x256xf32>
    %5 = arith.truncf %4 : vector<64x256xf32> to vector<64x256xbf16>
    %c0_5 = arith.constant 0 : index
    %c0_6 = arith.constant 0 : index
    %c0_7 = arith.constant 0 : index
    %6 = vector.load %arg3[%c0_5, %c0_6, %c0_7] : memref<1x128x256xf32, #tpu.memory_space<vmem>>, vector<1x128x256xf32>
    %7 = vector.shape_cast %6 : vector<1x128x256xf32> to vector<128x256xf32>
    %8 = arith.truncf %7 : vector<128x256xf32> to vector<128x256xbf16>
    %c0_8 = arith.constant 0 : index
    %c0_9 = arith.constant 0 : index
    %c0_10 = arith.constant 0 : index
    %9 = vector.load %arg4[%c0_8, %c0_9, %c0_10] : memref<1x1x128xf32, #tpu.memory_space<vmem>>, vector<1x1x128xf32>
    %10 = vector.shape_cast %9 : vector<1x1x128xf32> to vector<1x128xf32>
    %c0_11 = arith.constant 0 : index
    %c0_12 = arith.constant 0 : index
    %11 = vector.load %arg5[%c0_11, %c0_12] : memref<256x256xbf16, #tpu.memory_space<vmem>>, vector<256x256xbf16>
    %cst = arith.constant dense<0.000000e+00> : vector<64x256xf32>
    %12 = tpu.matmul %5, %11, %cst {dimension_numbers = #tpu.dot_dimension_numbers<[1], [0], [0], [1], [0, 0, 1, 1], [], []>} : vector<64x256xbf16>, vector<256x256xbf16>, vector<64x256xf32> -> vector<64x256xf32>
    %c0_13 = arith.constant 0 : index
    %c0_14 = arith.constant 0 : index
    %13 = vector.load %arg6[%c0_13, %c0_14] : memref<1x256xf32, #tpu.memory_space<vmem>>, vector<1x256xf32>
    %14 = vector.broadcast %13 : vector<1x256xf32> to vector<64x256xf32>
    %15 = arith.addf %12, %14 : vector<64x256xf32>
    %c0_15 = arith.constant 0 : index
    %c0_16 = arith.constant 0 : index
    %16 = vector.load %arg7[%c0_15, %c0_16] : memref<256x512xbf16, #tpu.memory_space<vmem>>, vector<256x512xbf16>
    %cst_17 = arith.constant dense<0.000000e+00> : vector<128x512xf32>
    %17 = tpu.matmul %8, %16, %cst_17 {dimension_numbers = #tpu.dot_dimension_numbers<[1], [0], [0], [1], [0, 0, 1, 1], [], []>} : vector<128x256xbf16>, vector<256x512xbf16>, vector<128x512xf32> -> vector<128x512xf32>
    %c0_18 = arith.constant 0 : index
    %c0_19 = arith.constant 0 : index
    %18 = vector.load %arg8[%c0_18, %c0_19] : memref<1x512xf32, #tpu.memory_space<vmem>>, vector<1x512xf32>
    %19 = vector.broadcast %18 : vector<1x512xf32> to vector<128x512xf32>
    %20 = arith.addf %17, %19 : vector<128x512xf32>
    %21 = vector.extract_strided_slice %20 {offsets = [0, 0], sizes = [128, 256], strides = [1, 1]} : vector<128x512xf32> to vector<128x256xf32>
    %22 = vector.extract_strided_slice %20 {offsets = [0, 256], sizes = [128, 256], strides = [1, 1]} : vector<128x512xf32> to vector<128x256xf32>
    %c0_20 = arith.constant 0 : index
    %c0_21 = arith.constant 0 : index
    %23 = vector.load %arg9[%c0_20, %c0_21] : memref<256x256xbf16, #tpu.memory_space<vmem>>, vector<256x256xbf16>
    %c0_22 = arith.constant 0 : index
    %c0_23 = arith.constant 0 : index
    %24 = vector.load %arg10[%c0_22, %c0_23] : memref<1x256xf32, #tpu.memory_space<vmem>>, vector<1x256xf32>
    %cst_24 = arith.constant 0.176776692 : f32
    %25 = vector.broadcast %cst_24 : f32 to vector<64x256xf32>
    %26 = arith.mulf %15, %25 : vector<64x256xf32>
    %27 = arith.truncf %26 : vector<64x256xf32> to vector<64x256xbf16>
    %28 = arith.truncf %21 : vector<128x256xf32> to vector<128x256xbf16>
    %29 = arith.truncf %22 : vector<128x256xf32> to vector<128x256xbf16>
    %cst_25 = arith.constant 0.000000e+00 : f32
    %30 = vector.broadcast %cst_25 : f32 to vector<64x256xf32>
    %31 = vector.extract_strided_slice %27 {offsets = [0, 0], sizes = [64, 32], strides = [1, 1]} : vector<64x256xbf16> to vector<64x32xbf16>
    %32 = vector.extract_strided_slice %28 {offsets = [0, 0], sizes = [128, 32], strides = [1, 1]} : vector<128x256xbf16> to vector<128x32xbf16>
    %33 = vector.extract_strided_slice %29 {offsets = [0, 0], sizes = [128, 32], strides = [1, 1]} : vector<128x256xbf16> to vector<128x32xbf16>
    %cst_26 = arith.constant dense<0.000000e+00> : vector<64x128xf32>
    %34 = tpu.matmul %31, %32, %cst_26 {dimension_numbers = #tpu.dot_dimension_numbers<[1], [1], [0], [0], [0, 0, 1, 0], [], []>} : vector<64x32xbf16>, vector<128x32xbf16>, vector<64x128xf32> -> vector<64x128xf32>
    %35 = vector.broadcast %10 : vector<1x128xf32> to vector<64x128xf32>
    %36 = arith.addf %34, %35 : vector<64x128xf32>
    %cst_27 = arith.constant dense<0xFF800000> : vector<64xf32>
    %37 = vector.multi_reduction <maximumf>, %36, %cst_27 [1] : vector<64x128xf32> to vector<64xf32>
    %38 = vector.shape_cast %37 : vector<64xf32> to vector<64x1xf32>
    %39 = vector.broadcast %38 : vector<64x1xf32> to vector<64x128xf32>
    %40 = arith.subf %36, %39 : vector<64x128xf32>
    %41 = math.exp %40 : vector<64x128xf32>
    %cst_28 = arith.constant dense<0.000000e+00> : vector<64xf32>
    %42 = vector.multi_reduction <add>, %41, %cst_28 [1] : vector<64x128xf32> to vector<64xf32>
    %43 = vector.shape_cast %42 : vector<64xf32> to vector<64x1xf32>
    %44 = tpu.reciprocal %43 {approx = true} : vector<64x1xf32> -> vector<64x1xf32>
    %45 = vector.broadcast %44 : vector<64x1xf32> to vector<64x128xf32>
    %46 = arith.mulf %41, %45 : vector<64x128xf32>
    %47 = arith.truncf %46 : vector<64x128xf32> to vector<64x128xbf16>
    %cst_29 = arith.constant dense<0.000000e+00> : vector<64x32xf32>
    %48 = tpu.matmul %47, %33, %cst_29 {dimension_numbers = #tpu.dot_dimension_numbers<[1], [0], [0], [1], [0, 0, 1, 1], [], []>} : vector<64x128xbf16>, vector<128x32xbf16>, vector<64x32xf32> -> vector<64x32xf32>
    %49 = arith.truncf %48 : vector<64x32xf32> to vector<64x32xbf16>
    %50 = vector.extract_strided_slice %23 {offsets = [0, 0], sizes = [32, 256], strides = [1, 1]} : vector<256x256xbf16> to vector<32x256xbf16>
    %cst_30 = arith.constant dense<0.000000e+00> : vector<64x256xf32>
    %51 = tpu.matmul %49, %50, %cst_30 {dimension_numbers = #tpu.dot_dimension_numbers<[1], [0], [0], [1], [0, 0, 1, 1], [], []>} : vector<64x32xbf16>, vector<32x256xbf16>, vector<64x256xf32> -> vector<64x256xf32>
    %52 = arith.addf %30, %51 : vector<64x256xf32>
    %53 = vector.extract_strided_slice %27 {offsets = [0, 32], sizes = [64, 32], strides = [1, 1]} : vector<64x256xbf16> to vector<64x32xbf16>
    %54 = vector.extract_strided_slice %28 {offsets = [0, 32], sizes = [128, 32], strides = [1, 1]} : vector<128x256xbf16> to vector<128x32xbf16>
    %55 = vector.extract_strided_slice %29 {offsets = [0, 32], sizes = [128, 32], strides = [1, 1]} : vector<128x256xbf16> to vector<128x32xbf16>
    %cst_31 = arith.constant dense<0.000000e+00> : vector<64x128xf32>
    %56 = tpu.matmul %53, %54, %cst_31 {dimension_numbers = #tpu.dot_dimension_numbers<[1], [1], [0], [0], [0, 0, 1, 0], [], []>} : vector<64x32xbf16>, vector<128x32xbf16>, vector<64x128xf32> -> vector<64x128xf32>
    %57 = vector.broadcast %10 : vector<1x128xf32> to vector<64x128xf32>
    %58 = arith.addf %56, %57 : vector<64x128xf32>
    %cst_32 = arith.constant dense<0xFF800000> : vector<64xf32>
    %59 = vector.multi_reduction <maximumf>, %58, %cst_32 [1] : vector<64x128xf32> to vector<64xf32>
    %60 = vector.shape_cast %59 : vector<64xf32> to vector<64x1xf32>
    %61 = vector.broadcast %60 : vector<64x1xf32> to vector<64x128xf32>
    %62 = arith.subf %58, %61 : vector<64x128xf32>
    %63 = math.exp %62 : vector<64x128xf32>
    %cst_33 = arith.constant dense<0.000000e+00> : vector<64xf32>
    %64 = vector.multi_reduction <add>, %63, %cst_33 [1] : vector<64x128xf32> to vector<64xf32>
    %65 = vector.shape_cast %64 : vector<64xf32> to vector<64x1xf32>
    %66 = tpu.reciprocal %65 {approx = true} : vector<64x1xf32> -> vector<64x1xf32>
    %67 = vector.broadcast %66 : vector<64x1xf32> to vector<64x128xf32>
    %68 = arith.mulf %63, %67 : vector<64x128xf32>
    %69 = arith.truncf %68 : vector<64x128xf32> to vector<64x128xbf16>
    %cst_34 = arith.constant dense<0.000000e+00> : vector<64x32xf32>
    %70 = tpu.matmul %69, %55, %cst_34 {dimension_numbers = #tpu.dot_dimension_numbers<[1], [0], [0], [1], [0, 0, 1, 1], [], []>} : vector<64x128xbf16>, vector<128x32xbf16>, vector<64x32xf32> -> vector<64x32xf32>
    %71 = arith.truncf %70 : vector<64x32xf32> to vector<64x32xbf16>
    %72 = vector.extract_strided_slice %23 {offsets = [32, 0], sizes = [32, 256], strides = [1, 1]} : vector<256x256xbf16> to vector<32x256xbf16>
    %cst_35 = arith.constant dense<0.000000e+00> : vector<64x256xf32>
    %73 = tpu.matmul %71, %72, %cst_35 {dimension_numbers = #tpu.dot_dimension_numbers<[1], [0], [0], [1], [0, 0, 1, 1], [], []>} : vector<64x32xbf16>, vector<32x256xbf16>, vector<64x256xf32> -> vector<64x256xf32>
    %74 = arith.addf %52, %73 : vector<64x256xf32>
    %75 = vector.extract_strided_slice %27 {offsets = [0, 64], sizes = [64, 32], strides = [1, 1]} : vector<64x256xbf16> to vector<64x32xbf16>
    %76 = vector.extract_strided_slice %28 {offsets = [0, 64], sizes = [128, 32], strides = [1, 1]} : vector<128x256xbf16> to vector<128x32xbf16>
    %77 = vector.extract_strided_slice %29 {offsets = [0, 64], sizes = [128, 32], strides = [1, 1]} : vector<128x256xbf16> to vector<128x32xbf16>
    %cst_36 = arith.constant dense<0.000000e+00> : vector<64x128xf32>
    %78 = tpu.matmul %75, %76, %cst_36 {dimension_numbers = #tpu.dot_dimension_numbers<[1], [1], [0], [0], [0, 0, 1, 0], [], []>} : vector<64x32xbf16>, vector<128x32xbf16>, vector<64x128xf32> -> vector<64x128xf32>
    %79 = vector.broadcast %10 : vector<1x128xf32> to vector<64x128xf32>
    %80 = arith.addf %78, %79 : vector<64x128xf32>
    %cst_37 = arith.constant dense<0xFF800000> : vector<64xf32>
    %81 = vector.multi_reduction <maximumf>, %80, %cst_37 [1] : vector<64x128xf32> to vector<64xf32>
    %82 = vector.shape_cast %81 : vector<64xf32> to vector<64x1xf32>
    %83 = vector.broadcast %82 : vector<64x1xf32> to vector<64x128xf32>
    %84 = arith.subf %80, %83 : vector<64x128xf32>
    %85 = math.exp %84 : vector<64x128xf32>
    %cst_38 = arith.constant dense<0.000000e+00> : vector<64xf32>
    %86 = vector.multi_reduction <add>, %85, %cst_38 [1] : vector<64x128xf32> to vector<64xf32>
    %87 = vector.shape_cast %86 : vector<64xf32> to vector<64x1xf32>
    %88 = tpu.reciprocal %87 {approx = true} : vector<64x1xf32> -> vector<64x1xf32>
    %89 = vector.broadcast %88 : vector<64x1xf32> to vector<64x128xf32>
    %90 = arith.mulf %85, %89 : vector<64x128xf32>
    %91 = arith.truncf %90 : vector<64x128xf32> to vector<64x128xbf16>
    %cst_39 = arith.constant dense<0.000000e+00> : vector<64x32xf32>
    %92 = tpu.matmul %91, %77, %cst_39 {dimension_numbers = #tpu.dot_dimension_numbers<[1], [0], [0], [1], [0, 0, 1, 1], [], []>} : vector<64x128xbf16>, vector<128x32xbf16>, vector<64x32xf32> -> vector<64x32xf32>
    %93 = arith.truncf %92 : vector<64x32xf32> to vector<64x32xbf16>
    %94 = vector.extract_strided_slice %23 {offsets = [64, 0], sizes = [32, 256], strides = [1, 1]} : vector<256x256xbf16> to vector<32x256xbf16>
    %cst_40 = arith.constant dense<0.000000e+00> : vector<64x256xf32>
    %95 = tpu.matmul %93, %94, %cst_40 {dimension_numbers = #tpu.dot_dimension_numbers<[1], [0], [0], [1], [0, 0, 1, 1], [], []>} : vector<64x32xbf16>, vector<32x256xbf16>, vector<64x256xf32> -> vector<64x256xf32>
    %96 = arith.addf %74, %95 : vector<64x256xf32>
    %97 = vector.extract_strided_slice %27 {offsets = [0, 96], sizes = [64, 32], strides = [1, 1]} : vector<64x256xbf16> to vector<64x32xbf16>
    %98 = vector.extract_strided_slice %28 {offsets = [0, 96], sizes = [128, 32], strides = [1, 1]} : vector<128x256xbf16> to vector<128x32xbf16>
    %99 = vector.extract_strided_slice %29 {offsets = [0, 96], sizes = [128, 32], strides = [1, 1]} : vector<128x256xbf16> to vector<128x32xbf16>
    %cst_41 = arith.constant dense<0.000000e+00> : vector<64x128xf32>
    %100 = tpu.matmul %97, %98, %cst_41 {dimension_numbers = #tpu.dot_dimension_numbers<[1], [1], [0], [0], [0, 0, 1, 0], [], []>} : vector<64x32xbf16>, vector<128x32xbf16>, vector<64x128xf32> -> vector<64x128xf32>
    %101 = vector.broadcast %10 : vector<1x128xf32> to vector<64x128xf32>
    %102 = arith.addf %100, %101 : vector<64x128xf32>
    %cst_42 = arith.constant dense<0xFF800000> : vector<64xf32>
    %103 = vector.multi_reduction <maximumf>, %102, %cst_42 [1] : vector<64x128xf32> to vector<64xf32>
    %104 = vector.shape_cast %103 : vector<64xf32> to vector<64x1xf32>
    %105 = vector.broadcast %104 : vector<64x1xf32> to vector<64x128xf32>
    %106 = arith.subf %102, %105 : vector<64x128xf32>
    %107 = math.exp %106 : vector<64x128xf32>
    %cst_43 = arith.constant dense<0.000000e+00> : vector<64xf32>
    %108 = vector.multi_reduction <add>, %107, %cst_43 [1] : vector<64x128xf32> to vector<64xf32>
    %109 = vector.shape_cast %108 : vector<64xf32> to vector<64x1xf32>
    %110 = tpu.reciprocal %109 {approx = true} : vector<64x1xf32> -> vector<64x1xf32>
    %111 = vector.broadcast %110 : vector<64x1xf32> to vector<64x128xf32>
    %112 = arith.mulf %107, %111 : vector<64x128xf32>
    %113 = arith.truncf %112 : vector<64x128xf32> to vector<64x128xbf16>
    %cst_44 = arith.constant dense<0.000000e+00> : vector<64x32xf32>
    %114 = tpu.matmul %113, %99, %cst_44 {dimension_numbers = #tpu.dot_dimension_numbers<[1], [0], [0], [1], [0, 0, 1, 1], [], []>} : vector<64x128xbf16>, vector<128x32xbf16>, vector<64x32xf32> -> vector<64x32xf32>
    %115 = arith.truncf %114 : vector<64x32xf32> to vector<64x32xbf16>
    %116 = vector.extract_strided_slice %23 {offsets = [96, 0], sizes = [32, 256], strides = [1, 1]} : vector<256x256xbf16> to vector<32x256xbf16>
    %cst_45 = arith.constant dense<0.000000e+00> : vector<64x256xf32>
    %117 = tpu.matmul %115, %116, %cst_45 {dimension_numbers = #tpu.dot_dimension_numbers<[1], [0], [0], [1], [0, 0, 1, 1], [], []>} : vector<64x32xbf16>, vector<32x256xbf16>, vector<64x256xf32> -> vector<64x256xf32>
    %118 = arith.addf %96, %117 : vector<64x256xf32>
    %119 = vector.extract_strided_slice %27 {offsets = [0, 128], sizes = [64, 32], strides = [1, 1]} : vector<64x256xbf16> to vector<64x32xbf16>
    %120 = vector.extract_strided_slice %28 {offsets = [0, 128], sizes = [128, 32], strides = [1, 1]} : vector<128x256xbf16> to vector<128x32xbf16>
    %121 = vector.extract_strided_slice %29 {offsets = [0, 128], sizes = [128, 32], strides = [1, 1]} : vector<128x256xbf16> to vector<128x32xbf16>
    %cst_46 = arith.constant dense<0.000000e+00> : vector<64x128xf32>
    %122 = tpu.matmul %119, %120, %cst_46 {dimension_numbers = #tpu.dot_dimension_numbers<[1], [1], [0], [0], [0, 0, 1, 0], [], []>} : vector<64x32xbf16>, vector<128x32xbf16>, vector<64x128xf32> -> vector<64x128xf32>
    %123 = vector.broadcast %10 : vector<1x128xf32> to vector<64x128xf32>
    %124 = arith.addf %122, %123 : vector<64x128xf32>
    %cst_47 = arith.constant dense<0xFF800000> : vector<64xf32>
    %125 = vector.multi_reduction <maximumf>, %124, %cst_47 [1] : vector<64x128xf32> to vector<64xf32>
    %126 = vector.shape_cast %125 : vector<64xf32> to vector<64x1xf32>
    %127 = vector.broadcast %126 : vector<64x1xf32> to vector<64x128xf32>
    %128 = arith.subf %124, %127 : vector<64x128xf32>
    %129 = math.exp %128 : vector<64x128xf32>
    %cst_48 = arith.constant dense<0.000000e+00> : vector<64xf32>
    %130 = vector.multi_reduction <add>, %129, %cst_48 [1] : vector<64x128xf32> to vector<64xf32>
    %131 = vector.shape_cast %130 : vector<64xf32> to vector<64x1xf32>
    %132 = tpu.reciprocal %131 {approx = true} : vector<64x1xf32> -> vector<64x1xf32>
    %133 = vector.broadcast %132 : vector<64x1xf32> to vector<64x128xf32>
    %134 = arith.mulf %129, %133 : vector<64x128xf32>
    %135 = arith.truncf %134 : vector<64x128xf32> to vector<64x128xbf16>
    %cst_49 = arith.constant dense<0.000000e+00> : vector<64x32xf32>
    %136 = tpu.matmul %135, %121, %cst_49 {dimension_numbers = #tpu.dot_dimension_numbers<[1], [0], [0], [1], [0, 0, 1, 1], [], []>} : vector<64x128xbf16>, vector<128x32xbf16>, vector<64x32xf32> -> vector<64x32xf32>
    %137 = arith.truncf %136 : vector<64x32xf32> to vector<64x32xbf16>
    %138 = vector.extract_strided_slice %23 {offsets = [128, 0], sizes = [32, 256], strides = [1, 1]} : vector<256x256xbf16> to vector<32x256xbf16>
    %cst_50 = arith.constant dense<0.000000e+00> : vector<64x256xf32>
    %139 = tpu.matmul %137, %138, %cst_50 {dimension_numbers = #tpu.dot_dimension_numbers<[1], [0], [0], [1], [0, 0, 1, 1], [], []>} : vector<64x32xbf16>, vector<32x256xbf16>, vector<64x256xf32> -> vector<64x256xf32>
    %140 = arith.addf %118, %139 : vector<64x256xf32>
    %141 = vector.extract_strided_slice %27 {offsets = [0, 160], sizes = [64, 32], strides = [1, 1]} : vector<64x256xbf16> to vector<64x32xbf16>
    %142 = vector.extract_strided_slice %28 {offsets = [0, 160], sizes = [128, 32], strides = [1, 1]} : vector<128x256xbf16> to vector<128x32xbf16>
    %143 = vector.extract_strided_slice %29 {offsets = [0, 160], sizes = [128, 32], strides = [1, 1]} : vector<128x256xbf16> to vector<128x32xbf16>
    %cst_51 = arith.constant dense<0.000000e+00> : vector<64x128xf32>
    %144 = tpu.matmul %141, %142, %cst_51 {dimension_numbers = #tpu.dot_dimension_numbers<[1], [1], [0], [0], [0, 0, 1, 0], [], []>} : vector<64x32xbf16>, vector<128x32xbf16>, vector<64x128xf32> -> vector<64x128xf32>
    %145 = vector.broadcast %10 : vector<1x128xf32> to vector<64x128xf32>
    %146 = arith.addf %144, %145 : vector<64x128xf32>
    %cst_52 = arith.constant dense<0xFF800000> : vector<64xf32>
    %147 = vector.multi_reduction <maximumf>, %146, %cst_52 [1] : vector<64x128xf32> to vector<64xf32>
    %148 = vector.shape_cast %147 : vector<64xf32> to vector<64x1xf32>
    %149 = vector.broadcast %148 : vector<64x1xf32> to vector<64x128xf32>
    %150 = arith.subf %146, %149 : vector<64x128xf32>
    %151 = math.exp %150 : vector<64x128xf32>
    %cst_53 = arith.constant dense<0.000000e+00> : vector<64xf32>
    %152 = vector.multi_reduction <add>, %151, %cst_53 [1] : vector<64x128xf32> to vector<64xf32>
    %153 = vector.shape_cast %152 : vector<64xf32> to vector<64x1xf32>
    %154 = tpu.reciprocal %153 {approx = true} : vector<64x1xf32> -> vector<64x1xf32>
    %155 = vector.broadcast %154 : vector<64x1xf32> to vector<64x128xf32>
    %156 = arith.mulf %151, %155 : vector<64x128xf32>
    %157 = arith.truncf %156 : vector<64x128xf32> to vector<64x128xbf16>
    %cst_54 = arith.constant dense<0.000000e+00> : vector<64x32xf32>
    %158 = tpu.matmul %157, %143, %cst_54 {dimension_numbers = #tpu.dot_dimension_numbers<[1], [0], [0], [1], [0, 0, 1, 1], [], []>} : vector<64x128xbf16>, vector<128x32xbf16>, vector<64x32xf32> -> vector<64x32xf32>
    %159 = arith.truncf %158 : vector<64x32xf32> to vector<64x32xbf16>
    %160 = vector.extract_strided_slice %23 {offsets = [160, 0], sizes = [32, 256], strides = [1, 1]} : vector<256x256xbf16> to vector<32x256xbf16>
    %cst_55 = arith.constant dense<0.000000e+00> : vector<64x256xf32>
    %161 = tpu.matmul %159, %160, %cst_55 {dimension_numbers = #tpu.dot_dimension_numbers<[1], [0], [0], [1], [0, 0, 1, 1], [], []>} : vector<64x32xbf16>, vector<32x256xbf16>, vector<64x256xf32> -> vector<64x256xf32>
    %162 = arith.addf %140, %161 : vector<64x256xf32>
    %163 = vector.extract_strided_slice %27 {offsets = [0, 192], sizes = [64, 32], strides = [1, 1]} : vector<64x256xbf16> to vector<64x32xbf16>
    %164 = vector.extract_strided_slice %28 {offsets = [0, 192], sizes = [128, 32], strides = [1, 1]} : vector<128x256xbf16> to vector<128x32xbf16>
    %165 = vector.extract_strided_slice %29 {offsets = [0, 192], sizes = [128, 32], strides = [1, 1]} : vector<128x256xbf16> to vector<128x32xbf16>
    %cst_56 = arith.constant dense<0.000000e+00> : vector<64x128xf32>
    %166 = tpu.matmul %163, %164, %cst_56 {dimension_numbers = #tpu.dot_dimension_numbers<[1], [1], [0], [0], [0, 0, 1, 0], [], []>} : vector<64x32xbf16>, vector<128x32xbf16>, vector<64x128xf32> -> vector<64x128xf32>
    %167 = vector.broadcast %10 : vector<1x128xf32> to vector<64x128xf32>
    %168 = arith.addf %166, %167 : vector<64x128xf32>
    %cst_57 = arith.constant dense<0xFF800000> : vector<64xf32>
    %169 = vector.multi_reduction <maximumf>, %168, %cst_57 [1] : vector<64x128xf32> to vector<64xf32>
    %170 = vector.shape_cast %169 : vector<64xf32> to vector<64x1xf32>
    %171 = vector.broadcast %170 : vector<64x1xf32> to vector<64x128xf32>
    %172 = arith.subf %168, %171 : vector<64x128xf32>
    %173 = math.exp %172 : vector<64x128xf32>
    %cst_58 = arith.constant dense<0.000000e+00> : vector<64xf32>
    %174 = vector.multi_reduction <add>, %173, %cst_58 [1] : vector<64x128xf32> to vector<64xf32>
    %175 = vector.shape_cast %174 : vector<64xf32> to vector<64x1xf32>
    %176 = tpu.reciprocal %175 {approx = true} : vector<64x1xf32> -> vector<64x1xf32>
    %177 = vector.broadcast %176 : vector<64x1xf32> to vector<64x128xf32>
    %178 = arith.mulf %173, %177 : vector<64x128xf32>
    %179 = arith.truncf %178 : vector<64x128xf32> to vector<64x128xbf16>
    %cst_59 = arith.constant dense<0.000000e+00> : vector<64x32xf32>
    %180 = tpu.matmul %179, %165, %cst_59 {dimension_numbers = #tpu.dot_dimension_numbers<[1], [0], [0], [1], [0, 0, 1, 1], [], []>} : vector<64x128xbf16>, vector<128x32xbf16>, vector<64x32xf32> -> vector<64x32xf32>
    %181 = arith.truncf %180 : vector<64x32xf32> to vector<64x32xbf16>
    %182 = vector.extract_strided_slice %23 {offsets = [192, 0], sizes = [32, 256], strides = [1, 1]} : vector<256x256xbf16> to vector<32x256xbf16>
    %cst_60 = arith.constant dense<0.000000e+00> : vector<64x256xf32>
    %183 = tpu.matmul %181, %182, %cst_60 {dimension_numbers = #tpu.dot_dimension_numbers<[1], [0], [0], [1], [0, 0, 1, 1], [], []>} : vector<64x32xbf16>, vector<32x256xbf16>, vector<64x256xf32> -> vector<64x256xf32>
    %184 = arith.addf %162, %183 : vector<64x256xf32>
    %185 = vector.extract_strided_slice %27 {offsets = [0, 224], sizes = [64, 32], strides = [1, 1]} : vector<64x256xbf16> to vector<64x32xbf16>
    %186 = vector.extract_strided_slice %28 {offsets = [0, 224], sizes = [128, 32], strides = [1, 1]} : vector<128x256xbf16> to vector<128x32xbf16>
    %187 = vector.extract_strided_slice %29 {offsets = [0, 224], sizes = [128, 32], strides = [1, 1]} : vector<128x256xbf16> to vector<128x32xbf16>
    %cst_61 = arith.constant dense<0.000000e+00> : vector<64x128xf32>
    %188 = tpu.matmul %185, %186, %cst_61 {dimension_numbers = #tpu.dot_dimension_numbers<[1], [1], [0], [0], [0, 0, 1, 0], [], []>} : vector<64x32xbf16>, vector<128x32xbf16>, vector<64x128xf32> -> vector<64x128xf32>
    %189 = vector.broadcast %10 : vector<1x128xf32> to vector<64x128xf32>
    %190 = arith.addf %188, %189 : vector<64x128xf32>
    %cst_62 = arith.constant dense<0xFF800000> : vector<64xf32>
    %191 = vector.multi_reduction <maximumf>, %190, %cst_62 [1] : vector<64x128xf32> to vector<64xf32>
    %192 = vector.shape_cast %191 : vector<64xf32> to vector<64x1xf32>
    %193 = vector.broadcast %192 : vector<64x1xf32> to vector<64x128xf32>
    %194 = arith.subf %190, %193 : vector<64x128xf32>
    %195 = math.exp %194 : vector<64x128xf32>
    %cst_63 = arith.constant dense<0.000000e+00> : vector<64xf32>
    %196 = vector.multi_reduction <add>, %195, %cst_63 [1] : vector<64x128xf32> to vector<64xf32>
    %197 = vector.shape_cast %196 : vector<64xf32> to vector<64x1xf32>
    %198 = tpu.reciprocal %197 {approx = true} : vector<64x1xf32> -> vector<64x1xf32>
    %199 = vector.broadcast %198 : vector<64x1xf32> to vector<64x128xf32>
    %200 = arith.mulf %195, %199 : vector<64x128xf32>
    %201 = arith.truncf %200 : vector<64x128xf32> to vector<64x128xbf16>
    %cst_64 = arith.constant dense<0.000000e+00> : vector<64x32xf32>
    %202 = tpu.matmul %201, %187, %cst_64 {dimension_numbers = #tpu.dot_dimension_numbers<[1], [0], [0], [1], [0, 0, 1, 1], [], []>} : vector<64x128xbf16>, vector<128x32xbf16>, vector<64x32xf32> -> vector<64x32xf32>
    %203 = arith.truncf %202 : vector<64x32xf32> to vector<64x32xbf16>
    %204 = vector.extract_strided_slice %23 {offsets = [224, 0], sizes = [32, 256], strides = [1, 1]} : vector<256x256xbf16> to vector<32x256xbf16>
    %cst_65 = arith.constant dense<0.000000e+00> : vector<64x256xf32>
    %205 = tpu.matmul %203, %204, %cst_65 {dimension_numbers = #tpu.dot_dimension_numbers<[1], [0], [0], [1], [0, 0, 1, 1], [], []>} : vector<64x32xbf16>, vector<32x256xbf16>, vector<64x256xf32> -> vector<64x256xf32>
    %206 = arith.addf %184, %205 : vector<64x256xf32>
    %207 = vector.broadcast %24 : vector<1x256xf32> to vector<64x256xf32>
    %208 = arith.addf %206, %207 : vector<64x256xf32>
    %209 = arith.addf %1, %208 : vector<64x256xf32>
    %c0_66 = arith.constant 0 : index
    %c0_67 = arith.constant 0 : index
    %c0_68 = arith.constant 0 : index
    %210 = vector.load %arg17[%c0_66, %c0_67, %c0_68] : memref<1x64x256xf32, #tpu.memory_space<vmem>>, vector<1x64x256xf32>
    %211 = vector.shape_cast %210 : vector<1x64x256xf32> to vector<64x256xf32>
    %212 = vector.shape_cast %209 : vector<64x256xf32> to vector<1x64x256xf32>
    tpu.vector_store %arg17[%c0_66, %c0_67, %c0_68], %212 {strides = array<i32>} : memref<1x64x256xf32, #tpu.memory_space<vmem>>, vector<1x64x256xf32>,
    %213 = arith.truncf %1 : vector<64x256xf32> to vector<64x256xbf16>
    %c0_69 = arith.constant 0 : index
    %c0_70 = arith.constant 0 : index
    %214 = vector.load %arg11[%c0_69, %c0_70] : memref<256x256xbf16, #tpu.memory_space<vmem>>, vector<256x256xbf16>
    %cst_71 = arith.constant dense<0.000000e+00> : vector<64x256xf32>
    %215 = tpu.matmul %213, %214, %cst_71 {dimension_numbers = #tpu.dot_dimension_numbers<[1], [0], [0], [1], [0, 0, 1, 1], [], []>} : vector<64x256xbf16>, vector<256x256xbf16>, vector<64x256xf32> -> vector<64x256xf32>
    %c0_72 = arith.constant 0 : index
    %c0_73 = arith.constant 0 : index
    %216 = vector.load %arg12[%c0_72, %c0_73] : memref<1x256xf32, #tpu.memory_space<vmem>>, vector<1x256xf32>
    %217 = vector.broadcast %216 : vector<1x256xf32> to vector<64x256xf32>
    %218 = arith.addf %215, %217 : vector<64x256xf32>
    %219 = arith.truncf %208 : vector<64x256xf32> to vector<64x256xbf16>
    %c0_74 = arith.constant 0 : index
    %c0_75 = arith.constant 0 : index
    %220 = vector.load %arg13[%c0_74, %c0_75] : memref<256x256xbf16, #tpu.memory_space<vmem>>, vector<256x256xbf16>
    %cst_76 = arith.constant dense<0.000000e+00> : vector<64x256xf32>
    %221 = tpu.matmul %219, %220, %cst_76 {dimension_numbers = #tpu.dot_dimension_numbers<[1], [0], [0], [1], [0, 0, 1, 1], [], []>} : vector<64x256xbf16>, vector<256x256xbf16>, vector<64x256xf32> -> vector<64x256xf32>
    %c0_77 = arith.constant 0 : index
    %c0_78 = arith.constant 0 : index
    %222 = vector.load %arg14[%c0_77, %c0_78] : memref<1x256xf32, #tpu.memory_space<vmem>>, vector<1x256xf32>
    %223 = vector.broadcast %222 : vector<1x256xf32> to vector<64x256xf32>
    %224 = arith.addf %221, %223 : vector<64x256xf32>
    %225 = arith.mulf %218, %218 : vector<64x256xf32>
    %cst_79 = arith.constant dense<0.000000e+00> : vector<64xf32>
    %226 = vector.multi_reduction <add>, %225, %cst_79 [1] : vector<64x256xf32> to vector<64xf32>
    %227 = vector.shape_cast %226 : vector<64xf32> to vector<64x1xf32>
    %cst_80 = arith.constant 1.000000e-24 : f32
    %228 = vector.broadcast %cst_80 : f32 to vector<64x1xf32>
    %229 = arith.maximumf %227, %228 : vector<64x1xf32>
    %230 = math.rsqrt %229 : vector<64x1xf32>
    %231 = vector.broadcast %230 : vector<64x1xf32> to vector<64x256xf32>
    %232 = arith.mulf %218, %231 : vector<64x256xf32>
    %233 = arith.mulf %224, %224 : vector<64x256xf32>
    %cst_81 = arith.constant dense<0.000000e+00> : vector<64xf32>
    %234 = vector.multi_reduction <add>, %233, %cst_81 [1] : vector<64x256xf32> to vector<64xf32>
    %235 = vector.shape_cast %234 : vector<64xf32> to vector<64x1xf32>
    %cst_82 = arith.constant 1.000000e-24 : f32
    %236 = vector.broadcast %cst_82 : f32 to vector<64x1xf32>
    %237 = arith.maximumf %235, %236 : vector<64x1xf32>
    %238 = math.rsqrt %237 : vector<64x1xf32>
    %239 = vector.broadcast %238 : vector<64x1xf32> to vector<64x256xf32>
    %240 = arith.mulf %224, %239 : vector<64x256xf32>
    %241 = arith.mulf %232, %240 : vector<64x256xf32>
    %cst_83 = arith.constant dense<0.000000e+00> : vector<64xf32>
    %242 = vector.multi_reduction <add>, %241, %cst_83 [1] : vector<64x256xf32> to vector<64xf32>
    %243 = vector.shape_cast %242 : vector<64xf32> to vector<64x1xf32>
    %c0_84 = arith.constant 0 : index
    %c0_85 = arith.constant 0 : index
    %244 = memref.load %arg15[%c0_84, %c0_85] : memref<1x1xf32, #tpu.memory_space<smem>>
    %c0_86 = arith.constant 0 : index
    %c0_87 = arith.constant 0 : index
    %245 = memref.load %arg16[%c0_86, %c0_87] : memref<1x1xf32, #tpu.memory_space<smem>>
    %cst_88 = arith.constant 1.000000e+00 : f32
    %246 = vector.broadcast %cst_88 : f32 to vector<64x1xf32>
    %247 = arith.subf %246, %243 : vector<64x1xf32>
    %248 = arith.mulf %247, %247 : vector<64x1xf32>
    %cst_89 = arith.constant 0.000000e+00 : f32
    %249 = vector.broadcast %cst_89 : f32 to vector<64x1xf32>
    %250 = arith.subf %249, %248 : vector<64x1xf32>
    %cst_90 = arith.constant 2.000000e+00 : f32
    %251 = arith.mulf %cst_90, %245 : f32
    %252 = arith.mulf %251, %245 : f32
    %253 = vector.broadcast %252 : f32 to vector<64x1xf32>
    %254 = arith.divf %250, %253 : vector<64x1xf32>
    %255 = math.exp %254 : vector<64x1xf32>
    %256 = vector.broadcast %244 : f32 to vector<64x1xf32>
    %257 = arith.mulf %256, %255 : vector<64x1xf32>
    %c0_91 = arith.constant 0 : index
    %c0_92 = arith.constant 0 : index
    %c0_93 = arith.constant 0 : index
    %258 = vector.load %arg18[%c0_91, %c0_92, %c0_93] : memref<1x64x1xf32, #tpu.memory_space<vmem>>, vector<1x64x1xf32>
    %259 = vector.shape_cast %258 : vector<1x64x1xf32> to vector<64x1xf32>
    %260 = vector.shape_cast %257 : vector<64x1xf32> to vector<1x64x1xf32>
    tpu.vector_store %arg18[%c0_91, %c0_92, %c0_93], %260 {strides = array<i32>} : memref<1x64x1xf32, #tpu.memory_space<vmem>>, vector<1x64x1xf32>,
    return
  }
  func.func @transform_0(%arg0: i32) -> (i32, i32, i32) {
    %c0_i32 = arith.constant 0 : i32
    %c0_i32_0 = arith.constant 0 : i32
    %c0_i32_1 = arith.constant 0 : i32
    return %arg0, %c0_i32, %c0_i32_0 : i32, i32, i32
  }
  func.func @transform_1(%arg0: i32) -> (i32, i32, i32) {
    %c0_i32 = arith.constant 0 : i32
    %c0_i32_0 = arith.constant 0 : i32
    %c0_i32_1 = arith.constant 0 : i32
    return %arg0, %c0_i32, %c0_i32_0 : i32, i32, i32
  }
  func.func @transform_2(%arg0: i32) -> (i32, i32, i32) {
    %c0_i32 = arith.constant 0 : i32
    %c0_i32_0 = arith.constant 0 : i32
    %c0_i32_1 = arith.constant 0 : i32
    return %arg0, %c0_i32, %c0_i32_0 : i32, i32, i32
  }
  func.func @transform_3(%arg0: i32) -> (i32, i32, i32) {
    %c0_i32 = arith.constant 0 : i32
    %c0_i32_0 = arith.constant 0 : i32
    %c0_i32_1 = arith.constant 0 : i32
    return %arg0, %c0_i32, %c0_i32_0 : i32, i32, i32
  }
  func.func @transform_4(%arg0: i32) -> (i32, i32) {
    %c0_i32 = arith.constant 0 : i32
    %c0_i32_0 = arith.constant 0 : i32
    %c0_i32_1 = arith.constant 0 : i32
    return %c0_i32, %c0_i32_0 : i32, i32
  }
  func.func @transform_5(%arg0: i32) -> (i32, i32) {
    %c0_i32 = arith.constant 0 : i32
    %c0_i32_0 = arith.constant 0 : i32
    %c0_i32_1 = arith.constant 0 : i32
    return %c0_i32, %c0_i32_0 : i32, i32
  }
  func.func @transform_6(%arg0: i32) -> (i32, i32) {
    %c0_i32 = arith.constant 0 : i32
    %c0_i32_0 = arith.constant 0 : i32
    %c0_i32_1 = arith.constant 0 : i32
    return %c0_i32, %c0_i32_0 : i32, i32
  }
  func.func @transform_7(%arg0: i32) -> (i32, i32) {
    %c0_i32 = arith.constant 0 : i32
    %c0_i32_0 = arith.constant 0 : i32
    %c0_i32_1 = arith.constant 0 : i32
    return %c0_i32, %c0_i32_0 : i32, i32
  }
  func.func @transform_8(%arg0: i32) -> (i32, i32) {
    %c0_i32 = arith.constant 0 : i32
    %c0_i32_0 = arith.constant 0 : i32
    %c0_i32_1 = arith.constant 0 : i32
    return %c0_i32, %c0_i32_0 : i32, i32
  }
  func.func @transform_9(%arg0: i32) -> (i32, i32) {
    %c0_i32 = arith.constant 0 : i32
    %c0_i32_0 = arith.constant 0 : i32
    %c0_i32_1 = arith.constant 0 : i32
    return %c0_i32, %c0_i32_0 : i32, i32
  }
  func.func @transform_10(%arg0: i32) -> (i32, i32) {
    %c0_i32 = arith.constant 0 : i32
    %c0_i32_0 = arith.constant 0 : i32
    %c0_i32_1 = arith.constant 0 : i32
    return %c0_i32, %c0_i32_0 : i32, i32
  }
  func.func @transform_11(%arg0: i32) -> (i32, i32) {
    %c0_i32 = arith.constant 0 : i32
    %c0_i32_0 = arith.constant 0 : i32
    %c0_i32_1 = arith.constant 0 : i32
    return %c0_i32, %c0_i32_0 : i32, i32
  }
  func.func @transform_12(%arg0: i32) -> (i32, i32) {
    %c0_i32 = arith.constant 0 : i32
    %c0_i32_0 = arith.constant 0 : i32
    %c0_i32_1 = arith.constant 0 : i32
    return %c0_i32, %c0_i32_0 : i32, i32
  }
  func.func @transform_13(%arg0: i32) -> (i32, i32) {
    %c0_i32 = arith.constant 0 : i32
    %c0_i32_0 = arith.constant 0 : i32
    %c0_i32_1 = arith.constant 0 : i32
    return %c0_i32, %c0_i32_0 : i32, i32
  }
  func.func @transform_14(%arg0: i32) -> (i32, i32) {
    %c0_i32 = arith.constant 0 : i32
    %c0_i32_0 = arith.constant 0 : i32
    %c0_i32_1 = arith.constant 0 : i32
    return %c0_i32, %c0_i32_0 : i32, i32
  }
  func.func @transform_15(%arg0: i32) -> (i32, i32) {
    %c0_i32 = arith.constant 0 : i32
    %c0_i32_0 = arith.constant 0 : i32
    %c0_i32_1 = arith.constant 0 : i32
    return %c0_i32, %c0_i32_0 : i32, i32
  }
  func.func @transform_16(%arg0: i32) -> (i32, i32, i32) {
    %c0_i32 = arith.constant 0 : i32
    %c0_i32_0 = arith.constant 0 : i32
    %c0_i32_1 = arith.constant 0 : i32
    return %arg0, %c0_i32, %c0_i32_0 : i32, i32, i32
  }
  func.func @transform_17(%arg0: i32) -> (i32, i32, i32) {
    %c0_i32 = arith.constant 0 : i32
    %c0_i32_0 = arith.constant 0 : i32
    %c0_i32_1 = arith.constant 0 : i32
    return %arg0, %c0_i32, %c0_i32_0 : i32, i32, i32
  }
}

</mosaic_0001>

<llo_original>
// kernel: tpu_custom_call.1
$region0: #{tpu_custom_call.1}
  #allocation0 [shape = 'u32[]', space=smem, size = 0x4, offset = 0x4, fixed_abs, tag = 'smem constant byte address 0x4 - core index']
  #allocation1 [shape = 'u32[72,128]{1,0:T(1,128)}', space=vmem, size = 0x9000, scoped, tag = 'internal scratch']
  #allocation2 [shape = 'f32[1,1]{1,0:T(1,128)S(6)}', space=smem, size = 0x200, scoped, tag = 'scoped memory for tpu_custom_call.1']
  #allocation3 [shape = 'f32[1,1]{1,0:T(1,128)S(6)}', space=smem, size = 0x200, scoped, tag = 'scoped memory for tpu_custom_call.1']
  %s0 = inlined_call_operand.hbm [shape: f32[2,64,256], index: 0, kind: input, shape index: {}]
  %s1 = inlined_call_operand.hbm [shape: f32[2,64,256], index: 1, kind: input, shape index: {}]
  %s2 = inlined_call_operand.hbm [shape: f32[2,128,256], index: 2, kind: input, shape index: {}]
  %s3 = inlined_call_operand.vmem [shape: f32[2,1,128], index: 3, kind: input, shape index: {}]
  %s4 = inlined_call_operand.hbm [shape: bf16[256,256], index: 4, kind: input, shape index: {}]
  %s5 = inlined_call_operand.vmem [shape: f32[1,256], index: 5, kind: input, shape index: {}]
  %s6 = inlined_call_operand.hbm [shape: bf16[256,512], index: 6, kind: input, shape index: {}]
  %s7 = inlined_call_operand.vmem [shape: f32[1,512], index: 7, kind: input, shape index: {}]
  %s8 = inlined_call_operand.hbm [shape: bf16[256,256], index: 8, kind: input, shape index: {}]
  %s9 = inlined_call_operand.vmem [shape: f32[1,256], index: 9, kind: input, shape index: {}]
  %s10 = inlined_call_operand.hbm [shape: bf16[256,256], index: 10, kind: input, shape index: {}]
  %s11 = inlined_call_operand.vmem [shape: f32[1,256], index: 11, kind: input, shape index: {}]
  %s12 = inlined_call_operand.hbm [shape: bf16[256,256], index: 12, kind: input, shape index: {}]
  %s13 = inlined_call_operand.vmem [shape: f32[1,256], index: 13, kind: input, shape index: {}]
  %s14 = inlined_call_operand.<no memory space> [shape: f32[1,1], index: 14, kind: input, shape index: {}]
  %s15 = inlined_call_operand.<no memory space> [shape: f32[1,1], index: 15, kind: input, shape index: {}]
  %s16 = inlined_call_operand.hbm [shape: f32[2,64,256], index: 16, kind: output, shape index: {0}]
  %s17 = inlined_call_operand.vmem [shape: f32[2,64,1], index: 17, kind: output, shape index: {1}]
  %18 = xla_tuple %s16, %s17
  %s19 = sld [smem:[#allocation0]]
  $region137: #{tpu_custom_call.1} parent=0
    _
  %s21 = ssub.s32 1, %s19
  %s22 = scalar_select 0, %s21, %s19
  %23 = sst [smem:[#allocation2]] %s14
  %24 = sst [smem:[#allocation3]] %s15
  $region1: #{tpu_custom_call.1} parent=0
    #allocation4 [shape = 'u8[131072]{0}', space=vmem, size = 0x20000, scoped, tag = 'input window, operand 0']
    #allocation5 [shape = 's32[2]{0}', space=sflag, size = 0x8, scoped, tag = 'scoped memory for tpu_custom_call.1']
    #allocation6 [shape = 's32[2]{0}', space=sflag, size = 0x8, scoped, tag = 'scoped memory for tpu_custom_call.1']
    #allocation7 [shape = 'u8[131072]{0}', space=vmem, size = 0x20000, scoped, tag = 'input window, operand 1']
    #allocation8 [shape = 's32[2]{0}', space=sflag, size = 0x8, scoped, tag = 'scoped memory for tpu_custom_call.1']
    #allocation9 [shape = 'u8[262144]{0}', space=vmem, size = 0x40000, scoped, tag = 'input window, operand 2']
    #allocation10 [shape = 'u8[131072]{0}', space=vmem, size = 0x20000, scoped, tag = 'input window, operand 4, single buffered']
    #allocation11 [shape = 's32[1]{0}', space=sflag, size = 0x4, scoped, tag = 'scoped memory for tpu_custom_call.1']
    #allocation12 [shape = 'u8[262144]{0}', space=vmem, size = 0x40000, scoped, tag = 'input window, operand 6, single buffered']
    #allocation13 [shape = 'u8[131072]{0}', space=vmem, size = 0x20000, scoped, tag = 'input window, operand 8, single buffered']
    #allocation14 [shape = 's32[1]{0}', space=sflag, size = 0x4, scoped, tag = 'scoped memory for tpu_custom_call.1']
    #allocation15 [shape = 'u8[131072]{0}', space=vmem, size = 0x20000, scoped, tag = 'input window, operand 10, single buffered']
    #allocation16 [shape = 'u8[131072]{0}', space=vmem, size = 0x20000, scoped, tag = 'input window, operand 12, single buffered']
    #allocation17 [shape = 's32[1]{0}', space=sflag, size = 0x4, scoped, tag = 'scoped memory for tpu_custom_call.1']
    #allocation18 [shape = 'u8[131072]{0}', space=vmem, size = 0x20000, scoped, tag = 'output window, operand 0']
    %25 = vsyncpa [#allocation5], 0
    %s26 = scalar_lea.sflag [#allocation5], 1
    %27 = vsyncpa %s26, 0
    %28 = vsyncpa [#allocation8], 0
    %s29 = scalar_lea.sflag [#allocation8], 1
    %30 = vsyncpa %s29, 0
    %31 = vsyncpa [#allocation11], 0
    %32 = vsyncpa [#allocation14], 0
    %33 = vsyncpa [#allocation17], 0
    %34 = vsyncpa [#allocation6], 0
    %s35 = scalar_lea.sflag [#allocation6], 1
    %36 = vsyncpa %s35, 0
    loop: start=0, step=1, limit=4
    $region2: #{tpu_custom_call.1} parent=1 // loop_pre_header
      _
    $region3: #{tpu_custom_call.1} parent=1 // loop_header
      %s38 = sphi 0, %s42
      %p39 = scmp.ge.s32.totalorder %s38, 4
      %s48 = sphi 0, %s50
      %s51 = sphi 0, %s48
      %s52 = sphi 0, %s51
      %s68 = sphi 0, %s52
      %s74 = sphi 0, %s76
      %s77 = sphi 0, %s74
      %s78 = sphi 0, %s77
      %s94 = sphi 0, %s78
      %s100 = sphi 0, %s102
      %s103 = sphi 0, %s100
      %s104 = sphi 0, %s103
      %s120 = sphi 0, %s104
      %s126 = sphi 0, %s128
      %s129 = sphi 0, %s126
      %s130 = sphi 0, %s129
      %s146 = sphi 0, %s130
      %s150 = sphi 0, %s150
      %s152 = sphi 0, %s150
      %s153 = sphi 0, %s152
      %s167 = sphi 0, %s153
      %s171 = sphi 0, %s171
      %s173 = sphi 0, %s171
      %s174 = sphi 0, %s173
      %s188 = sphi 0, %s174
      %s192 = sphi 0, %s192
      %s194 = sphi 0, %s192
      %s195 = sphi 0, %s194
      %s209 = sphi 0, %s195
      %s213 = sphi 0, %s213
      %s215 = sphi 0, %s213
      %s216 = sphi 0, %s215
      %s230 = sphi 0, %s216
      %s234 = sphi 0, %s234
      %s236 = sphi 0, %s234
      %s237 = sphi 0, %s236
      %s251 = sphi 0, %s237
      %s255 = sphi 0, %s255
      %s257 = sphi 0, %s255
      %s258 = sphi 0, %s257
      %s272 = sphi 0, %s258
      %s276 = sphi 0, %s276
      %s278 = sphi 0, %s276
      %s279 = sphi 0, %s278
      %s293 = sphi 0, %s279
      %s297 = sphi 0, %s297
      %s299 = sphi 0, %s297
      %s300 = sphi 0, %s299
      %s314 = sphi 0, %s300
      %s318 = sphi 0, %s318
      %s320 = sphi 0, %s318
      %s321 = sphi 0, %s320
      %s335 = sphi 0, %s321
      %s339 = sphi 0, %s339
      %s341 = sphi 0, %s339
      %s342 = sphi 0, %s341
      %s356 = sphi 0, %s342
      %s360 = sphi 0, %s360
      %s362 = sphi 0, %s360
      %s363 = sphi 0, %s362
      %s377 = sphi 0, %s363
      %s381 = sphi 0, %s381
      %s383 = sphi 0, %s381
      %s384 = sphi 0, %s383
      %s398 = sphi 0, %s384
      %s404 = sphi 0, %s406
      %s407 = sphi 0, %s404
      %s408 = sphi 0, %s407
      %s424 = sphi 0, %s408
      %s430 = sphi 0, %s432
      %s433 = sphi 0, %s430
      %s434 = sphi 0, %s433
      %s450 = sphi 0, %s434
    $region4: #{tpu_custom_call.1} parent=1 // loop_header_branch
      %41 = sbr.rel (%p39) target = $region8
    $region5: #{tpu_custom_call.1} parent=1 // loop_body
      %s43 = ssub.s32 %s38, 1
      %s44 = ssub.s32 %s38, 2
      %s45 = sadd.s32 %s38, 1
      %s46 = ssub.s32 %s38, %s45
      %p47 = scmp.eq.s32.totalorder %s46, 0
      %s49 = sadd.s32 %s48, 1
      %s50 = scalar_select %p47, %s48, %s49
      %p53 = pneg %p47
      %p54 = scmp.eq.s32.totalorder %s38, 1
      %p55 = por %p53, %p54
      %p56 = scmp.ne.s32.totalorder %s48, %s51
      %p57 = scmp.eq.s32.totalorder %s38, 0
      %p58 = por %p56, %p57
      %p59 = scmp.ne.s32.totalorder %s48, %s51
      %p60 = scmp.eq.s32.totalorder %s43, 1
      %p61 = por %p59, %p60
      %p62 = scmp.ne.s32.totalorder %s51, %s52
      %p63 = scmp.eq.s32.totalorder %s43, 0
      %p64 = por %p62, %p63
      %p65 = scmp.ne.s32.totalorder %s51, %s52
      %p66 = scmp.eq.s32.totalorder %s44, 1
      %p67 = por %p65, %p66
      %p69 = scmp.ne.s32.totalorder %s52, %s68
      %p70 = scmp.eq.s32.totalorder %s44, 0
      %p71 = por %p69, %p70
      %s72 = ssub.s32 %s38, %s45
      %p73 = scmp.eq.s32.totalorder %s72, 0
      %s75 = sadd.s32 %s74, 1
      %s76 = scalar_select %p73, %s74, %s75
      %p79 = pneg %p73
      %p80 = scmp.eq.s32.totalorder %s38, 1
      %p81 = por %p79, %p80
      %p82 = scmp.ne.s32.totalorder %s74, %s77
      %p83 = scmp.eq.s32.totalorder %s38, 0
      %p84 = por %p82, %p83
      %p85 = scmp.ne.s32.totalorder %s74, %s77
      %p86 = scmp.eq.s32.totalorder %s43, 1
      %p87 = por %p85, %p86
      %p88 = scmp.ne.s32.totalorder %s77, %s78
      %p89 = scmp.eq.s32.totalorder %s43, 0
      %p90 = por %p88, %p89
      %p91 = scmp.ne.s32.totalorder %s77, %s78
      %p92 = scmp.eq.s32.totalorder %s44, 1
      %p93 = por %p91, %p92
      %p95 = scmp.ne.s32.totalorder %s78, %s94
      %p96 = scmp.eq.s32.totalorder %s44, 0
      %p97 = por %p95, %p96
      %s98 = ssub.s32 %s38, %s45
      %p99 = scmp.eq.s32.totalorder %s98, 0
      %s101 = sadd.s32 %s100, 1
      %s102 = scalar_select %p99, %s100, %s101
      %p105 = pneg %p99
      %p106 = scmp.eq.s32.totalorder %s38, 1
      %p107 = por %p105, %p106
      %p108 = scmp.ne.s32.totalorder %s100, %s103
      %p109 = scmp.eq.s32.totalorder %s38, 0
      %p110 = por %p108, %p109
      %p111 = scmp.ne.s32.totalorder %s100, %s103
      %p112 = scmp.eq.s32.totalorder %s43, 1
      %p113 = por %p111, %p112
      %p114 = scmp.ne.s32.totalorder %s103, %s104
      %p115 = scmp.eq.s32.totalorder %s43, 0
      %p116 = por %p114, %p115
      %p117 = scmp.ne.s32.totalorder %s103, %s104
      %p118 = scmp.eq.s32.totalorder %s44, 1
      %p119 = por %p117, %p118
      %p121 = scmp.ne.s32.totalorder %s104, %s120
      %p122 = scmp.eq.s32.totalorder %s44, 0
      %p123 = por %p121, %p122
      %s124 = ssub.s32 %s38, %s45
      %p125 = scmp.eq.s32.totalorder %s124, 0
      %s127 = sadd.s32 %s126, 1
      %s128 = scalar_select %p125, %s126, %s127
      %p131 = pneg %p125
      %p132 = scmp.eq.s32.totalorder %s38, 1
      %p133 = por %p131, %p132
      %p134 = scmp.ne.s32.totalorder %s126, %s129
      %p135 = scmp.eq.s32.totalorder %s38, 0
      %p136 = por %p134, %p135
      %p137 = scmp.ne.s32.totalorder %s126, %s129
      %p138 = scmp.eq.s32.totalorder %s43, 1
      %p139 = por %p137, %p138
      %p140 = scmp.ne.s32.totalorder %s129, %s130
      %p141 = scmp.eq.s32.totalorder %s43, 0
      %p142 = por %p140, %p141
      %p143 = scmp.ne.s32.totalorder %s129, %s130
      %p144 = scmp.eq.s32.totalorder %s44, 1
      %p145 = por %p143, %p144
      %p147 = scmp.ne.s32.totalorder %s130, %s146
      %p148 = scmp.eq.s32.totalorder %s44, 0
      %p149 = por %p147, %p148
      %s151 = sadd.s32 %s150, 1
      %p154 = scmp.eq.s32.totalorder %s38, 1
      %p155 = scmp.ne.s32.totalorder %s150, %s152
      %p156 = scmp.eq.s32.totalorder %s38, 0
      %p157 = por %p155, %p156
      %p158 = scmp.ne.s32.totalorder %s150, %s152
      %p159 = scmp.eq.s32.totalorder %s43, 1
      %p160 = por %p158, %p159
      %p161 = scmp.ne.s32.totalorder %s152, %s153
      %p162 = scmp.eq.s32.totalorder %s43, 0
      %p163 = por %p161, %p162
      %p164 = scmp.ne.s32.totalorder %s152, %s153
      %p165 = scmp.eq.s32.totalorder %s44, 1
      %p166 = por %p164, %p165
      %p168 = scmp.ne.s32.totalorder %s153, %s167
      %p169 = scmp.eq.s32.totalorder %s44, 0
      %p170 = por %p168, %p169
      %s172 = sadd.s32 %s171, 1
      %p175 = scmp.eq.s32.totalorder %s38, 1
      %p176 = scmp.ne.s32.totalorder %s171, %s173
      %p177 = scmp.eq.s32.totalorder %s38, 0
      %p178 = por %p176, %p177
      %p179 = scmp.ne.s32.totalorder %s171, %s173
      %p180 = scmp.eq.s32.totalorder %s43, 1
      %p181 = por %p179, %p180
      %p182 = scmp.ne.s32.totalorder %s173, %s174
      %p183 = scmp.eq.s32.totalorder %s43, 0
      %p184 = por %p182, %p183
      %p185 = scmp.ne.s32.totalorder %s173, %s174
      %p186 = scmp.eq.s32.totalorder %s44, 1
      %p187 = por %p185, %p186
      %p189 = scmp.ne.s32.totalorder %s174, %s188
      %p190 = scmp.eq.s32.totalorder %s44, 0
      %p191 = por %p189, %p190
      %s193 = sadd.s32 %s192, 1
      %p196 = scmp.eq.s32.totalorder %s38, 1
      %p197 = scmp.ne.s32.totalorder %s192, %s194
      %p198 = scmp.eq.s32.totalorder %s38, 0
      %p199 = por %p197, %p198
      %p200 = scmp.ne.s32.totalorder %s192, %s194
      %p201 = scmp.eq.s32.totalorder %s43, 1
      %p202 = por %p200, %p201
      %p203 = scmp.ne.s32.totalorder %s194, %s195
      %p204 = scmp.eq.s32.totalorder %s43, 0
      %p205 = por %p203, %p204
      %p206 = scmp.ne.s32.totalorder %s194, %s195
      %p207 = scmp.eq.s32.totalorder %s44, 1
      %p208 = por %p206, %p207
      %p210 = scmp.ne.s32.totalorder %s195, %s209
      %p211 = scmp.eq.s32.totalorder %s44, 0
      %p212 = por %p210, %p211
      %s214 = sadd.s32 %s213, 1
      %p217 = scmp.eq.s32.totalorder %s38, 1
      %p218 = scmp.ne.s32.totalorder %s213, %s215
      %p219 = scmp.eq.s32.totalorder %s38, 0
      %p220 = por %p218, %p219
      %p221 = scmp.ne.s32.totalorder %s213, %s215
      %p222 = scmp.eq.s32.totalorder %s43, 1
      %p223 = por %p221, %p222
      %p224 = scmp.ne.s32.totalorder %s215, %s216
      %p225 = scmp.eq.s32.totalorder %s43, 0
      %p226 = por %p224, %p225
      %p227 = scmp.ne.s32.totalorder %s215, %s216
      %p228 = scmp.eq.s32.totalorder %s44, 1
      %p229 = por %p227, %p228
      %p231 = scmp.ne.s32.totalorder %s216, %s230
      %p232 = scmp.eq.s32.totalorder %s44, 0
      %p233 = por %p231, %p232
      %s235 = sadd.s32 %s234, 1
      %p238 = scmp.eq.s32.totalorder %s38, 1
      %p239 = scmp.ne.s32.totalorder %s234, %s236
      %p240 = scmp.eq.s32.totalorder %s38, 0
      %p241 = por %p239, %p240
      %p242 = scmp.ne.s32.totalorder %s234, %s236
      %p243 = scmp.eq.s32.totalorder %s43, 1
      %p244 = por %p242, %p243
      %p245 = scmp.ne.s32.totalorder %s236, %s237
      %p246 = scmp.eq.s32.totalorder %s43, 0
      %p247 = por %p245, %p246
      %p248 = scmp.ne.s32.totalorder %s236, %s237
      %p249 = scmp.eq.s32.totalorder %s44, 1
      %p250 = por %p248, %p249
      %p252 = scmp.ne.s32.totalorder %s237, %s251
      %p253 = scmp.eq.s32.totalorder %s44, 0
      %p254 = por %p252, %p253
      %s256 = sadd.s32 %s255, 1
      %p259 = scmp.eq.s32.totalorder %s38, 1
      %p260 = scmp.ne.s32.totalorder %s255, %s257
      %p261 = scmp.eq.s32.totalorder %s38, 0
      %p262 = por %p260, %p261
      %p263 = scmp.ne.s32.totalorder %s255, %s257
      %p264 = scmp.eq.s32.totalorder %s43, 1
      %p265 = por %p263, %p264
      %p266 = scmp.ne.s32.totalorder %s257, %s258
      %p267 = scmp.eq.s32.totalorder %s43, 0
      %p268 = por %p266, %p267
      %p269 = scmp.ne.s32.totalorder %s257, %s258
      %p270 = scmp.eq.s32.totalorder %s44, 1
      %p271 = por %p269, %p270
      %p273 = scmp.ne.s32.totalorder %s258, %s272
      %p274 = scmp.eq.s32.totalorder %s44, 0
      %p275 = por %p273, %p274
      %s277 = sadd.s32 %s276, 1
      %p280 = scmp.eq.s32.totalorder %s38, 1
      %p281 = scmp.ne.s32.totalorder %s276, %s278
      %p282 = scmp.eq.s32.totalorder %s38, 0
      %p283 = por %p281, %p282
      %p284 = scmp.ne.s32.totalorder %s276, %s278
      %p285 = scmp.eq.s32.totalorder %s43, 1
      %p286 = por %p284, %p285
      %p287 = scmp.ne.s32.totalorder %s278, %s279
      %p288 = scmp.eq.s32.totalorder %s43, 0
      %p289 = por %p287, %p288
      %p290 = scmp.ne.s32.totalorder %s278, %s279
      %p291 = scmp.eq.s32.totalorder %s44, 1
      %p292 = por %p290, %p291
      %p294 = scmp.ne.s32.totalorder %s279, %s293
      %p295 = scmp.eq.s32.totalorder %s44, 0
      %p296 = por %p294, %p295
      %s298 = sadd.s32 %s297, 1
      %p301 = scmp.eq.s32.totalorder %s38, 1
      %p302 = scmp.ne.s32.totalorder %s297, %s299
      %p303 = scmp.eq.s32.totalorder %s38, 0
      %p304 = por %p302, %p303
      %p305 = scmp.ne.s32.totalorder %s297, %s299
      %p306 = scmp.eq.s32.totalorder %s43, 1
      %p307 = por %p305, %p306
      %p308 = scmp.ne.s32.totalorder %s299, %s300
      %p309 = scmp.eq.s32.totalorder %s43, 0
      %p310 = por %p308, %p309
      %p311 = scmp.ne.s32.totalorder %s299, %s300
      %p312 = scmp.eq.s32.totalorder %s44, 1
      %p313 = por %p311, %p312
      %p315 = scmp.ne.s32.totalorder %s300, %s314
      %p316 = scmp.eq.s32.totalorder %s44, 0
      %p317 = por %p315, %p316
      %s319 = sadd.s32 %s318, 1
      %p322 = scmp.eq.s32.totalorder %s38, 1
      %p323 = scmp.ne.s32.totalorder %s318, %s320
      %p324 = scmp.eq.s32.totalorder %s38, 0
      %p325 = por %p323, %p324
      %p326 = scmp.ne.s32.totalorder %s318, %s320
      %p327 = scmp.eq.s32.totalorder %s43, 1
      %p328 = por %p326, %p327
      %p329 = scmp.ne.s32.totalorder %s320, %s321
      %p330 = scmp.eq.s32.totalorder %s43, 0
      %p331 = por %p329, %p330
      %p332 = scmp.ne.s32.totalorder %s320, %s321
      %p333 = scmp.eq.s32.totalorder %s44, 1
      %p334 = por %p332, %p333
      %p336 = scmp.ne.s32.totalorder %s321, %s335
      %p337 = scmp.eq.s32.totalorder %s44, 0
      %p338 = por %p336, %p337
      %s340 = sadd.s32 %s339, 1
      %p343 = scmp.eq.s32.totalorder %s38, 1
      %p344 = scmp.ne.s32.totalorder %s339, %s341
      %p345 = scmp.eq.s32.totalorder %s38, 0
      %p346 = por %p344, %p345
      %p347 = scmp.ne.s32.totalorder %s339, %s341
      %p348 = scmp.eq.s32.totalorder %s43, 1
      %p349 = por %p347, %p348
      %p350 = scmp.ne.s32.totalorder %s341, %s342
      %p351 = scmp.eq.s32.totalorder %s43, 0
      %p352 = por %p350, %p351
      %p353 = scmp.ne.s32.totalorder %s341, %s342
      %p354 = scmp.eq.s32.totalorder %s44, 1
      %p355 = por %p353, %p354
      %p357 = scmp.ne.s32.totalorder %s342, %s356
      %p358 = scmp.eq.s32.totalorder %s44, 0
      %p359 = por %p357, %p358
      %s361 = sadd.s32 %s360, 1
      %p364 = scmp.eq.s32.totalorder %s38, 1
      %p365 = scmp.ne.s32.totalorder %s360, %s362
      %p366 = scmp.eq.s32.totalorder %s38, 0
      %p367 = por %p365, %p366
      %p368 = scmp.ne.s32.totalorder %s360, %s362
      %p369 = scmp.eq.s32.totalorder %s43, 1
      %p370 = por %p368, %p369
      %p371 = scmp.ne.s32.totalorder %s362, %s363
      %p372 = scmp.eq.s32.totalorder %s43, 0
      %p373 = por %p371, %p372
      %p374 = scmp.ne.s32.totalorder %s362, %s363
      %p375 = scmp.eq.s32.totalorder %s44, 1
      %p376 = por %p374, %p375
      %p378 = scmp.ne.s32.totalorder %s363, %s377
      %p379 = scmp.eq.s32.totalorder %s44, 0
      %p380 = por %p378, %p379
      %s382 = sadd.s32 %s381, 1
      %p385 = scmp.eq.s32.totalorder %s38, 1
      %p386 = scmp.ne.s32.totalorder %s381, %s383
      %p387 = scmp.eq.s32.totalorder %s38, 0
      %p388 = por %p386, %p387
      %p389 = scmp.ne.s32.totalorder %s381, %s383
      %p390 = scmp.eq.s32.totalorder %s43, 1
      %p391 = por %p389, %p390
      %p392 = scmp.ne.s32.totalorder %s383, %s384
      %p393 = scmp.eq.s32.totalorder %s43, 0
      %p394 = por %p392, %p393
      %p395 = scmp.ne.s32.totalorder %s383, %s384
      %p396 = scmp.eq.s32.totalorder %s44, 1
      %p397 = por %p395, %p396
      %p399 = scmp.ne.s32.totalorder %s384, %s398
      %p400 = scmp.eq.s32.totalorder %s44, 0
      %p401 = por %p399, %p400
      %s402 = ssub.s32 %s38, %s45
      %p403 = scmp.eq.s32.totalorder %s402, 0
      %s405 = sadd.s32 %s404, 1
      %s406 = scalar_select %p403, %s404, %s405
      %p409 = pneg %p403
      %p410 = scmp.eq.s32.totalorder %s38, 1
      %p411 = por %p409, %p410
      %p412 = scmp.ne.s32.totalorder %s404, %s407
      %p413 = scmp.eq.s32.totalorder %s38, 0
      %p414 = por %p412, %p413
      %p415 = scmp.ne.s32.totalorder %s404, %s407
      %p416 = scmp.eq.s32.totalorder %s43, 1
      %p417 = por %p415, %p416
      %p418 = scmp.ne.s32.totalorder %s407, %s408
      %p419 = scmp.eq.s32.totalorder %s43, 0
      %p420 = por %p418, %p419
      %p421 = scmp.ne.s32.totalorder %s407, %s408
      %p422 = scmp.eq.s32.totalorder %s44, 1
      %p423 = por %p421, %p422
      %p425 = scmp.ne.s32.totalorder %s408, %s424
      %p426 = scmp.eq.s32.totalorder %s44, 0
      %p427 = por %p425, %p426
      %s428 = ssub.s32 %s38, %s45
      %p429 = scmp.eq.s32.totalorder %s428, 0
      %s431 = sadd.s32 %s430, 1
      %s432 = scalar_select %p429, %s430, %s431
      %p435 = pneg %p429
      %p436 = scmp.eq.s32.totalorder %s38, 1
      %p437 = por %p435, %p436
      %p438 = scmp.ne.s32.totalorder %s430, %s433
      %p439 = scmp.eq.s32.totalorder %s38, 0
      %p440 = por %p438, %p439
      %p441 = scmp.ne.s32.totalorder %s430, %s433
      %p442 = scmp.eq.s32.totalorder %s43, 1
      %p443 = por %p441, %p442
      %p444 = scmp.ne.s32.totalorder %s433, %s434
      %p445 = scmp.eq.s32.totalorder %s43, 0
      %p446 = por %p444, %p445
      %p447 = scmp.ne.s32.totalorder %s433, %s434
      %p448 = scmp.eq.s32.totalorder %s44, 1
      %p449 = por %p447, %p448
      %p451 = scmp.ne.s32.totalorder %s434, %s450
      %p452 = scmp.eq.s32.totalorder %s44, 0
      %p453 = por %p451, %p452
      %p454 = scmp.le.s32.totalorder 1, %s38
      %p455 = scmp.lt.s32.totalorder %s38, 3
      %p456 = pnand %p454, %p455
      %p457 = pneg %p456
      // Predicated region
      $region9: #{tpu_custom_call.1} parent=5 // pred_check
        _
      $region10: #{tpu_custom_call.1} parent=5 // pred_check_branch
        %459 = sbr.rel (%p456) target = $region12
      $region11: #{tpu_custom_call.1} parent=5 // pred_region
        %s460 = ssub.s32 %s38, 1
        // Predicated region
        $region13: #{tpu_custom_call.1} parent=11 // pred_check
          %p461 = pneg %p163
        $region14: #{tpu_custom_call.1} parent=11 // pred_check_branch
          %463 = sbr.rel (%p461) target = $region16
        $region15: #{tpu_custom_call.1} parent=11 // pred_region
          %465 = vsyncadd [#allocation11], 0
          %s466 = sshll.u32 %s4, 4
          %s467 = int_to_ptr.hbm [resolvable:$true] %s466
          %s468 = sshll.u32 [#allocation10], 4
          %s469 = int_to_ptr.vmem [resolvable:$true] %s468
          %474 = dma.hbm_to_vmem [thread:$0]  %s467, 4096, %s469, [#allocation11], 128, 128, 8
        $region16: #{tpu_custom_call.1} parent=11 // pred_fallthru
          _
        // Predicated region
        $region17: #{tpu_custom_call.1} parent=11 // pred_check
          %p475 = pneg %p184
        $region18: #{tpu_custom_call.1} parent=11 // pred_check_branch
          %477 = sbr.rel (%p475) target = $region20
        $region19: #{tpu_custom_call.1} parent=11 // pred_region
          _
        $region20: #{tpu_custom_call.1} parent=11 // pred_fallthru
          _
        // Predicated region
        $region21: #{tpu_custom_call.1} parent=11 // pred_check
          %p478 = pneg %p205
        $region22: #{tpu_custom_call.1} parent=11 // pred_check_branch
          %480 = sbr.rel (%p478) target = $region24
        $region23: #{tpu_custom_call.1} parent=11 // pred_region
          %482 = vsyncadd [#allocation11], 0
          %s483 = sshll.u32 %s6, 4
          %s484 = int_to_ptr.hbm [resolvable:$true] %s483
          %s485 = sshll.u32 [#allocation12], 4
          %s486 = int_to_ptr.vmem [resolvable:$true] %s485
          %491 = dma.hbm_to_vmem [thread:$0]  %s484, 8192, %s486, [#allocation11], 256, 256, 16
        $region24: #{tpu_custom_call.1} parent=11 // pred_fallthru
          _
        // Predicated region
        $region25: #{tpu_custom_call.1} parent=11 // pred_check
          %p492 = pneg %p226
        $region26: #{tpu_custom_call.1} parent=11 // pred_check_branch
          %494 = sbr.rel (%p492) target = $region28
        $region27: #{tpu_custom_call.1} parent=11 // pred_region
          _
        $region28: #{tpu_custom_call.1} parent=11 // pred_fallthru
          _
        // Predicated region
        $region29: #{tpu_custom_call.1} parent=11 // pred_check
          %p495 = pneg %p247
        $region30: #{tpu_custom_call.1} parent=11 // pred_check_branch
          %497 = sbr.rel (%p495) target = $region32
        $region31: #{tpu_custom_call.1} parent=11 // pred_region
          %499 = vsyncadd [#allocation14], 0
          %s500 = sshll.u32 %s8, 4
          %s501 = int_to_ptr.hbm [resolvable:$true] %s500
          %s502 = sshll.u32 [#allocation13], 4
          %s503 = int_to_ptr.vmem [resolvable:$true] %s502
          %508 = dma.hbm_to_vmem [thread:$0]  %s501, 4096, %s503, [#allocation14], 128, 128, 8
        $region32: #{tpu_custom_call.1} parent=11 // pred_fallthru
          _
        // Predicated region
        $region33: #{tpu_custom_call.1} parent=11 // pred_check
          %p509 = pneg %p268
        $region34: #{tpu_custom_call.1} parent=11 // pred_check_branch
          %511 = sbr.rel (%p509) target = $region36
        $region35: #{tpu_custom_call.1} parent=11 // pred_region
          _
        $region36: #{tpu_custom_call.1} parent=11 // pred_fallthru
          _
        // Predicated region
        $region37: #{tpu_custom_call.1} parent=11 // pred_check
          %p512 = pneg %p289
        $region38: #{tpu_custom_call.1} parent=11 // pred_check_branch
          %514 = sbr.rel (%p512) target = $region40
        $region39: #{tpu_custom_call.1} parent=11 // pred_region
          %516 = vsyncadd [#allocation14], 0
          %s517 = sshll.u32 %s10, 4
          %s518 = int_to_ptr.hbm [resolvable:$true] %s517
          %s519 = sshll.u32 [#allocation15], 4
          %s520 = int_to_ptr.vmem [resolvable:$true] %s519
          %525 = dma.hbm_to_vmem [thread:$0]  %s518, 4096, %s520, [#allocation14], 128, 128, 8
        $region40: #{tpu_custom_call.1} parent=11 // pred_fallthru
          _
        // Predicated region
        $region41: #{tpu_custom_call.1} parent=11 // pred_check
          %p526 = pneg %p310
        $region42: #{tpu_custom_call.1} parent=11 // pred_check_branch
          %528 = sbr.rel (%p526) target = $region44
        $region43: #{tpu_custom_call.1} parent=11 // pred_region
          _
        $region44: #{tpu_custom_call.1} parent=11 // pred_fallthru
          _
        // Predicated region
        $region45: #{tpu_custom_call.1} parent=11 // pred_check
          %p529 = pneg %p331
        $region46: #{tpu_custom_call.1} parent=11 // pred_check_branch
          %531 = sbr.rel (%p529) target = $region48
        $region47: #{tpu_custom_call.1} parent=11 // pred_region
          %533 = vsyncadd [#allocation17], 0
          %s534 = sshll.u32 %s12, 4
          %s535 = int_to_ptr.hbm [resolvable:$true] %s534
          %s536 = sshll.u32 [#allocation16], 4
          %s537 = int_to_ptr.vmem [resolvable:$true] %s536
          %542 = dma.hbm_to_vmem [thread:$0]  %s535, 4096, %s537, [#allocation17], 128, 128, 8
        $region48: #{tpu_custom_call.1} parent=11 // pred_fallthru
          _
        // Predicated region
        $region49: #{tpu_custom_call.1} parent=11 // pred_check
          %p543 = pneg %p352
        $region50: #{tpu_custom_call.1} parent=11 // pred_check_branch
          %545 = sbr.rel (%p543) target = $region52
        $region51: #{tpu_custom_call.1} parent=11 // pred_region
          _
        $region52: #{tpu_custom_call.1} parent=11 // pred_fallthru
          _
        // Predicated region
        $region53: #{tpu_custom_call.1} parent=11 // pred_check
          %p546 = pneg %p373
        $region54: #{tpu_custom_call.1} parent=11 // pred_check_branch
          %548 = sbr.rel (%p546) target = $region56
        $region55: #{tpu_custom_call.1} parent=11 // pred_region
          _
        $region56: #{tpu_custom_call.1} parent=11 // pred_fallthru
          _
        // Predicated region
        $region57: #{tpu_custom_call.1} parent=11 // pred_check
          %p549 = pneg %p394
        $region58: #{tpu_custom_call.1} parent=11 // pred_check_branch
          %551 = sbr.rel (%p549) target = $region60
        $region59: #{tpu_custom_call.1} parent=11 // pred_region
          _
        $region60: #{tpu_custom_call.1} parent=11 // pred_fallthru
          _
      $region12: #{tpu_custom_call.1} parent=5 // pred_fallthru
        _
      %p552 = scmp.lt.s32.totalorder %s38, 2
      // Predicated region
      $region61: #{tpu_custom_call.1} parent=5 // pred_check
        %p553 = pneg %p552
      $region62: #{tpu_custom_call.1} parent=5 // pred_check_branch
        %555 = sbr.rel (%p553) target = $region64
      $region63: #{tpu_custom_call.1} parent=5 // pred_region
        // Predicated region
        $region65: #{tpu_custom_call.1} parent=63 // pred_check
          %p556 = pneg %p58
        $region66: #{tpu_custom_call.1} parent=63 // pred_check_branch
          %558 = sbr.rel (%p556) target = $region68
        $region67: #{tpu_custom_call.1} parent=63 // pred_region
          %s559 = sand.u32 %s48, 1
          %s560 = scalar_lea.sflag [#allocation5], %s559
          %s561 = sand.u32 %s48, 1
          %s562 = smul.addr %s561, 128
          %s563 = scalar_lea.vmem [#allocation4], %s562
          %565 = vsyncadd %s560, 0
          %s566 = smul.addr %s38, 16
          %s567 = smul.addr %s566, 8
          %s568 = scalar_lea.hbm %s0, %s567
          %s569 = sshll.u32 %s568, 4
          %s570 = int_to_ptr.hbm [resolvable:$true] %s569
          %s571 = sshll.u32 %s563, 4
          %s572 = int_to_ptr.vmem [resolvable:$true] %s571
          %577 = dma.hbm_to_vmem [thread:$0]  %s570, 2048, %s572, %s560, 256, 256, 16
        $region68: #{tpu_custom_call.1} parent=63 // pred_fallthru
          _
        // Predicated region
        $region69: #{tpu_custom_call.1} parent=63 // pred_check
          %p578 = pneg %p84
        $region70: #{tpu_custom_call.1} parent=63 // pred_check_branch
          %580 = sbr.rel (%p578) target = $region72
        $region71: #{tpu_custom_call.1} parent=63 // pred_region
          %s581 = sand.u32 %s38, 1
          %s582 = scalar_lea.sflag [#allocation8], %s581
          %s583 = sand.u32 %s74, 1
          %s584 = smul.addr %s583, 128
          %s585 = scalar_lea.vmem [#allocation7], %s584
          %587 = vsyncadd %s582, 0
          %s588 = smul.addr %s38, 16
          %s589 = smul.addr %s588, 8
          %s590 = scalar_lea.hbm %s1, %s589
          %s591 = sshll.u32 %s590, 4
          %s592 = int_to_ptr.hbm [resolvable:$true] %s591
          %s593 = sshll.u32 %s585, 4
          %s594 = int_to_ptr.vmem [resolvable:$true] %s593
          %599 = dma.hbm_to_vmem [thread:$0]  %s592, 2048, %s594, %s582, 256, 256, 16
        $region72: #{tpu_custom_call.1} parent=63 // pred_fallthru
          _
        // Predicated region
        $region73: #{tpu_custom_call.1} parent=63 // pred_check
          %p600 = pneg %p110
        $region74: #{tpu_custom_call.1} parent=63 // pred_check_branch
          %602 = sbr.rel (%p600) target = $region76
        $region75: #{tpu_custom_call.1} parent=63 // pred_region
          %s603 = sand.u32 %s38, 1
          %s604 = scalar_lea.sflag [#allocation8], %s603
          %s605 = sand.u32 %s100, 1
          %s606 = smul.addr %s605, 256
          %s607 = scalar_lea.vmem [#allocation9], %s606
          %609 = vsyncadd %s604, 0
          %s610 = smul.addr %s38, 32
          %s611 = smul.addr %s610, 8
          %s612 = scalar_lea.hbm %s2, %s611
          %s613 = sshll.u32 %s612, 4
          %s614 = int_to_ptr.hbm [resolvable:$true] %s613
          %s615 = sshll.u32 %s607, 4
          %s616 = int_to_ptr.vmem [resolvable:$true] %s615
          %621 = dma.hbm_to_vmem [thread:$0]  %s614, 4096, %s616, %s604, 256, 256, 16
        $region76: #{tpu_custom_call.1} parent=63 // pred_fallthru
          _
        // Predicated region
        $region77: #{tpu_custom_call.1} parent=63 // pred_check
          %p622 = pneg %p136
        $region78: #{tpu_custom_call.1} parent=63 // pred_check_branch
          %624 = sbr.rel (%p622) target = $region80
        $region79: #{tpu_custom_call.1} parent=63 // pred_region
          %p625 = scmp.lt.s32.totalorder %s38, 1
          %s626 = scalar_select %p625, %s38, 1
          %s627 = scalar_lea.vmem %s3, %s626
        $region80: #{tpu_custom_call.1} parent=63 // pred_fallthru
          _
      $region64: #{tpu_custom_call.1} parent=5 // pred_fallthru
        _
      %p628 = scmp.le.s32.totalorder 1, %s38
      %p629 = scmp.lt.s32.totalorder %s38, 3
      %p630 = pnand %p628, %p629
      %p631 = pneg %p630
      // Predicated region
      $region81: #{tpu_custom_call.1} parent=5 // pred_check
        _
      $region82: #{tpu_custom_call.1} parent=5 // pred_check_branch
        %633 = sbr.rel (%p630) target = $region84
      $region83: #{tpu_custom_call.1} parent=5 // pred_region
        %s634 = ssub.s32 %s38, 1
        %s635 = sand.u32 %s51, 1
        %s636 = scalar_lea.sflag [#allocation5], %s635
        %s637 = sand.u32 %s51, 1
        %s638 = smul.addr %s637, 128
        %s639 = scalar_lea.vmem [#allocation4], %s638
        // Predicated region
        $region85: #{tpu_custom_call.1} parent=83 // pred_check
          %p640 = pneg %p64
        $region86: #{tpu_custom_call.1} parent=83 // pred_check_branch
          %642 = sbr.rel (%p640) target = $region88
        $region87: #{tpu_custom_call.1} parent=83 // pred_region
          %644 = dma.done %s636, 2048
        $region88: #{tpu_custom_call.1} parent=83 // pred_fallthru
          _
        %s645 = sand.u32 %s43, 1
        %s646 = scalar_lea.sflag [#allocation8], %s645
        %s647 = sand.u32 %s77, 1
        %s648 = smul.addr %s647, 128
        %s649 = scalar_lea.vmem [#allocation7], %s648
        // Predicated region
        $region89: #{tpu_custom_call.1} parent=83 // pred_check
          %p650 = pneg %p90
        $region90: #{tpu_custom_call.1} parent=83 // pred_check_branch
          %652 = sbr.rel (%p650) target = $region92
        $region91: #{tpu_custom_call.1} parent=83 // pred_region
          %654 = dma.done %s646, 2048
        $region92: #{tpu_custom_call.1} parent=83 // pred_fallthru
          _
        %s655 = sand.u32 %s43, 1
        %s656 = scalar_lea.sflag [#allocation8], %s655
        %s657 = sand.u32 %s103, 1
        %s658 = smul.addr %s657, 256
        %s659 = scalar_lea.vmem [#allocation9], %s658
        // Predicated region
        $region93: #{tpu_custom_call.1} parent=83 // pred_check
          %p660 = pneg %p116
        $region94: #{tpu_custom_call.1} parent=83 // pred_check_branch
          %662 = sbr.rel (%p660) target = $region96
        $region95: #{tpu_custom_call.1} parent=83 // pred_region
          %664 = dma.done %s656, 4096
        $region96: #{tpu_custom_call.1} parent=83 // pred_fallthru
          _
        // Predicated region
        $region97: #{tpu_custom_call.1} parent=83 // pred_check
          %p665 = pneg %p163
        $region98: #{tpu_custom_call.1} parent=83 // pred_check_branch
          %667 = sbr.rel (%p665) target = $region100
        $region99: #{tpu_custom_call.1} parent=83 // pred_region
          %669 = dma.done [#allocation11], 4096
        $region100: #{tpu_custom_call.1} parent=83 // pred_fallthru
          _
        // Predicated region
        $region101: #{tpu_custom_call.1} parent=83 // pred_check
          %p670 = pneg %p205
        $region102: #{tpu_custom_call.1} parent=83 // pred_check_branch
          %672 = sbr.rel (%p670) target = $region104
        $region103: #{tpu_custom_call.1} parent=83 // pred_region
          %674 = dma.done [#allocation11], 8192
        $region104: #{tpu_custom_call.1} parent=83 // pred_fallthru
          _
        // Predicated region
        $region105: #{tpu_custom_call.1} parent=83 // pred_check
          %p675 = pneg %p247
        $region106: #{tpu_custom_call.1} parent=83 // pred_check_branch
          %677 = sbr.rel (%p675) target = $region108
        $region107: #{tpu_custom_call.1} parent=83 // pred_region
          %679 = dma.done [#allocation14], 4096
        $region108: #{tpu_custom_call.1} parent=83 // pred_fallthru
          _
        // Predicated region
        $region109: #{tpu_custom_call.1} parent=83 // pred_check
          %p680 = pneg %p289
        $region110: #{tpu_custom_call.1} parent=83 // pred_check_branch
          %682 = sbr.rel (%p680) target = $region112
        $region111: #{tpu_custom_call.1} parent=83 // pred_region
          %684 = dma.done [#allocation14], 4096
        $region112: #{tpu_custom_call.1} parent=83 // pred_fallthru
          _
        // Predicated region
        $region113: #{tpu_custom_call.1} parent=83 // pred_check
          %p685 = pneg %p331
        $region114: #{tpu_custom_call.1} parent=83 // pred_check_branch
          %687 = sbr.rel (%p685) target = $region116
        $region115: #{tpu_custom_call.1} parent=83 // pred_region
          %689 = dma.done [#allocation17], 4096
        $region116: #{tpu_custom_call.1} parent=83 // pred_fallthru
          _
        %s690 = sand.u32 %s51, 1
        %s691 = scalar_lea.sflag [#allocation5], %s690
        %s692 = sand.u32 %s51, 1
        %s693 = smul.addr %s692, 128
        %s694 = scalar_lea.vmem [#allocation4], %s693
        %p695 = pneg %p64
        %p696 = pneg %p61
        %s697 = sand.u32 %s43, 1
        %s698 = scalar_lea.sflag [#allocation8], %s697
        %s699 = sand.u32 %s77, 1
        %s700 = smul.addr %s699, 128
        %s701 = scalar_lea.vmem [#allocation7], %s700
        %p702 = pneg %p90
        %p703 = pneg %p87
        %s704 = sand.u32 %s43, 1
        %s705 = scalar_lea.sflag [#allocation8], %s704
        %s706 = sand.u32 %s103, 1
        %s707 = smul.addr %s706, 256
        %s708 = scalar_lea.vmem [#allocation9], %s707
        %p709 = pneg %p116
        %p710 = pneg %p113
        %p711 = scmp.lt.s32.totalorder %s43, 1
        %s712 = scalar_select %p711, %s43, 1
        %s713 = scalar_lea.vmem %s3, %s712
        %p714 = pneg %p142
        %p715 = pneg %p139
        %p716 = pneg %p163
        %p717 = pneg %p160
        %p718 = pneg %p184
        %p719 = pneg %p181
        %p720 = pneg %p205
        %p721 = pneg %p202
        %p722 = pneg %p226
        %p723 = pneg %p223
        %p724 = pneg %p247
        %p725 = pneg %p244
        %p726 = pneg %p268
        %p727 = pneg %p265
        %p728 = pneg %p289
        %p729 = pneg %p286
        %p730 = pneg %p310
        %p731 = pneg %p307
        %p732 = pneg %p331
        %p733 = pneg %p328
        %p734 = pneg %p352
        %p735 = pneg %p349
        %p736 = pneg %p373
        %p737 = pneg %p370
        %p738 = pneg %p394
        %p739 = pneg %p391
        %p740 = pneg %p420
        %p741 = pneg %p417
        %s742 = sand.u32 %s407, 1
        %s743 = scalar_lea.sflag [#allocation6], %s742
        %s744 = sand.u32 %s407, 1
        %s745 = smul.addr %s744, 128
        %s746 = scalar_lea.vmem [#allocation18], %s745
        %p747 = pneg %p446
        %p748 = pneg %p443
        %p749 = scmp.lt.s32.totalorder %s43, 1
        %s750 = scalar_select %p749, %s43, 1
        %s751 = smul.addr %s750, 8
        %s752 = smul.addr %s751, 8
        %s753 = scalar_lea.vmem %s17, %s752
        %p754 = scmp.lt.s32.totalorder %s43, 1
        %s755 = scalar_select %p754, %s43, 1
        %s756 = scalar_lea.vmem %s3, %s755
        %p757 = scmp.lt.s32.totalorder %s43, 1
        %s758 = scalar_select %p757, %s43, 1
        %s759 = smul.addr %s758, 8
        %s760 = smul.addr %s759, 8
        %s761 = scalar_lea.vmem %s17, %s760
        %v763 = vld [vmem:[%s639] sm:$0xff]
        %v764 = vld [vmem:[%s639 + $0x8] sm:$0xff]
        %v765 = vld [vmem:[%s639 + $0x10] sm:$0xff]
        %v766 = vld [vmem:[%s639 + $0x18] sm:$0xff]
        %v767 = vld [vmem:[%s639 + $0x20] sm:$0xff]
        %v768 = vld [vmem:[%s639 + $0x28] sm:$0xff]
        %v769 = vld [vmem:[%s639 + $0x30] sm:$0xff]
        %v770 = vld [vmem:[%s639 + $0x38] sm:$0xff]
        %v771 = vld [vmem:[%s639 + $0x40] sm:$0xff]
        %v772 = vld [vmem:[%s639 + $0x48] sm:$0xff]
        %v773 = vld [vmem:[%s639 + $0x50] sm:$0xff]
        %v774 = vld [vmem:[%s639 + $0x58] sm:$0xff]
        %v775 = vld [vmem:[%s639 + $0x60] sm:$0xff]
        %v776 = vld [vmem:[%s639 + $0x68] sm:$0xff]
        %v777 = vld [vmem:[%s639 + $0x70] sm:$0xff]
        %v778 = vld [vmem:[%s639 + $0x78] sm:$0xff]
        %v779 = vld [vmem:[%s649] sm:$0xff]
        %v780 = vld [vmem:[%s649 + $0x8] sm:$0xff]
        %v781 = vld [vmem:[%s649 + $0x10] sm:$0xff]
        %v782 = vld [vmem:[%s649 + $0x18] sm:$0xff]
        %v783 = vld [vmem:[%s649 + $0x20] sm:$0xff]
        %v784 = vld [vmem:[%s649 + $0x28] sm:$0xff]
        %v785 = vld [vmem:[%s649 + $0x30] sm:$0xff]
        %v786 = vld [vmem:[%s649 + $0x38] sm:$0xff]
        %v787 = vld [vmem:[%s649 + $0x40] sm:$0xff]
        %v788 = vld [vmem:[%s649 + $0x48] sm:$0xff]
        %v789 = vld [vmem:[%s649 + $0x50] sm:$0xff]
        %v790 = vld [vmem:[%s649 + $0x58] sm:$0xff]
        %v791 = vld [vmem:[%s649 + $0x60] sm:$0xff]
        %v792 = vld [vmem:[%s649 + $0x68] sm:$0xff]
        %v793 = vld [vmem:[%s649 + $0x70] sm:$0xff]
        %v794 = vld [vmem:[%s649 + $0x78] sm:$0xff]
        %v795 = vadd.f32 %v763, %v779
        %v796 = vadd.f32 %v764, %v780
        %v797 = vadd.f32 %v765, %v781
        %v798 = vadd.f32 %v766, %v782
        %v799 = vadd.f32 %v767, %v783
        %v800 = vadd.f32 %v768, %v784
        %v801 = vadd.f32 %v769, %v785
        %v802 = vadd.f32 %v770, %v786
        %v803 = vadd.f32 %v771, %v787
        %v804 = vadd.f32 %v772, %v788
        %v805 = vadd.f32 %v773, %v789
        %v806 = vadd.f32 %v774, %v790
        %v807 = vadd.f32 %v775, %v791
        %v808 = vadd.f32 %v776, %v792
        %v809 = vadd.f32 %v777, %v793
        %v810 = vadd.f32 %v778, %v794
        %v811 = vpack.c.bf16 %v797, %v795
        %v812 = vpack.c.bf16 %v798, %v796
        %v813 = vpack.c.bf16 %v801, %v799
        %v814 = vpack.c.bf16 %v802, %v800
        %v815 = vpack.c.bf16 %v805, %v803
        %v816 = vpack.c.bf16 %v806, %v804
        %v817 = vpack.c.bf16 %v809, %v807
        %v818 = vpack.c.bf16 %v810, %v808
        %v819 = vld [vmem:[%s659] sm:$0xff]
        %v820 = vld [vmem:[%s659 + $0x8] sm:$0xff]
        %v821 = vld [vmem:[%s659 + $0x10] sm:$0xff]
        %v822 = vld [vmem:[%s659 + $0x18] sm:$0xff]
        %v823 = vld [vmem:[%s659 + $0x20] sm:$0xff]
        %v824 = vld [vmem:[%s659 + $0x28] sm:$0xff]
        %v825 = vld [vmem:[%s659 + $0x30] sm:$0xff]
        %v826 = vld [vmem:[%s659 + $0x38] sm:$0xff]
        %v827 = vld [vmem:[%s659 + $0x40] sm:$0xff]
        %v828 = vld [vmem:[%s659 + $0x48] sm:$0xff]
        %v829 = vld [vmem:[%s659 + $0x50] sm:$0xff]
        %v830 = vld [vmem:[%s659 + $0x58] sm:$0xff]
        %v831 = vld [vmem:[%s659 + $0x60] sm:$0xff]
        %v832 = vld [vmem:[%s659 + $0x68] sm:$0xff]
        %v833 = vld [vmem:[%s659 + $0x70] sm:$0xff]
        %v834 = vld [vmem:[%s659 + $0x78] sm:$0xff]
        %v835 = vld [vmem:[%s659 + $0x80] sm:$0xff]
        %v836 = vld [vmem:[%s659 + $0x88] sm:$0xff]
        %v837 = vld [vmem:[%s659 + $0x90] sm:$0xff]
        %v838 = vld [vmem:[%s659 + $0x98] sm:$0xff]
        %v839 = vld [vmem:[%s659 + $0xa0] sm:$0xff]
        %v840 = vld [vmem:[%s659 + $0xa8] sm:$0xff]
        %v841 = vld [vmem:[%s659 + $0xb0] sm:$0xff]
        %v842 = vld [vmem:[%s659 + $0xb8] sm:$0xff]
        %v843 = vld [vmem:[%s659 + $0xc0] sm:$0xff]
        %v844 = vld [vmem:[%s659 + $0xc8] sm:$0xff]
        %v845 = vld [vmem:[%s659 + $0xd0] sm:$0xff]
        %v846 = vld [vmem:[%s659 + $0xd8] sm:$0xff]
        %v847 = vld [vmem:[%s659 + $0xe0] sm:$0xff]
        %v848 = vld [vmem:[%s659 + $0xe8] sm:$0xff]
        %v849 = vld [vmem:[%s659 + $0xf0] sm:$0xff]
        %v850 = vld [vmem:[%s659 + $0xf8] sm:$0xff]
        %v851 = vpack.c.bf16 %v821, %v819
        %v852 = vpack.c.bf16 %v822, %v820
        %v853 = vpack.c.bf16 %v825, %v823
        %v854 = vpack.c.bf16 %v826, %v824
        %v855 = vpack.c.bf16 %v829, %v827
        %v856 = vpack.c.bf16 %v830, %v828
        %v857 = vpack.c.bf16 %v833, %v831
        %v858 = vpack.c.bf16 %v834, %v832
        %v859 = vpack.c.bf16 %v837, %v835
        %v860 = vpack.c.bf16 %v838, %v836
        %v861 = vpack.c.bf16 %v841, %v839
        %v862 = vpack.c.bf16 %v842, %v840
        %v863 = vpack.c.bf16 %v845, %v843
        %v864 = vpack.c.bf16 %v846, %v844
        %v865 = vpack.c.bf16 %v849, %v847
        %v866 = vpack.c.bf16 %v850, %v848
        %v867 = vld [vmem:[%s756] sm:$0x1]
        %v868 = vld [vmem:[#allocation10] sm:$0xff]
        %v869 = vld [vmem:[#allocation10 + $0x8] sm:$0xff]
        %v870 = vld [vmem:[#allocation10 + $0x10] sm:$0xff]
        %v871 = vld [vmem:[#allocation10 + $0x18] sm:$0xff]
        %v872 = vld [vmem:[#allocation10 + $0x20] sm:$0xff]
        %v873 = vld [vmem:[#allocation10 + $0x28] sm:$0xff]
        %v874 = vld [vmem:[#allocation10 + $0x30] sm:$0xff]
        %v875 = vld [vmem:[#allocation10 + $0x38] sm:$0xff]
        %v876 = vld [vmem:[#allocation10 + $0x40] sm:$0xff]
        %v877 = vld [vmem:[#allocation10 + $0x48] sm:$0xff]
        %v878 = vld [vmem:[#allocation10 + $0x50] sm:$0xff]
        %v879 = vld [vmem:[#allocation10 + $0x58] sm:$0xff]
        %v880 = vld [vmem:[#allocation10 + $0x60] sm:$0xff]
        %v881 = vld [vmem:[#allocation10 + $0x68] sm:$0xff]
        %v882 = vld [vmem:[#allocation10 + $0x70] sm:$0xff]
        %v883 = vld [vmem:[#allocation10 + $0x78] sm:$0xff]
        %v884 = vld [vmem:[#allocation10 + $0x80] sm:$0xff]
        %v885 = vld [vmem:[#allocation10 + $0x88] sm:$0xff]
        %v886 = vld [vmem:[#allocation10 + $0x90] sm:$0xff]
        %v887 = vld [vmem:[#allocation10 + $0x98] sm:$0xff]
        %v888 = vld [vmem:[#allocation10 + $0xa0] sm:$0xff]
        %v889 = vld [vmem:[#allocation10 + $0xa8] sm:$0xff]
        %v890 = vld [vmem:[#allocation10 + $0xb0] sm:$0xff]
        %v891 = vld [vmem:[#allocation10 + $0xb8] sm:$0xff]
        %v892 = vld [vmem:[#allocation10 + $0xc0] sm:$0xff]
        %v893 = vld [vmem:[#allocation10 + $0xc8] sm:$0xff]
        %v894 = vld [vmem:[#allocation10 + $0xd0] sm:$0xff]
        %v895 = vld [vmem:[#allocation10 + $0xd8] sm:$0xff]
        %v896 = vld [vmem:[#allocation10 + $0xe0] sm:$0xff]
        %v897 = vld [vmem:[#allocation10 + $0xe8] sm:$0xff]
        %v898 = vld [vmem:[#allocation10 + $0xf0] sm:$0xff]
        %v899 = vld [vmem:[#allocation10 + $0xf8] sm:$0xff]
        %v900 = vld [vmem:[%s5] sm:$0x3]
        %v902 = vperm.slane %v900, 0
        %v903 = vperm.slane %v900, 1
        %v938 = vunpack.c.l.b16 %v868
        %v939 = vunpack.c.h.b16 %v868
        %v940 = vunpack.c.l.b16 %v869
        %v941 = vunpack.c.h.b16 %v869
        %v942 = vunpack.c.l.b16 %v870
        %v943 = vunpack.c.h.b16 %v870
        %v944 = vunpack.c.l.b16 %v871
        %v945 = vunpack.c.h.b16 %v871
        %v946 = vunpack.c.l.b16 %v872
        %v947 = vunpack.c.h.b16 %v872
        %v948 = vunpack.c.l.b16 %v873
        %v949 = vunpack.c.h.b16 %v873
        %v950 = vunpack.c.l.b16 %v874
        %v951 = vunpack.c.h.b16 %v874
        %v952 = vunpack.c.l.b16 %v875
        %v953 = vunpack.c.h.b16 %v875
        %v954 = vunpack.c.l.b16 %v876
        %v955 = vunpack.c.h.b16 %v876
        %v956 = vunpack.c.l.b16 %v877
        %v957 = vunpack.c.h.b16 %v877
        %v958 = vunpack.c.l.b16 %v878
        %v959 = vunpack.c.h.b16 %v878
        %v960 = vunpack.c.l.b16 %v879
        %v961 = vunpack.c.h.b16 %v879
        %v962 = vunpack.c.l.b16 %v880
        %v963 = vunpack.c.h.b16 %v880
        %v964 = vunpack.c.l.b16 %v881
        %v965 = vunpack.c.h.b16 %v881
        %v966 = vunpack.c.l.b16 %v882
        %v967 = vunpack.c.h.b16 %v882
        %v968 = vunpack.c.l.b16 %v883
        %v969 = vunpack.c.h.b16 %v883
        %v970 = vunpack.c.l.b16 %v884
        %v971 = vunpack.c.h.b16 %v884
        %v972 = vunpack.c.l.b16 %v885
        %v973 = vunpack.c.h.b16 %v885
        %v974 = vunpack.c.l.b16 %v886
        %v975 = vunpack.c.h.b16 %v886
        %v976 = vunpack.c.l.b16 %v887
        %v977 = vunpack.c.h.b16 %v887
        %v978 = vunpack.c.l.b16 %v888
        %v979 = vunpack.c.h.b16 %v888
        %v980 = vunpack.c.l.b16 %v889
        %v981 = vunpack.c.h.b16 %v889
        %v982 = vunpack.c.l.b16 %v890
        %v983 = vunpack.c.h.b16 %v890
        %v984 = vunpack.c.l.b16 %v891
        %v985 = vunpack.c.h.b16 %v891
        %v986 = vunpack.c.l.b16 %v892
        %v987 = vunpack.c.h.b16 %v892
        %v988 = vunpack.c.l.b16 %v893
        %v989 = vunpack.c.h.b16 %v893
        %v990 = vunpack.c.l.b16 %v894
        %v991 = vunpack.c.h.b16 %v894
        %v992 = vunpack.c.l.b16 %v895
        %v993 = vunpack.c.h.b16 %v895
        %v994 = vunpack.c.l.b16 %v896
        %v995 = vunpack.c.h.b16 %v896
        %v996 = vunpack.c.l.b16 %v897
        %v997 = vunpack.c.h.b16 %v897
        %v998 = vunpack.c.l.b16 %v898
        %v999 = vunpack.c.h.b16 %v898
        %v1000 = vunpack.c.l.b16 %v899
        %v1001 = vunpack.c.h.b16 %v899
        %v1002 = vpack.c.b16 %v940, %v938
        %v1003 = vpack.c.b16 %v941, %v939
        %v1004 = vpack.c.b16 %v944, %v942
        %v1005 = vpack.c.b16 %v945, %v943
        %v1006 = vpack.c.b16 %v948, %v946
        %v1007 = vpack.c.b16 %v949, %v947
        %v1008 = vpack.c.b16 %v952, %v950
        %v1009 = vpack.c.b16 %v953, %v951
        %v1010 = vpack.c.b16 %v956, %v954
        %v1011 = vpack.c.b16 %v957, %v955
        %v1012 = vpack.c.b16 %v960, %v958
        %v1013 = vpack.c.b16 %v961, %v959
        %v1014 = vpack.c.b16 %v964, %v962
        %v1015 = vpack.c.b16 %v965, %v963
        %v1016 = vpack.c.b16 %v968, %v966
        %v1017 = vpack.c.b16 %v969, %v967
        %v1018 = vpack.c.b16 %v972, %v970
        %v1019 = vpack.c.b16 %v973, %v971
        %v1020 = vpack.c.b16 %v976, %v974
        %v1021 = vpack.c.b16 %v977, %v975
        %v1022 = vpack.c.b16 %v980, %v978
        %v1023 = vpack.c.b16 %v981, %v979
        %v1024 = vpack.c.b16 %v984, %v982
        %v1025 = vpack.c.b16 %v985, %v983
        %v1026 = vpack.c.b16 %v988, %v986
        %v1027 = vpack.c.b16 %v989, %v987
        %v1028 = vpack.c.b16 %v992, %v990
        %v1029 = vpack.c.b16 %v993, %v991
        %v1030 = vpack.c.b16 %v996, %v994
        %v1031 = vpack.c.b16 %v997, %v995
        %v1032 = vpack.c.b16 %v1000, %v998
        %v1033 = vpack.c.b16 %v1001, %v999
        %1066 = vmatpush.bf16.msra.mxu0 %v1016
        %1067 = vmatpush.bf16.msra.mxu0 %v1014
        %1068 = vmatpush.bf16.msra.mxu0 %v1012
        %1069 = vmatpush.bf16.msra.mxu0 %v1010
        %1070 = vmatpush.bf16.msra.mxu0 %v1008
        %1071 = vmatpush.bf16.msra.mxu0 %v1006
        %1072 = vmatpush.bf16.msra.mxu0 %v1004
        %1073 = vmatpush.bf16.msra.mxu0 %v1002
        %1074 = vmatmul.bf16.gmra.mxu0 %v811
        %v1075 = vpop.f32.mrf.mxu0
        %v1076 = vadd.f32 %v902, %v1075
        %v1077 = vpop.f32.mrf.mxu0
        %v1078 = vadd.f32 %v902, %v1077
        %1079 = vmatmul.bf16.gmra.mxu0 %v813
        %v1080 = vpop.f32.mrf.mxu0
        %v1081 = vadd.f32 %v902, %v1080
        %v1082 = vpop.f32.mrf.mxu0
        %v1083 = vadd.f32 %v902, %v1082
        %1084 = vmatmul.bf16.gmra.mxu0 %v815
        %v1085 = vpop.f32.mrf.mxu0
        %v1086 = vadd.f32 %v902, %v1085
        %v1087 = vpop.f32.mrf.mxu0
        %v1088 = vadd.f32 %v902, %v1087
        %1089 = vmatmul.bf16.gmra.mxu0 %v817
        %v1090 = vpop.f32.mrf.mxu0
        %v1091 = vadd.f32 %v902, %v1090
        %v1092 = vpop.f32.mrf.mxu0
        %v1093 = vadd.f32 %v902, %v1092
        %1094 = vdwg.mxu0
        %1095 = vmatpush.bf16.msra.mxu0 %v1032
        %1096 = vmatpush.bf16.msra.mxu0 %v1030
        %1097 = vmatpush.bf16.msra.mxu0 %v1028
        %1098 = vmatpush.bf16.msra.mxu0 %v1026
        %1099 = vmatpush.bf16.msra.mxu0 %v1024
        %1100 = vmatpush.bf16.msra.mxu0 %v1022
        %1101 = vmatpush.bf16.msra.mxu0 %v1020
        %1102 = vmatpush.bf16.msra.mxu0 %v1018
        %1103 = vmatmul.bf16.gmra.mxu0 %v812
        %v1104 = vpop.f32.mrf.mxu0
        %v1105 = vadd.f32 %v1076, %v1104
        %v1106 = vpop.f32.mrf.mxu0
        %v1107 = vadd.f32 %v1078, %v1106
        %1108 = vmatmul.bf16.gmra.mxu0 %v814
        %v1109 = vpop.f32.mrf.mxu0
        %v1110 = vadd.f32 %v1081, %v1109
        %v1111 = vpop.f32.mrf.mxu0
        %v1112 = vadd.f32 %v1083, %v1111
        %1113 = vmatmul.bf16.gmra.mxu0 %v816
        %v1114 = vpop.f32.mrf.mxu0
        %v1115 = vadd.f32 %v1086, %v1114
        %v1116 = vpop.f32.mrf.mxu0
        %v1117 = vadd.f32 %v1088, %v1116
        %1118 = vmatmul.bf16.gmra.mxu0 %v818
        %v1119 = vpop.f32.mrf.mxu0
        %v1120 = vadd.f32 %v1091, %v1119
        %v1121 = vpop.f32.mrf.mxu0
        %v1122 = vadd.f32 %v1093, %v1121
        %1123 = vdwg.mxu0
        %1124 = vmatpush.bf16.msra.mxu0 %v1017
        %1125 = vmatpush.bf16.msra.mxu0 %v1015
        %1126 = vmatpush.bf16.msra.mxu0 %v1013
        %1127 = vmatpush.bf16.msra.mxu0 %v1011
        %1128 = vmatpush.bf16.msra.mxu0 %v1009
        %1129 = vmatpush.bf16.msra.mxu0 %v1007
        %1130 = vmatpush.bf16.msra.mxu0 %v1005
        %1131 = vmatpush.bf16.msra.mxu0 %v1003
        %1132 = vmatmul.bf16.gmra.mxu0 %v811
        %v1133 = vpop.f32.mrf.mxu0
        %v1134 = vadd.f32 %v903, %v1133
        %v1135 = vpop.f32.mrf.mxu0
        %v1136 = vadd.f32 %v903, %v1135
        %1137 = vmatmul.bf16.gmra.mxu0 %v813
        %v1138 = vpop.f32.mrf.mxu0
        %v1139 = vadd.f32 %v903, %v1138
        %v1140 = vpop.f32.mrf.mxu0
        %v1141 = vadd.f32 %v903, %v1140
        %1142 = vmatmul.bf16.gmra.mxu0 %v815
        %v1143 = vpop.f32.mrf.mxu0
        %v1144 = vadd.f32 %v903, %v1143
        %v1145 = vpop.f32.mrf.mxu0
        %v1146 = vadd.f32 %v903, %v1145
        %1147 = vmatmul.bf16.gmra.mxu0 %v817
        %v1148 = vpop.f32.mrf.mxu0
        %v1149 = vadd.f32 %v903, %v1148
        %v1150 = vpop.f32.mrf.mxu0
        %v1151 = vadd.f32 %v903, %v1150
        %1152 = vdwg.mxu0
        %1153 = vmatpush.bf16.msra.mxu0 %v1033
        %1154 = vmatpush.bf16.msra.mxu0 %v1031
        %1155 = vmatpush.bf16.msra.mxu0 %v1029
        %1156 = vmatpush.bf16.msra.mxu0 %v1027
        %1157 = vmatpush.bf16.msra.mxu0 %v1025
        %1158 = vmatpush.bf16.msra.mxu0 %v1023
        %1159 = vmatpush.bf16.msra.mxu0 %v1021
        %1160 = vmatpush.bf16.msra.mxu0 %v1019
        %1161 = vmatmul.bf16.gmra.mxu0 %v812
        %v1162 = vpop.f32.mrf.mxu0
        %v1163 = vadd.f32 %v1134, %v1162
        %v1164 = vpop.f32.mrf.mxu0
        %v1165 = vadd.f32 %v1136, %v1164
        %1166 = vmatmul.bf16.gmra.mxu0 %v814
        %v1167 = vpop.f32.mrf.mxu0
        %v1168 = vadd.f32 %v1139, %v1167
        %v1169 = vpop.f32.mrf.mxu0
        %v1170 = vadd.f32 %v1141, %v1169
        %1171 = vmatmul.bf16.gmra.mxu0 %v816
        %v1172 = vpop.f32.mrf.mxu0
        %v1173 = vadd.f32 %v1144, %v1172
        %v1174 = vpop.f32.mrf.mxu0
        %v1175 = vadd.f32 %v1146, %v1174
        %1176 = vmatmul.bf16.gmra.mxu0 %v818
        %v1177 = vpop.f32.mrf.mxu0
        %v1178 = vadd.f32 %v1149, %v1177
        %v1179 = vpop.f32.mrf.mxu0
        %v1180 = vadd.f32 %v1151, %v1179
        %1181 = vdwg.mxu0
        %v1182 = vld [vmem:[#allocation12] sm:$0xff]
        %v1183 = vld [vmem:[#allocation12 + $0x8] sm:$0xff]
        %v1184 = vld [vmem:[#allocation12 + $0x10] sm:$0xff]
        %v1185 = vld [vmem:[#allocation12 + $0x18] sm:$0xff]
        %v1186 = vld [vmem:[#allocation12 + $0x20] sm:$0xff]
        %v1187 = vld [vmem:[#allocation12 + $0x28] sm:$0xff]
        %v1188 = vld [vmem:[#allocation12 + $0x30] sm:$0xff]
        %v1189 = vld [vmem:[#allocation12 + $0x38] sm:$0xff]
        %v1190 = vld [vmem:[#allocation12 + $0x40] sm:$0xff]
        %v1191 = vld [vmem:[#allocation12 + $0x48] sm:$0xff]
        %v1192 = vld [vmem:[#allocation12 + $0x50] sm:$0xff]
        %v1193 = vld [vmem:[#allocation12 + $0x58] sm:$0xff]
        %v1194 = vld [vmem:[#allocation12 + $0x60] sm:$0xff]
        %v1195 = vld [vmem:[#allocation12 + $0x68] sm:$0xff]
        %v1196 = vld [vmem:[#allocation12 + $0x70] sm:$0xff]
        %v1197 = vld [vmem:[#allocation12 + $0x78] sm:$0xff]
        %v1198 = vld [vmem:[#allocation12 + $0x80] sm:$0xff]
        %v1199 = vld [vmem:[#allocation12 + $0x88] sm:$0xff]
        %v1200 = vld [vmem:[#allocation12 + $0x90] sm:$0xff]
        %v1201 = vld [vmem:[#allocation12 + $0x98] sm:$0xff]
        %v1202 = vld [vmem:[#allocation12 + $0xa0] sm:$0xff]
        %v1203 = vld [vmem:[#allocation12 + $0xa8] sm:$0xff]
        %v1204 = vld [vmem:[#allocation12 + $0xb0] sm:$0xff]
        %v1205 = vld [vmem:[#allocation12 + $0xb8] sm:$0xff]
        %v1206 = vld [vmem:[#allocation12 + $0xc0] sm:$0xff]
        %v1207 = vld [vmem:[#allocation12 + $0xc8] sm:$0xff]
        %v1208 = vld [vmem:[#allocation12 + $0xd0] sm:$0xff]
        %v1209 = vld [vmem:[#allocation12 + $0xd8] sm:$0xff]
        %v1210 = vld [vmem:[#allocation12 + $0xe0] sm:$0xff]
        %v1211 = vld [vmem:[#allocation12 + $0xe8] sm:$0xff]
        %v1212 = vld [vmem:[#allocation12 + $0xf0] sm:$0xff]
        %v1213 = vld [vmem:[#allocation12 + $0xf8] sm:$0xff]
        %v1214 = vld [vmem:[#allocation12 + $0x100] sm:$0xff]
        %v1215 = vld [vmem:[#allocation12 + $0x108] sm:$0xff]
        %v1216 = vld [vmem:[#allocation12 + $0x110] sm:$0xff]
        %v1217 = vld [vmem:[#allocation12 + $0x118] sm:$0xff]
        %v1218 = vld [vmem:[#allocation12 + $0x120] sm:$0xff]
        %v1219 = vld [vmem:[#allocation12 + $0x128] sm:$0xff]
        %v1220 = vld [vmem:[#allocation12 + $0x130] sm:$0xff]
        %v1221 = vld [vmem:[#allocation12 + $0x138] sm:$0xff]
        %v1222 = vld [vmem:[#allocation12 + $0x140] sm:$0xff]
        %v1223 = vld [vmem:[#allocation12 + $0x148] sm:$0xff]
        %v1224 = vld [vmem:[#allocation12 + $0x150] sm:$0xff]
        %v1225 = vld [vmem:[#allocation12 + $0x158] sm:$0xff]
        %v1226 = vld [vmem:[#allocation12 + $0x160] sm:$0xff]
        %v1227 = vld [vmem:[#allocation12 + $0x168] sm:$0xff]
        %v1228 = vld [vmem:[#allocation12 + $0x170] sm:$0xff]
        %v1229 = vld [vmem:[#allocation12 + $0x178] sm:$0xff]
        %v1230 = vld [vmem:[#allocation12 + $0x180] sm:$0xff]
        %v1231 = vld [vmem:[#allocation12 + $0x188] sm:$0xff]
        %v1232 = vld [vmem:[#allocation12 + $0x190] sm:$0xff]
        %v1233 = vld [vmem:[#allocation12 + $0x198] sm:$0xff]
        %v1234 = vld [vmem:[#allocation12 + $0x1a0] sm:$0xff]
        %v1235 = vld [vmem:[#allocation12 + $0x1a8] sm:$0xff]
        %v1236 = vld [vmem:[#allocation12 + $0x1b0] sm:$0xff]
        %v1237 = vld [vmem:[#allocation12 + $0x1b8] sm:$0xff]
        %v1238 = vld [vmem:[#allocation12 + $0x1c0] sm:$0xff]
        %v1239 = vld [vmem:[#allocation12 + $0x1c8] sm:$0xff]
        %v1240 = vld [vmem:[#allocation12 + $0x1d0] sm:$0xff]
        %v1241 = vld [vmem:[#allocation12 + $0x1d8] sm:$0xff]
        %v1242 = vld [vmem:[#allocation12 + $0x1e0] sm:$0xff]
        %v1243 = vld [vmem:[#allocation12 + $0x1e8] sm:$0xff]
        %v1244 = vld [vmem:[#allocation12 + $0x1f0] sm:$0xff]
        %v1245 = vld [vmem:[#allocation12 + $0x1f8] sm:$0xff]
        %v1246 = vld [vmem:[%s7] sm:$0xf]
        %v1248 = vperm.slane %v1246, 0
        %v1249 = vperm.slane %v1246, 1
        %v1250 = vperm.slane %v1246, 2
        %v1251 = vperm.slane %v1246, 3
        %v1320 = vunpack.c.l.b16 %v1182
        %v1321 = vunpack.c.h.b16 %v1182
        %v1322 = vunpack.c.l.b16 %v1183
        %v1323 = vunpack.c.h.b16 %v1183
        %v1324 = vunpack.c.l.b16 %v1184
        %v1325 = vunpack.c.h.b16 %v1184
        %v1326 = vunpack.c.l.b16 %v1185
        %v1327 = vunpack.c.h.b16 %v1185
        %v1328 = vunpack.c.l.b16 %v1186
        %v1329 = vunpack.c.h.b16 %v1186
        %v1330 = vunpack.c.l.b16 %v1187
        %v1331 = vunpack.c.h.b16 %v1187
        %v1332 = vunpack.c.l.b16 %v1188
        %v1333 = vunpack.c.h.b16 %v1188
        %v1334 = vunpack.c.l.b16 %v1189
        %v1335 = vunpack.c.h.b16 %v1189
        %v1336 = vunpack.c.l.b16 %v1190
        %v1337 = vunpack.c.h.b16 %v1190
        %v1338 = vunpack.c.l.b16 %v1191
        %v1339 = vunpack.c.h.b16 %v1191
        %v1340 = vunpack.c.l.b16 %v1192
        %v1341 = vunpack.c.h.b16 %v1192
        %v1342 = vunpack.c.l.b16 %v1193
        %v1343 = vunpack.c.h.b16 %v1193
        %v1344 = vunpack.c.l.b16 %v1194
        %v1345 = vunpack.c.h.b16 %v1194
        %v1346 = vunpack.c.l.b16 %v1195
        %v1347 = vunpack.c.h.b16 %v1195
        %v1348 = vunpack.c.l.b16 %v1196
        %v1349 = vunpack.c.h.b16 %v1196
        %v1350 = vunpack.c.l.b16 %v1197
        %v1351 = vunpack.c.h.b16 %v1197
        %v1352 = vunpack.c.l.b16 %v1198
        %v1353 = vunpack.c.h.b16 %v1198
        %v1354 = vunpack.c.l.b16 %v1199
        %v1355 = vunpack.c.h.b16 %v1199
        %v1356 = vunpack.c.l.b16 %v1200
        %v1357 = vunpack.c.h.b16 %v1200
        %v1358 = vunpack.c.l.b16 %v1201
        %v1359 = vunpack.c.h.b16 %v1201
        %v1360 = vunpack.c.l.b16 %v1202
        %v1361 = vunpack.c.h.b16 %v1202
        %v1362 = vunpack.c.l.b16 %v1203
        %v1363 = vunpack.c.h.b16 %v1203
        %v1364 = vunpack.c.l.b16 %v1204
        %v1365 = vunpack.c.h.b16 %v1204
        %v1366 = vunpack.c.l.b16 %v1205
        %v1367 = vunpack.c.h.b16 %v1205
        %v1368 = vunpack.c.l.b16 %v1206
        %v1369 = vunpack.c.h.b16 %v1206
        %v1370 = vunpack.c.l.b16 %v1207
        %v1371 = vunpack.c.h.b16 %v1207
        %v1372 = vunpack.c.l.b16 %v1208
        %v1373 = vunpack.c.h.b16 %v1208
        %v1374 = vunpack.c.l.b16 %v1209
        %v1375 = vunpack.c.h.b16 %v1209
        %v1376 = vunpack.c.l.b16 %v1210
        %v1377 = vunpack.c.h.b16 %v1210
        %v1378 = vunpack.c.l.b16 %v1211
        %v1379 = vunpack.c.h.b16 %v1211
        %v1380 = vunpack.c.l.b16 %v1212
        %v1381 = vunpack.c.h.b16 %v1212
        %v1382 = vunpack.c.l.b16 %v1213
        %v1383 = vunpack.c.h.b16 %v1213
        %v1384 = vunpack.c.l.b16 %v1214
        %v1385 = vunpack.c.h.b16 %v1214
        %v1386 = vunpack.c.l.b16 %v1215
        %v1387 = vunpack.c.h.b16 %v1215
        %v1388 = vunpack.c.l.b16 %v1216
        %v1389 = vunpack.c.h.b16 %v1216
        %v1390 = vunpack.c.l.b16 %v1217
        %v1391 = vunpack.c.h.b16 %v1217
        %v1392 = vunpack.c.l.b16 %v1218
        %v1393 = vunpack.c.h.b16 %v1218
        %v1394 = vunpack.c.l.b16 %v1219
        %v1395 = vunpack.c.h.b16 %v1219
        %v1396 = vunpack.c.l.b16 %v1220
        %v1397 = vunpack.c.h.b16 %v1220
        %v1398 = vunpack.c.l.b16 %v1221
        %v1399 = vunpack.c.h.b16 %v1221
        %v1400 = vunpack.c.l.b16 %v1222
        %v1401 = vunpack.c.h.b16 %v1222
        %v1402 = vunpack.c.l.b16 %v1223
        %v1403 = vunpack.c.h.b16 %v1223
        %v1404 = vunpack.c.l.b16 %v1224
        %v1405 = vunpack.c.h.b16 %v1224
        %v1406 = vunpack.c.l.b16 %v1225
        %v1407 = vunpack.c.h.b16 %v1225
        %v1408 = vunpack.c.l.b16 %v1226
        %v1409 = vunpack.c.h.b16 %v1226
        %v1410 = vunpack.c.l.b16 %v1227
        %v1411 = vunpack.c.h.b16 %v1227
        %v1412 = vunpack.c.l.b16 %v1228
        %v1413 = vunpack.c.h.b16 %v1228
        %v1414 = vunpack.c.l.b16 %v1229
        %v1415 = vunpack.c.h.b16 %v1229
        %v1416 = vunpack.c.l.b16 %v1230
        %v1417 = vunpack.c.h.b16 %v1230
        %v1418 = vunpack.c.l.b16 %v1231
        %v1419 = vunpack.c.h.b16 %v1231
        %v1420 = vunpack.c.l.b16 %v1232
        %v1421 = vunpack.c.h.b16 %v1232
        %v1422 = vunpack.c.l.b16 %v1233
        %v1423 = vunpack.c.h.b16 %v1233
        %v1424 = vunpack.c.l.b16 %v1234
        %v1425 = vunpack.c.h.b16 %v1234
        %v1426 = vunpack.c.l.b16 %v1235
        %v1427 = vunpack.c.h.b16 %v1235
        %v1428 = vunpack.c.l.b16 %v1236
        %v1429 = vunpack.c.h.b16 %v1236
        %v1430 = vunpack.c.l.b16 %v1237
        %v1431 = vunpack.c.h.b16 %v1237
        %v1432 = vunpack.c.l.b16 %v1238
        %v1433 = vunpack.c.h.b16 %v1238
        %v1434 = vunpack.c.l.b16 %v1239
        %v1435 = vunpack.c.h.b16 %v1239
        %v1436 = vunpack.c.l.b16 %v1240
        %v1437 = vunpack.c.h.b16 %v1240
        %v1438 = vunpack.c.l.b16 %v1241
        %v1439 = vunpack.c.h.b16 %v1241
        %v1440 = vunpack.c.l.b16 %v1242
        %v1441 = vunpack.c.h.b16 %v1242
        %v1442 = vunpack.c.l.b16 %v1243
        %v1443 = vunpack.c.h.b16 %v1243
        %v1444 = vunpack.c.l.b16 %v1244
        %v1445 = vunpack.c.h.b16 %v1244
        %v1446 = vunpack.c.l.b16 %v1245
        %v1447 = vunpack.c.h.b16 %v1245
        %v1448 = vpack.c.b16 %v1324, %v1320
        %v1449 = vpack.c.b16 %v1325, %v1321
        %v1450 = vpack.c.b16 %v1326, %v1322
        %v1451 = vpack.c.b16 %v1327, %v1323
        %v1452 = vpack.c.b16 %v1332, %v1328
        %v1453 = vpack.c.b16 %v1333, %v1329
        %v1454 = vpack.c.b16 %v1334, %v1330
        %v1455 = vpack.c.b16 %v1335, %v1331
        %v1456 = vpack.c.b16 %v1340, %v1336
        %v1457 = vpack.c.b16 %v1341, %v1337
        %v1458 = vpack.c.b16 %v1342, %v1338
        %v1459 = vpack.c.b16 %v1343, %v1339
        %v1460 = vpack.c.b16 %v1348, %v1344
        %v1461 = vpack.c.b16 %v1349, %v1345
        %v1462 = vpack.c.b16 %v1350, %v1346
        %v1463 = vpack.c.b16 %v1351, %v1347
        %v1464 = vpack.c.b16 %v1356, %v1352
        %v1465 = vpack.c.b16 %v1357, %v1353
        %v1466 = vpack.c.b16 %v1358, %v1354
        %v1467 = vpack.c.b16 %v1359, %v1355
        %v1468 = vpack.c.b16 %v1364, %v1360
        %v1469 = vpack.c.b16 %v1365, %v1361
        %v1470 = vpack.c.b16 %v1366, %v1362
        %v1471 = vpack.c.b16 %v1367, %v1363
        %v1472 = vpack.c.b16 %v1372, %v1368
        %v1473 = vpack.c.b16 %v1373, %v1369
        %v1474 = vpack.c.b16 %v1374, %v1370
        %v1475 = vpack.c.b16 %v1375, %v1371
        %v1476 = vpack.c.b16 %v1380, %v1376
        %v1477 = vpack.c.b16 %v1381, %v1377
        %v1478 = vpack.c.b16 %v1382, %v1378
        %v1479 = vpack.c.b16 %v1383, %v1379
        %v1480 = vpack.c.b16 %v1388, %v1384
        %v1481 = vpack.c.b16 %v1389, %v1385
        %v1482 = vpack.c.b16 %v1390, %v1386
        %v1483 = vpack.c.b16 %v1391, %v1387
        %v1484 = vpack.c.b16 %v1396, %v1392
        %v1485 = vpack.c.b16 %v1397, %v1393
        %v1486 = vpack.c.b16 %v1398, %v1394
        %v1487 = vpack.c.b16 %v1399, %v1395
        %v1488 = vpack.c.b16 %v1404, %v1400
        %v1489 = vpack.c.b16 %v1405, %v1401
        %v1490 = vpack.c.b16 %v1406, %v1402
        %v1491 = vpack.c.b16 %v1407, %v1403
        %v1492 = vpack.c.b16 %v1412, %v1408
        %v1493 = vpack.c.b16 %v1413, %v1409
        %v1494 = vpack.c.b16 %v1414, %v1410
        %v1495 = vpack.c.b16 %v1415, %v1411
        %v1496 = vpack.c.b16 %v1420, %v1416
        %v1497 = vpack.c.b16 %v1421, %v1417
        %v1498 = vpack.c.b16 %v1422, %v1418
        %v1499 = vpack.c.b16 %v1423, %v1419
        %v1500 = vpack.c.b16 %v1428, %v1424
        %v1501 = vpack.c.b16 %v1429, %v1425
        %v1502 = vpack.c.b16 %v1430, %v1426
        %v1503 = vpack.c.b16 %v1431, %v1427
        %v1504 = vpack.c.b16 %v1436, %v1432
        %v1505 = vpack.c.b16 %v1437, %v1433
        %v1506 = vpack.c.b16 %v1438, %v1434
        %v1507 = vpack.c.b16 %v1439, %v1435
        %v1508 = vpack.c.b16 %v1444, %v1440
        %v1509 = vpack.c.b16 %v1445, %v1441
        %v1510 = vpack.c.b16 %v1446, %v1442
        %v1511 = vpack.c.b16 %v1447, %v1443
        %1576 = vmatpush.bf16.msra.mxu0 %v1476
        %1577 = vmatpush.bf16.msra.mxu0 %v1472
        %1578 = vmatpush.bf16.msra.mxu0 %v1468
        %1579 = vmatpush.bf16.msra.mxu0 %v1464
        %1580 = vmatpush.bf16.msra.mxu0 %v1460
        %1581 = vmatpush.bf16.msra.mxu0 %v1456
        %1582 = vmatpush.bf16.msra.mxu0 %v1452
        %1583 = vmatpush.bf16.msra.mxu0 %v1448
        %1584 = vmatmul.bf16.gmra.mxu0 %v851
        %v1585 = vpop.f32.mrf.mxu0
        %v1586 = vadd.f32 %v1248, %v1585
        %v1587 = vpop.f32.mrf.mxu0
        %v1588 = vadd.f32 %v1248, %v1587
        %1589 = vmatmul.bf16.gmra.mxu0 %v853
        %v1590 = vpop.f32.mrf.mxu0
        %v1591 = vadd.f32 %v1248, %v1590
        %v1592 = vpop.f32.mrf.mxu0
        %v1593 = vadd.f32 %v1248, %v1592
        %1594 = vmatmul.bf16.gmra.mxu0 %v855
        %v1595 = vpop.f32.mrf.mxu0
        %v1596 = vadd.f32 %v1248, %v1595
        %v1597 = vpop.f32.mrf.mxu0
        %v1598 = vadd.f32 %v1248, %v1597
        %1599 = vmatmul.bf16.gmra.mxu0 %v857
        %v1600 = vpop.f32.mrf.mxu0
        %v1601 = vadd.f32 %v1248, %v1600
        %v1602 = vpop.f32.mrf.mxu0
        %v1603 = vadd.f32 %v1248, %v1602
        %1604 = vmatmul.bf16.gmra.mxu0 %v859
        %v1605 = vpop.f32.mrf.mxu0
        %v1606 = vadd.f32 %v1248, %v1605
        %v1607 = vpop.f32.mrf.mxu0
        %v1608 = vadd.f32 %v1248, %v1607
        %1609 = vmatmul.bf16.gmra.mxu0 %v861
        %v1610 = vpop.f32.mrf.mxu0
        %v1611 = vadd.f32 %v1248, %v1610
        %v1612 = vpop.f32.mrf.mxu0
        %v1613 = vadd.f32 %v1248, %v1612
        %1614 = vmatmul.bf16.gmra.mxu0 %v863
        %v1615 = vpop.f32.mrf.mxu0
        %v1616 = vadd.f32 %v1248, %v1615
        %v1617 = vpop.f32.mrf.mxu0
        %v1618 = vadd.f32 %v1248, %v1617
        %1619 = vmatmul.bf16.gmra.mxu0 %v865
        %v1620 = vpop.f32.mrf.mxu0
        %v1621 = vadd.f32 %v1248, %v1620
        %v1622 = vpop.f32.mrf.mxu0
        %v1623 = vadd.f32 %v1248, %v1622
        %1624 = vdwg.mxu0
        %1625 = vmatpush.bf16.msra.mxu0 %v1508
        %1626 = vmatpush.bf16.msra.mxu0 %v1504
        %1627 = vmatpush.bf16.msra.mxu0 %v1500
        %1628 = vmatpush.bf16.msra.mxu0 %v1496
        %1629 = vmatpush.bf16.msra.mxu0 %v1492
        %1630 = vmatpush.bf16.msra.mxu0 %v1488
        %1631 = vmatpush.bf16.msra.mxu0 %v1484
        %1632 = vmatpush.bf16.msra.mxu0 %v1480
        %1633 = vmatmul.bf16.gmra.mxu0 %v852
        %v1634 = vpop.f32.mrf.mxu0
        %v1635 = vadd.f32 %v1586, %v1634
        %v1636 = vpop.f32.mrf.mxu0
        %v1637 = vadd.f32 %v1588, %v1636
        %1638 = vmatmul.bf16.gmra.mxu0 %v854
        %v1639 = vpop.f32.mrf.mxu0
        %v1640 = vadd.f32 %v1591, %v1639
        %v1641 = vpop.f32.mrf.mxu0
        %v1642 = vadd.f32 %v1593, %v1641
        %1643 = vmatmul.bf16.gmra.mxu0 %v856
        %v1644 = vpop.f32.mrf.mxu0
        %v1645 = vadd.f32 %v1596, %v1644
        %v1646 = vpop.f32.mrf.mxu0
        %v1647 = vadd.f32 %v1598, %v1646
        %1648 = vmatmul.bf16.gmra.mxu0 %v858
        %v1649 = vpop.f32.mrf.mxu0
        %v1650 = vadd.f32 %v1601, %v1649
        %v1651 = vpop.f32.mrf.mxu0
        %v1652 = vadd.f32 %v1603, %v1651
        %1653 = vmatmul.bf16.gmra.mxu0 %v860
        %v1654 = vpop.f32.mrf.mxu0
        %v1655 = vadd.f32 %v1606, %v1654
        %v1656 = vpop.f32.mrf.mxu0
        %v1657 = vadd.f32 %v1608, %v1656
        %1658 = vmatmul.bf16.gmra.mxu0 %v862
        %v1659 = vpop.f32.mrf.mxu0
        %v1660 = vadd.f32 %v1611, %v1659
        %v1661 = vpop.f32.mrf.mxu0
        %v1662 = vadd.f32 %v1613, %v1661
        %1663 = vmatmul.bf16.gmra.mxu0 %v864
        %v1664 = vpop.f32.mrf.mxu0
        %v1665 = vadd.f32 %v1616, %v1664
        %v1666 = vpop.f32.mrf.mxu0
        %v1667 = vadd.f32 %v1618, %v1666
        %1668 = vmatmul.bf16.gmra.mxu0 %v866
        %v1669 = vpop.f32.mrf.mxu0
        %v1670 = vadd.f32 %v1621, %v1669
        %v1671 = vpop.f32.mrf.mxu0
        %v1672 = vadd.f32 %v1623, %v1671
        %1673 = vdwg.mxu0
        %1674 = vmatpush.bf16.msra.mxu0 %v1477
        %1675 = vmatpush.bf16.msra.mxu0 %v1473
        %1676 = vmatpush.bf16.msra.mxu0 %v1469
        %1677 = vmatpush.bf16.msra.mxu0 %v1465
        %1678 = vmatpush.bf16.msra.mxu0 %v1461
        %1679 = vmatpush.bf16.msra.mxu0 %v1457
        %1680 = vmatpush.bf16.msra.mxu0 %v1453
        %1681 = vmatpush.bf16.msra.mxu0 %v1449
        %1682 = vmatmul.bf16.gmra.mxu0 %v851
        %v1683 = vpop.f32.mrf.mxu0
        %v1684 = vadd.f32 %v1249, %v1683
        %v1685 = vpop.f32.mrf.mxu0
        %v1686 = vadd.f32 %v1249, %v1685
        %1687 = vmatmul.bf16.gmra.mxu0 %v853
        %v1688 = vpop.f32.mrf.mxu0
        %v1689 = vadd.f32 %v1249, %v1688
        %v1690 = vpop.f32.mrf.mxu0
        %v1691 = vadd.f32 %v1249, %v1690
        %1692 = vmatmul.bf16.gmra.mxu0 %v855
        %v1693 = vpop.f32.mrf.mxu0
        %v1694 = vadd.f32 %v1249, %v1693
        %v1695 = vpop.f32.mrf.mxu0
        %v1696 = vadd.f32 %v1249, %v1695
        %1697 = vmatmul.bf16.gmra.mxu0 %v857
        %v1698 = vpop.f32.mrf.mxu0
        %v1699 = vadd.f32 %v1249, %v1698
        %v1700 = vpop.f32.mrf.mxu0
        %v1701 = vadd.f32 %v1249, %v1700
        %1702 = vmatmul.bf16.gmra.mxu0 %v859
        %v1703 = vpop.f32.mrf.mxu0
        %v1704 = vadd.f32 %v1249, %v1703
        %v1705 = vpop.f32.mrf.mxu0
        %v1706 = vadd.f32 %v1249, %v1705
        %1707 = vmatmul.bf16.gmra.mxu0 %v861
        %v1708 = vpop.f32.mrf.mxu0
        %v1709 = vadd.f32 %v1249, %v1708
        %v1710 = vpop.f32.mrf.mxu0
        %v1711 = vadd.f32 %v1249, %v1710
        %1712 = vmatmul.bf16.gmra.mxu0 %v863
        %v1713 = vpop.f32.mrf.mxu0
        %v1714 = vadd.f32 %v1249, %v1713
        %v1715 = vpop.f32.mrf.mxu0
        %v1716 = vadd.f32 %v1249, %v1715
        %1717 = vmatmul.bf16.gmra.mxu0 %v865
        %v1718 = vpop.f32.mrf.mxu0
        %v1719 = vadd.f32 %v1249, %v1718
        %v1720 = vpop.f32.mrf.mxu0
        %v1721 = vadd.f32 %v1249, %v1720
        %1722 = vdwg.mxu0
        %1723 = vmatpush.bf16.msra.mxu0 %v1509
        %1724 = vmatpush.bf16.msra.mxu0 %v1505
        %1725 = vmatpush.bf16.msra.mxu0 %v1501
        %1726 = vmatpush.bf16.msra.mxu0 %v1497
        %1727 = vmatpush.bf16.msra.mxu0 %v1493
        %1728 = vmatpush.bf16.msra.mxu0 %v1489
        %1729 = vmatpush.bf16.msra.mxu0 %v1485
        %1730 = vmatpush.bf16.msra.mxu0 %v1481
        %1731 = vmatmul.bf16.gmra.mxu0 %v852
        %v1732 = vpop.f32.mrf.mxu0
        %v1733 = vadd.f32 %v1684, %v1732
        %v1734 = vpop.f32.mrf.mxu0
        %v1735 = vadd.f32 %v1686, %v1734
        %1736 = vmatmul.bf16.gmra.mxu0 %v854
        %v1737 = vpop.f32.mrf.mxu0
        %v1738 = vadd.f32 %v1689, %v1737
        %v1739 = vpop.f32.mrf.mxu0
        %v1740 = vadd.f32 %v1691, %v1739
        %1741 = vmatmul.bf16.gmra.mxu0 %v856
        %v1742 = vpop.f32.mrf.mxu0
        %v1743 = vadd.f32 %v1694, %v1742
        %v1744 = vpop.f32.mrf.mxu0
        %v1745 = vadd.f32 %v1696, %v1744
        %1746 = vmatmul.bf16.gmra.mxu0 %v858
        %v1747 = vpop.f32.mrf.mxu0
        %v1748 = vadd.f32 %v1699, %v1747
        %v1749 = vpop.f32.mrf.mxu0
        %v1750 = vadd.f32 %v1701, %v1749
        %1751 = vmatmul.bf16.gmra.mxu0 %v860
        %v1752 = vpop.f32.mrf.mxu0
        %v1753 = vadd.f32 %v1704, %v1752
        %v1754 = vpop.f32.mrf.mxu0
        %v1755 = vadd.f32 %v1706, %v1754
        %1756 = vmatmul.bf16.gmra.mxu0 %v862
        %v1757 = vpop.f32.mrf.mxu0
        %v1758 = vadd.f32 %v1709, %v1757
        %v1759 = vpop.f32.mrf.mxu0
        %v1760 = vadd.f32 %v1711, %v1759
        %1761 = vmatmul.bf16.gmra.mxu0 %v864
        %v1762 = vpop.f32.mrf.mxu0
        %v1763 = vadd.f32 %v1714, %v1762
        %v1764 = vpop.f32.mrf.mxu0
        %v1765 = vadd.f32 %v1716, %v1764
        %1766 = vmatmul.bf16.gmra.mxu0 %v866
        %v1767 = vpop.f32.mrf.mxu0
        %v1768 = vadd.f32 %v1719, %v1767
        %v1769 = vpop.f32.mrf.mxu0
        %v1770 = vadd.f32 %v1721, %v1769
        %1771 = vdwg.mxu0
        %1772 = vmatpush.bf16.msra.mxu0 %v1478
        %1773 = vmatpush.bf16.msra.mxu0 %v1474
        %1774 = vmatpush.bf16.msra.mxu0 %v1470
        %1775 = vmatpush.bf16.msra.mxu0 %v1466
        %1776 = vmatpush.bf16.msra.mxu0 %v1462
        %1777 = vmatpush.bf16.msra.mxu0 %v1458
        %1778 = vmatpush.bf16.msra.mxu0 %v1454
        %1779 = vmatpush.bf16.msra.mxu0 %v1450
        %1780 = vmatmul.bf16.gmra.mxu0 %v851
        %v1781 = vpop.f32.mrf.mxu0
        %v1782 = vadd.f32 %v1250, %v1781
        %v1783 = vpop.f32.mrf.mxu0
        %v1784 = vadd.f32 %v1250, %v1783
        %1785 = vmatmul.bf16.gmra.mxu0 %v853
        %v1786 = vpop.f32.mrf.mxu0
        %v1787 = vadd.f32 %v1250, %v1786
        %v1788 = vpop.f32.mrf.mxu0
        %v1789 = vadd.f32 %v1250, %v1788
        %1790 = vmatmul.bf16.gmra.mxu0 %v855
        %v1791 = vpop.f32.mrf.mxu0
        %v1792 = vadd.f32 %v1250, %v1791
        %v1793 = vpop.f32.mrf.mxu0
        %v1794 = vadd.f32 %v1250, %v1793
        %1795 = vmatmul.bf16.gmra.mxu0 %v857
        %v1796 = vpop.f32.mrf.mxu0
        %v1797 = vadd.f32 %v1250, %v1796
        %v1798 = vpop.f32.mrf.mxu0
        %v1799 = vadd.f32 %v1250, %v1798
        %1800 = vmatmul.bf16.gmra.mxu0 %v859
        %v1801 = vpop.f32.mrf.mxu0
        %v1802 = vadd.f32 %v1250, %v1801
        %v1803 = vpop.f32.mrf.mxu0
        %v1804 = vadd.f32 %v1250, %v1803
        %1805 = vmatmul.bf16.gmra.mxu0 %v861
        %v1806 = vpop.f32.mrf.mxu0
        %v1807 = vadd.f32 %v1250, %v1806
        %v1808 = vpop.f32.mrf.mxu0
        %v1809 = vadd.f32 %v1250, %v1808
        %1810 = vmatmul.bf16.gmra.mxu0 %v863
        %v1811 = vpop.f32.mrf.mxu0
        %v1812 = vadd.f32 %v1250, %v1811
        %v1813 = vpop.f32.mrf.mxu0
        %v1814 = vadd.f32 %v1250, %v1813
        %1815 = vmatmul.bf16.gmra.mxu0 %v865
        %v1816 = vpop.f32.mrf.mxu0
        %v1817 = vadd.f32 %v1250, %v1816
        %v1818 = vpop.f32.mrf.mxu0
        %v1819 = vadd.f32 %v1250, %v1818
        %1820 = vdwg.mxu0
        %1821 = vmatpush.bf16.msra.mxu0 %v1510
        %1822 = vmatpush.bf16.msra.mxu0 %v1506
        %1823 = vmatpush.bf16.msra.mxu0 %v1502
        %1824 = vmatpush.bf16.msra.mxu0 %v1498
        %1825 = vmatpush.bf16.msra.mxu0 %v1494
        %1826 = vmatpush.bf16.msra.mxu0 %v1490
        %1827 = vmatpush.bf16.msra.mxu0 %v1486
        %1828 = vmatpush.bf16.msra.mxu0 %v1482
        %1829 = vmatmul.bf16.gmra.mxu0 %v852
        %v1830 = vpop.f32.mrf.mxu0
        %v1831 = vadd.f32 %v1782, %v1830
        %v1832 = vpop.f32.mrf.mxu0
        %v1833 = vadd.f32 %v1784, %v1832
        %1834 = vmatmul.bf16.gmra.mxu0 %v854
        %v1835 = vpop.f32.mrf.mxu0
        %v1836 = vadd.f32 %v1787, %v1835
        %v1837 = vpop.f32.mrf.mxu0
        %v1838 = vadd.f32 %v1789, %v1837
        %1839 = vmatmul.bf16.gmra.mxu0 %v856
        %v1840 = vpop.f32.mrf.mxu0
        %v1841 = vadd.f32 %v1792, %v1840
        %v1842 = vpop.f32.mrf.mxu0
        %v1843 = vadd.f32 %v1794, %v1842
        %1844 = vmatmul.bf16.gmra.mxu0 %v858
        %v1845 = vpop.f32.mrf.mxu0
        %v1846 = vadd.f32 %v1797, %v1845
        %v1847 = vpop.f32.mrf.mxu0
        %v1848 = vadd.f32 %v1799, %v1847
        %1849 = vmatmul.bf16.gmra.mxu0 %v860
        %v1850 = vpop.f32.mrf.mxu0
        %v1851 = vadd.f32 %v1802, %v1850
        %v1852 = vpop.f32.mrf.mxu0
        %v1853 = vadd.f32 %v1804, %v1852
        %1854 = vmatmul.bf16.gmra.mxu0 %v862
        %v1855 = vpop.f32.mrf.mxu0
        %v1856 = vadd.f32 %v1807, %v1855
        %v1857 = vpop.f32.mrf.mxu0
        %v1858 = vadd.f32 %v1809, %v1857
        %1859 = vmatmul.bf16.gmra.mxu0 %v864
        %v1860 = vpop.f32.mrf.mxu0
        %v1861 = vadd.f32 %v1812, %v1860
        %v1862 = vpop.f32.mrf.mxu0
        %v1863 = vadd.f32 %v1814, %v1862
        %1864 = vmatmul.bf16.gmra.mxu0 %v866
        %v1865 = vpop.f32.mrf.mxu0
        %v1866 = vadd.f32 %v1817, %v1865
        %v1867 = vpop.f32.mrf.mxu0
        %v1868 = vadd.f32 %v1819, %v1867
        %1869 = vdwg.mxu0
        %1870 = vmatpush.bf16.msra.mxu0 %v1479
        %1871 = vmatpush.bf16.msra.mxu0 %v1475
        %1872 = vmatpush.bf16.msra.mxu0 %v1471
        %1873 = vmatpush.bf16.msra.mxu0 %v1467
        %1874 = vmatpush.bf16.msra.mxu0 %v1463
        %1875 = vmatpush.bf16.msra.mxu0 %v1459
        %1876 = vmatpush.bf16.msra.mxu0 %v1455
        %1877 = vmatpush.bf16.msra.mxu0 %v1451
        %1878 = vmatmul.bf16.gmra.mxu0 %v851
        %v1879 = vpop.f32.mrf.mxu0
        %v1880 = vadd.f32 %v1251, %v1879
        %v1881 = vpop.f32.mrf.mxu0
        %v1882 = vadd.f32 %v1251, %v1881
        %1883 = vmatmul.bf16.gmra.mxu0 %v853
        %v1884 = vpop.f32.mrf.mxu0
        %v1885 = vadd.f32 %v1251, %v1884
        %v1886 = vpop.f32.mrf.mxu0
        %v1887 = vadd.f32 %v1251, %v1886
        %1888 = vmatmul.bf16.gmra.mxu0 %v855
        %v1889 = vpop.f32.mrf.mxu0
        %v1890 = vadd.f32 %v1251, %v1889
        %v1891 = vpop.f32.mrf.mxu0
        %v1892 = vadd.f32 %v1251, %v1891
        %1893 = vmatmul.bf16.gmra.mxu0 %v857
        %v1894 = vpop.f32.mrf.mxu0
        %v1895 = vadd.f32 %v1251, %v1894
        %v1896 = vpop.f32.mrf.mxu0
        %v1897 = vadd.f32 %v1251, %v1896
        %1898 = vmatmul.bf16.gmra.mxu0 %v859
        %v1899 = vpop.f32.mrf.mxu0
        %v1900 = vadd.f32 %v1251, %v1899
        %v1901 = vpop.f32.mrf.mxu0
        %v1902 = vadd.f32 %v1251, %v1901
        %1903 = vmatmul.bf16.gmra.mxu0 %v861
        %v1904 = vpop.f32.mrf.mxu0
        %v1905 = vadd.f32 %v1251, %v1904
        %v1906 = vpop.f32.mrf.mxu0
        %v1907 = vadd.f32 %v1251, %v1906
        %1908 = vmatmul.bf16.gmra.mxu0 %v863
        %v1909 = vpop.f32.mrf.mxu0
        %v1910 = vadd.f32 %v1251, %v1909
        %v1911 = vpop.f32.mrf.mxu0
        %v1912 = vadd.f32 %v1251, %v1911
        %1913 = vmatmul.bf16.gmra.mxu0 %v865
        %v1914 = vpop.f32.mrf.mxu0
        %v1915 = vadd.f32 %v1251, %v1914
        %v1916 = vpop.f32.mrf.mxu0
        %v1917 = vadd.f32 %v1251, %v1916
        %1918 = vdwg.mxu0
        %1919 = vmatpush.bf16.msra.mxu0 %v1511
        %1920 = vmatpush.bf16.msra.mxu0 %v1507
        %1921 = vmatpush.bf16.msra.mxu0 %v1503
        %1922 = vmatpush.bf16.msra.mxu0 %v1499
        %1923 = vmatpush.bf16.msra.mxu0 %v1495
        %1924 = vmatpush.bf16.msra.mxu0 %v1491
        %1925 = vmatpush.bf16.msra.mxu0 %v1487
        %1926 = vmatpush.bf16.msra.mxu0 %v1483
        %1927 = vmatmul.bf16.gmra.mxu0 %v852
        %v1928 = vpop.f32.mrf.mxu0
        %v1929 = vadd.f32 %v1880, %v1928
        %v1930 = vpop.f32.mrf.mxu0
        %v1931 = vadd.f32 %v1882, %v1930
        %1932 = vmatmul.bf16.gmra.mxu0 %v854
        %v1933 = vpop.f32.mrf.mxu0
        %v1934 = vadd.f32 %v1885, %v1933
        %v1935 = vpop.f32.mrf.mxu0
        %v1936 = vadd.f32 %v1887, %v1935
        %1937 = vmatmul.bf16.gmra.mxu0 %v856
        %v1938 = vpop.f32.mrf.mxu0
        %v1939 = vadd.f32 %v1890, %v1938
        %v1940 = vpop.f32.mrf.mxu0
        %v1941 = vadd.f32 %v1892, %v1940
        %1942 = vmatmul.bf16.gmra.mxu0 %v858
        %v1943 = vpop.f32.mrf.mxu0
        %v1944 = vadd.f32 %v1895, %v1943
        %v1945 = vpop.f32.mrf.mxu0
        %v1946 = vadd.f32 %v1897, %v1945
        %1947 = vmatmul.bf16.gmra.mxu0 %v860
        %v1948 = vpop.f32.mrf.mxu0
        %v1949 = vadd.f32 %v1900, %v1948
        %v1950 = vpop.f32.mrf.mxu0
        %v1951 = vadd.f32 %v1902, %v1950
        %1952 = vmatmul.bf16.gmra.mxu0 %v862
        %v1953 = vpop.f32.mrf.mxu0
        %v1954 = vadd.f32 %v1905, %v1953
        %v1955 = vpop.f32.mrf.mxu0
        %v1956 = vadd.f32 %v1907, %v1955
        %1957 = vmatmul.bf16.gmra.mxu0 %v864
        %v1958 = vpop.f32.mrf.mxu0
        %v1959 = vadd.f32 %v1910, %v1958
        %v1960 = vpop.f32.mrf.mxu0
        %v1961 = vadd.f32 %v1912, %v1960
        %1962 = vmatmul.bf16.gmra.mxu0 %v866
        %v1963 = vpop.f32.mrf.mxu0
        %v1964 = vadd.f32 %v1915, %v1963
        %v1965 = vpop.f32.mrf.mxu0
        %v1966 = vadd.f32 %v1917, %v1965
        %1967 = vdwg.mxu0
        %v1968 = vld [vmem:[#allocation13] sm:$0xff]
        %v1969 = vld [vmem:[#allocation13 + $0x8] sm:$0xff]
        %v1970 = vld [vmem:[#allocation13 + $0x10] sm:$0xff]
        %v1971 = vld [vmem:[#allocation13 + $0x18] sm:$0xff]
        %v1972 = vld [vmem:[#allocation13 + $0x20] sm:$0xff]
        %v1973 = vld [vmem:[#allocation13 + $0x28] sm:$0xff]
        %v1974 = vld [vmem:[#allocation13 + $0x30] sm:$0xff]
        %v1975 = vld [vmem:[#allocation13 + $0x38] sm:$0xff]
        %v1976 = vld [vmem:[#allocation13 + $0x40] sm:$0xff]
        %v1977 = vld [vmem:[#allocation13 + $0x48] sm:$0xff]
        %v1978 = vld [vmem:[#allocation13 + $0x50] sm:$0xff]
        %v1979 = vld [vmem:[#allocation13 + $0x58] sm:$0xff]
        %v1980 = vld [vmem:[#allocation13 + $0x60] sm:$0xff]
        %v1981 = vld [vmem:[#allocation13 + $0x68] sm:$0xff]
        %v1982 = vld [vmem:[#allocation13 + $0x70] sm:$0xff]
        %v1983 = vld [vmem:[#allocation13 + $0x78] sm:$0xff]
        %v1984 = vld [vmem:[#allocation13 + $0x80] sm:$0xff]
        %v1985 = vld [vmem:[#allocation13 + $0x88] sm:$0xff]
        %v1986 = vld [vmem:[#allocation13 + $0x90] sm:$0xff]
        %v1987 = vld [vmem:[#allocation13 + $0x98] sm:$0xff]
        %v1988 = vld [vmem:[#allocation13 + $0xa0] sm:$0xff]
        %v1989 = vld [vmem:[#allocation13 + $0xa8] sm:$0xff]
        %v1990 = vld [vmem:[#allocation13 + $0xb0] sm:$0xff]
        %v1991 = vld [vmem:[#allocation13 + $0xb8] sm:$0xff]
        %v1992 = vld [vmem:[#allocation13 + $0xc0] sm:$0xff]
        %v1993 = vld [vmem:[#allocation13 + $0xc8] sm:$0xff]
        %v1994 = vld [vmem:[#allocation13 + $0xd0] sm:$0xff]
        %v1995 = vld [vmem:[#allocation13 + $0xd8] sm:$0xff]
        %v1996 = vld [vmem:[#allocation13 + $0xe0] sm:$0xff]
        %v1997 = vld [vmem:[#allocation13 + $0xe8] sm:$0xff]
        %v1998 = vld [vmem:[#allocation13 + $0xf0] sm:$0xff]
        %v1999 = vld [vmem:[#allocation13 + $0xf8] sm:$0xff]
        %v2000 = vld [vmem:[%s9] sm:$0x3]
        %v2001 = vmul.f32 %v1105, 0.17677669
        %v2002 = vmul.f32 %v1163, 0.17677669
        %v2003 = vmul.f32 %v1107, 0.17677669
        %v2004 = vmul.f32 %v1165, 0.17677669
        %v2005 = vmul.f32 %v1110, 0.17677669
        %v2006 = vmul.f32 %v1168, 0.17677669
        %v2007 = vmul.f32 %v1112, 0.17677669
        %v2008 = vmul.f32 %v1170, 0.17677669
        %v2009 = vmul.f32 %v1115, 0.17677669
        %v2010 = vmul.f32 %v1173, 0.17677669
        %v2011 = vmul.f32 %v1117, 0.17677669
        %v2012 = vmul.f32 %v1175, 0.17677669
        %v2013 = vmul.f32 %v1120, 0.17677669
        %v2014 = vmul.f32 %v1178, 0.17677669
        %v2015 = vmul.f32 %v1122, 0.17677669
        %v2016 = vmul.f32 %v1180, 0.17677669
        %v2017 = vpack.c.bf16 %v2002, %v2001
        %v2018 = vpack.c.bf16 %v2004, %v2003
        %v2019 = vpack.c.bf16 %v2006, %v2005
        %v2020 = vpack.c.bf16 %v2008, %v2007
        %v2021 = vpack.c.bf16 %v2010, %v2009
        %v2022 = vpack.c.bf16 %v2012, %v2011
        %v2023 = vpack.c.bf16 %v2014, %v2013
        %v2024 = vpack.c.bf16 %v2016, %v2015
        %v2025 = vpack.c.bf16 %v1733, %v1635
        %v2026 = vpack.c.bf16 %v1735, %v1637
        %v2027 = vpack.c.bf16 %v1738, %v1640
        %v2028 = vpack.c.bf16 %v1740, %v1642
        %v2029 = vpack.c.bf16 %v1743, %v1645
        %v2030 = vpack.c.bf16 %v1745, %v1647
        %v2031 = vpack.c.bf16 %v1748, %v1650
        %v2032 = vpack.c.bf16 %v1750, %v1652
        %v2033 = vpack.c.bf16 %v1753, %v1655
        %v2034 = vpack.c.bf16 %v1755, %v1657
        %v2035 = vpack.c.bf16 %v1758, %v1660
        %v2036 = vpack.c.bf16 %v1760, %v1662
        %v2037 = vpack.c.bf16 %v1763, %v1665
        %v2038 = vpack.c.bf16 %v1765, %v1667
        %v2039 = vpack.c.bf16 %v1768, %v1670
        %v2040 = vpack.c.bf16 %v1770, %v1672
        %v2041 = vpack.c.bf16 %v1929, %v1831
        %v2042 = vpack.c.bf16 %v1931, %v1833
        %v2043 = vpack.c.bf16 %v1934, %v1836
        %v2044 = vpack.c.bf16 %v1936, %v1838
        %v2045 = vpack.c.bf16 %v1939, %v1841
        %v2046 = vpack.c.bf16 %v1941, %v1843
        %v2047 = vpack.c.bf16 %v1944, %v1846
        %v2048 = vpack.c.bf16 %v1946, %v1848
        %v2049 = vpack.c.bf16 %v1949, %v1851
        %v2050 = vpack.c.bf16 %v1951, %v1853
        %v2051 = vpack.c.bf16 %v1954, %v1856
        %v2052 = vpack.c.bf16 %v1956, %v1858
        %v2053 = vpack.c.bf16 %v1959, %v1861
        %v2054 = vpack.c.bf16 %v1961, %v1863
        %v2055 = vpack.c.bf16 %v1964, %v1866
        %v2056 = vpack.c.bf16 %v1966, %v1868
        %v2058 = vperm.slane %v867, 0
        %v2068 = vunpack.c.l.b16 %v2017
        %v2069 = vunpack.c.l.b16 %v2018
        %v2070 = vunpack.c.l.b16 %v2019
        %v2071 = vunpack.c.l.b16 %v2020
        %v2072 = vunpack.c.l.b16 %v2021
        %v2073 = vunpack.c.l.b16 %v2022
        %v2074 = vunpack.c.l.b16 %v2023
        %v2075 = vunpack.c.l.b16 %v2024
        %v2076 = vpack.c.b16 %v2069, %v2068
        %v2077 = vpack.c.b16 %v2071, %v2070
        %v2078 = vpack.c.b16 %v2073, %v2072
        %v2079 = vpack.c.b16 %v2075, %v2074
        %v2096 = vunpack.c.l.b16 %v2025
        %v2097 = vunpack.c.l.b16 %v2026
        %v2098 = vunpack.c.l.b16 %v2027
        %v2099 = vunpack.c.l.b16 %v2028
        %v2100 = vunpack.c.l.b16 %v2029
        %v2101 = vunpack.c.l.b16 %v2030
        %v2102 = vunpack.c.l.b16 %v2031
        %v2103 = vunpack.c.l.b16 %v2032
        %v2104 = vunpack.c.l.b16 %v2033
        %v2105 = vunpack.c.l.b16 %v2034
        %v2106 = vunpack.c.l.b16 %v2035
        %v2107 = vunpack.c.l.b16 %v2036
        %v2108 = vunpack.c.l.b16 %v2037
        %v2109 = vunpack.c.l.b16 %v2038
        %v2110 = vunpack.c.l.b16 %v2039
        %v2111 = vunpack.c.l.b16 %v2040
        %v2112 = vpack.c.b16 %v2097, %v2096
        %v2113 = vpack.c.b16 %v2099, %v2098
        %v2114 = vpack.c.b16 %v2101, %v2100
        %v2115 = vpack.c.b16 %v2103, %v2102
        %v2116 = vpack.c.b16 %v2105, %v2104
        %v2117 = vpack.c.b16 %v2107, %v2106
        %v2118 = vpack.c.b16 %v2109, %v2108
        %v2119 = vpack.c.b16 %v2111, %v2110
        %vm2120 = vcmask 261120
        %v2122 = vsel %vm2120, %v2076, 0
        %v2125 = vsel %vm2120, %v2077, 0
        %v2128 = vsel %vm2120, %v2078, 0
        %v2131 = vsel %vm2120, %v2079, 0
        %v2134 = vsel %vm2120, %v2112, 0
        %v2137 = vsel %vm2120, %v2113, 0
        %v2140 = vsel %vm2120, %v2114, 0
        %v2143 = vsel %vm2120, %v2115, 0
        %v2146 = vsel %vm2120, %v2116, 0
        %v2149 = vsel %vm2120, %v2117, 0
        %v2152 = vsel %vm2120, %v2118, 0
        %v2155 = vsel %vm2120, %v2119, 0
        %2157 = vmatpush.bf16.xpose.msra.mxu0 %v2155
        %2158 = vmatpush.bf16.xpose.msra.mxu0 %v2152
        %2159 = vmatpush.bf16.xpose.msra.mxu0 %v2149
        %2160 = vmatpush.bf16.xpose.msra.mxu0 %v2146
        %2161 = vmatpush.bf16.xpose.msra.mxu0 %v2143
        %2162 = vmatpush.bf16.xpose.msra.mxu0 %v2140
        %2163 = vmatpush.bf16.xpose.msra.mxu0 %v2137
        %2164 = vmatpush.bf16.xpose.msra.mxu0 %v2134
        %2165 = vmatmul.bf16.gmra.mxu0 %v2122
        %v2166 = vpop.f32.mrf.mxu0
        %v2167 = vadd.f32 %v2058, %v2166
        %v2168 = vpop.f32.mrf.mxu0
        %v2169 = vadd.f32 %v2058, %v2168
        %2170 = vmatmul.bf16.gmra.mxu0 %v2125
        %v2171 = vpop.f32.mrf.mxu0
        %v2172 = vadd.f32 %v2058, %v2171
        %v2173 = vpop.f32.mrf.mxu0
        %v2174 = vadd.f32 %v2058, %v2173
        %2175 = vmatmul.bf16.gmra.mxu0 %v2128
        %v2176 = vpop.f32.mrf.mxu0
        %v2177 = vadd.f32 %v2058, %v2176
        %v2178 = vpop.f32.mrf.mxu0
        %v2179 = vadd.f32 %v2058, %v2178
        %2180 = vmatmul.bf16.gmra.mxu0 %v2131
        %v2181 = vpop.f32.mrf.mxu0
        %v2182 = vadd.f32 %v2058, %v2181
        %v2183 = vpop.f32.mrf.mxu0
        %v2184 = vadd.f32 %v2058, %v2183
        %2185 = vdwg.mxu0
        %2186 = vmax.xlane.f32.xlu0 %v2167
        %v2187 = vpop.xlane.xlu0 %2186
        %2188 = vmax.xlane.f32.xlu0 %v2169
        %v2189 = vpop.xlane.xlu0 %2188
        %2190 = vmax.xlane.f32.xlu0 %v2172
        %v2191 = vpop.xlane.xlu0 %2190
        %2192 = vmax.xlane.f32.xlu0 %v2174
        %v2193 = vpop.xlane.xlu0 %2192
        %2194 = vmax.xlane.f32.xlu0 %v2177
        %v2195 = vpop.xlane.xlu0 %2194
        %2196 = vmax.xlane.f32.xlu0 %v2179
        %v2197 = vpop.xlane.xlu0 %2196
        %2198 = vmax.xlane.f32.xlu0 %v2182
        %v2199 = vpop.xlane.xlu0 %2198
        %2200 = vmax.xlane.f32.xlu0 %v2184
        %v2201 = vpop.xlane.xlu0 %2200
        %v2202 = vsub.f32 %v2167, %v2187
        %v2203 = vsub.f32 %v2169, %v2189
        %v2204 = vsub.f32 %v2172, %v2191
        %v2205 = vsub.f32 %v2174, %v2193
        %v2206 = vsub.f32 %v2177, %v2195
        %v2207 = vsub.f32 %v2179, %v2197
        %v2208 = vsub.f32 %v2182, %v2199
        %v2209 = vsub.f32 %v2184, %v2201
        %v2210 = vmul.f32 %v2202, 1.442695
        %v2211 = vpow.pop %v2210
        %v2212 = vmul.f32 %v2203, 1.442695
        %v2213 = vpow.pop %v2212
        %v2214 = vmul.f32 %v2204, 1.442695
        %v2215 = vpow.pop %v2214
        %v2216 = vmul.f32 %v2205, 1.442695
        %v2217 = vpow.pop %v2216
        %v2218 = vmul.f32 %v2206, 1.442695
        %v2219 = vpow.pop %v2218
        %v2220 = vmul.f32 %v2207, 1.442695
        %v2221 = vpow.pop %v2220
        %v2222 = vmul.f32 %v2208, 1.442695
        %v2223 = vpow.pop %v2222
        %v2224 = vmul.f32 %v2209, 1.442695
        %v2225 = vpow.pop %v2224
        %2226 = vadd.xlane.f32.xlu0 %v2211
        %v2227 = vpop.xlane.xlu0 %2226
        %2228 = vadd.xlane.f32.xlu0 %v2213
        %v2229 = vpop.xlane.xlu0 %2228
        %2230 = vadd.xlane.f32.xlu0 %v2215
        %v2231 = vpop.xlane.xlu0 %2230
        %2232 = vadd.xlane.f32.xlu0 %v2217
        %v2233 = vpop.xlane.xlu0 %2232
        %2234 = vadd.xlane.f32.xlu0 %v2219
        %v2235 = vpop.xlane.xlu0 %2234
        %2236 = vadd.xlane.f32.xlu0 %v2221
        %v2237 = vpop.xlane.xlu0 %2236
        %2238 = vadd.xlane.f32.xlu0 %v2223
        %v2239 = vpop.xlane.xlu0 %2238
        %2240 = vadd.xlane.f32.xlu0 %v2225
        %v2241 = vpop.xlane.xlu0 %2240
        %v2242 = vrcp.pop %v2227
        %v2243 = vrcp.pop %v2229
        %v2244 = vrcp.pop %v2231
        %v2245 = vrcp.pop %v2233
        %v2246 = vrcp.pop %v2235
        %v2247 = vrcp.pop %v2237
        %v2248 = vrcp.pop %v2239
        %v2249 = vrcp.pop %v2241
        %v2250 = vmul.f32 %v2211, %v2242
        %v2251 = vmul.f32 %v2213, %v2243
        %v2252 = vmul.f32 %v2215, %v2244
        %v2253 = vmul.f32 %v2217, %v2245
        %v2254 = vmul.f32 %v2219, %v2246
        %v2255 = vmul.f32 %v2221, %v2247
        %v2256 = vmul.f32 %v2223, %v2248
        %v2257 = vmul.f32 %v2225, %v2249
        %v2258 = vpack.c.bf16 %v2251, %v2250
        %v2259 = vpack.c.bf16 %v2253, %v2252
        %v2260 = vpack.c.bf16 %v2255, %v2254
        %v2261 = vpack.c.bf16 %v2257, %v2256
        %v2278 = vunpack.c.l.b16 %v2041
        %v2279 = vunpack.c.l.b16 %v2042
        %v2280 = vunpack.c.l.b16 %v2043
        %v2281 = vunpack.c.l.b16 %v2044
        %v2282 = vunpack.c.l.b16 %v2045
        %v2283 = vunpack.c.l.b16 %v2046
        %v2284 = vunpack.c.l.b16 %v2047
        %v2285 = vunpack.c.l.b16 %v2048
        %v2286 = vunpack.c.l.b16 %v2049
        %v2287 = vunpack.c.l.b16 %v2050
        %v2288 = vunpack.c.l.b16 %v2051
        %v2289 = vunpack.c.l.b16 %v2052
        %v2290 = vunpack.c.l.b16 %v2053
        %v2291 = vunpack.c.l.b16 %v2054
        %v2292 = vunpack.c.l.b16 %v2055
        %v2293 = vunpack.c.l.b16 %v2056
        %v2294 = vpack.c.b16 %v2279, %v2278
        %v2295 = vpack.c.b16 %v2281, %v2280
        %v2296 = vpack.c.b16 %v2283, %v2282
        %v2297 = vpack.c.b16 %v2285, %v2284
        %v2298 = vpack.c.b16 %v2287, %v2286
        %v2299 = vpack.c.b16 %v2289, %v2288
        %v2300 = vpack.c.b16 %v2291, %v2290
        %v2301 = vpack.c.b16 %v2293, %v2292
        %2310 = vmatpush.bf16.msra.mxu0 %v2301
        %2311 = vmatpush.bf16.msra.mxu0 %v2300
        %2312 = vmatpush.bf16.msra.mxu0 %v2299
        %2313 = vmatpush.bf16.msra.mxu0 %v2298
        %2314 = vmatpush.bf16.msra.mxu0 %v2297
        %2315 = vmatpush.bf16.msra.mxu0 %v2296
        %2316 = vmatpush.bf16.msra.mxu0 %v2295
        %2317 = vmatpush.bf16.msra.mxu0 %v2294
        %2318 = vmatmul.bf16.gmra.mxu0 %v2258
        %v2319 = vpop.f32.mrf.mxu0
        %v2320 = vadd.f32 0.0, %v2319
        %v2321 = vpop.f32.mrf.mxu0
        %v2322 = vadd.f32 0.0, %v2321
        %2323 = vmatmul.bf16.gmra.mxu0 %v2259
        %v2324 = vpop.f32.mrf.mxu0
        %v2325 = vadd.f32 0.0, %v2324
        %v2326 = vpop.f32.mrf.mxu0
        %v2327 = vadd.f32 0.0, %v2326
        %2328 = vmatmul.bf16.gmra.mxu0 %v2260
        %v2329 = vpop.f32.mrf.mxu0
        %v2330 = vadd.f32 0.0, %v2329
        %v2331 = vpop.f32.mrf.mxu0
        %v2332 = vadd.f32 0.0, %v2331
        %2333 = vmatmul.bf16.gmra.mxu0 %v2261
        %v2334 = vpop.f32.mrf.mxu0
        %v2335 = vadd.f32 0.0, %v2334
        %v2336 = vpop.f32.mrf.mxu0
        %v2337 = vadd.f32 0.0, %v2336
        %2338 = vdwg.mxu0
        %v2339 = vpack.c.bf16 %v2322, %v2320
        %v2340 = vpack.c.bf16 %v2327, %v2325
        %v2341 = vpack.c.bf16 %v2332, %v2330
        %v2342 = vpack.c.bf16 %v2337, %v2335
        %2343 = vrot.lane.b32.xlu0 %v2076, 96
        %v2344 = vpop.permute.xlu0 %2343
        %2345 = vrot.lane.b32.xlu0 %v2077, 96
        %v2346 = vpop.permute.xlu0 %2345
        %2347 = vrot.lane.b32.xlu0 %v2078, 96
        %v2348 = vpop.permute.xlu0 %2347
        %2349 = vrot.lane.b32.xlu0 %v2079, 96
        %v2350 = vpop.permute.xlu0 %2349
        %2351 = vrot.lane.b32.xlu0 %v2112, 96
        %v2352 = vpop.permute.xlu0 %2351
        %2353 = vrot.lane.b32.xlu0 %v2113, 96
        %v2354 = vpop.permute.xlu0 %2353
        %2355 = vrot.lane.b32.xlu0 %v2114, 96
        %v2356 = vpop.permute.xlu0 %2355
        %2357 = vrot.lane.b32.xlu0 %v2115, 96
        %v2358 = vpop.permute.xlu0 %2357
        %2359 = vrot.lane.b32.xlu0 %v2116, 96
        %v2360 = vpop.permute.xlu0 %2359
        %2361 = vrot.lane.b32.xlu0 %v2117, 96
        %v2362 = vpop.permute.xlu0 %2361
        %2363 = vrot.lane.b32.xlu0 %v2118, 96
        %v2364 = vpop.permute.xlu0 %2363
        %2365 = vrot.lane.b32.xlu0 %v2119, 96
        %v2366 = vpop.permute.xlu0 %2365
        %v2368 = vsel %vm2120, %v2344, 0
        %v2371 = vsel %vm2120, %v2346, 0
        %v2374 = vsel %vm2120, %v2348, 0
        %v2377 = vsel %vm2120, %v2350, 0
        %v2380 = vsel %vm2120, %v2352, 0
        %v2383 = vsel %vm2120, %v2354, 0
        %v2386 = vsel %vm2120, %v2356, 0
        %v2389 = vsel %vm2120, %v2358, 0
        %v2392 = vsel %vm2120, %v2360, 0
        %v2395 = vsel %vm2120, %v2362, 0
        %v2398 = vsel %vm2120, %v2364, 0
        %v2401 = vsel %vm2120, %v2366, 0
        %2403 = vmatpush.bf16.xpose.msra.mxu0 %v2401
        %2404 = vmatpush.bf16.xpose.msra.mxu0 %v2398
        %2405 = vmatpush.bf16.xpose.msra.mxu0 %v2395
        %2406 = vmatpush.bf16.xpose.msra.mxu0 %v2392
        %2407 = vmatpush.bf16.xpose.msra.mxu0 %v2389
        %2408 = vmatpush.bf16.xpose.msra.mxu0 %v2386
        %2409 = vmatpush.bf16.xpose.msra.mxu0 %v2383
        %2410 = vmatpush.bf16.xpose.msra.mxu0 %v2380
        %2411 = vmatmul.bf16.gmra.mxu0 %v2368
        %v2412 = vpop.f32.mrf.mxu0
        %v2413 = vadd.f32 %v2058, %v2412
        %v2414 = vpop.f32.mrf.mxu0
        %v2415 = vadd.f32 %v2058, %v2414
        %2416 = vmatmul.bf16.gmra.mxu0 %v2371
        %v2417 = vpop.f32.mrf.mxu0
        %v2418 = vadd.f32 %v2058, %v2417
        %v2419 = vpop.f32.mrf.mxu0
        %v2420 = vadd.f32 %v2058, %v2419
        %2421 = vmatmul.bf16.gmra.mxu0 %v2374
        %v2422 = vpop.f32.mrf.mxu0
        %v2423 = vadd.f32 %v2058, %v2422
        %v2424 = vpop.f32.mrf.mxu0
        %v2425 = vadd.f32 %v2058, %v2424
        %2426 = vmatmul.bf16.gmra.mxu0 %v2377
        %v2427 = vpop.f32.mrf.mxu0
        %v2428 = vadd.f32 %v2058, %v2427
        %v2429 = vpop.f32.mrf.mxu0
        %v2430 = vadd.f32 %v2058, %v2429
        %2431 = vdwg.mxu0
        %2432 = vmax.xlane.f32.xlu0 %v2413
        %v2433 = vpop.xlane.xlu0 %2432
        %2434 = vmax.xlane.f32.xlu0 %v2415
        %v2435 = vpop.xlane.xlu0 %2434
        %2436 = vmax.xlane.f32.xlu0 %v2418
        %v2437 = vpop.xlane.xlu0 %2436
        %2438 = vmax.xlane.f32.xlu0 %v2420
        %v2439 = vpop.xlane.xlu0 %2438
        %2440 = vmax.xlane.f32.xlu0 %v2423
        %v2441 = vpop.xlane.xlu0 %2440
        %2442 = vmax.xlane.f32.xlu0 %v2425
        %v2443 = vpop.xlane.xlu0 %2442
        %2444 = vmax.xlane.f32.xlu0 %v2428
        %v2445 = vpop.xlane.xlu0 %2444
        %2446 = vmax.xlane.f32.xlu0 %v2430
        %v2447 = vpop.xlane.xlu0 %2446
        %v2448 = vsub.f32 %v2413, %v2433
        %v2449 = vsub.f32 %v2415, %v2435
        %v2450 = vsub.f32 %v2418, %v2437
        %v2451 = vsub.f32 %v2420, %v2439
        %v2452 = vsub.f32 %v2423, %v2441
        %v2453 = vsub.f32 %v2425, %v2443
        %v2454 = vsub.f32 %v2428, %v2445
        %v2455 = vsub.f32 %v2430, %v2447
        %v2456 = vmul.f32 %v2448, 1.442695
        %v2457 = vpow.pop %v2456
        %v2458 = vmul.f32 %v2449, 1.442695
        %v2459 = vpow.pop %v2458
        %v2460 = vmul.f32 %v2450, 1.442695
        %v2461 = vpow.pop %v2460
        %v2462 = vmul.f32 %v2451, 1.442695
        %v2463 = vpow.pop %v2462
        %v2464 = vmul.f32 %v2452, 1.442695
        %v2465 = vpow.pop %v2464
        %v2466 = vmul.f32 %v2453, 1.442695
        %v2467 = vpow.pop %v2466
        %v2468 = vmul.f32 %v2454, 1.442695
        %v2469 = vpow.pop %v2468
        %v2470 = vmul.f32 %v2455, 1.442695
        %v2471 = vpow.pop %v2470
        %2472 = vadd.xlane.f32.xlu0 %v2457
        %v2473 = vpop.xlane.xlu0 %2472
        %2474 = vadd.xlane.f32.xlu0 %v2459
        %v2475 = vpop.xlane.xlu0 %2474
        %2476 = vadd.xlane.f32.xlu0 %v2461
        %v2477 = vpop.xlane.xlu0 %2476
        %2478 = vadd.xlane.f32.xlu0 %v2463
        %v2479 = vpop.xlane.xlu0 %2478
        %2480 = vadd.xlane.f32.xlu0 %v2465
        %v2481 = vpop.xlane.xlu0 %2480
        %2482 = vadd.xlane.f32.xlu0 %v2467
        %v2483 = vpop.xlane.xlu0 %2482
        %2484 = vadd.xlane.f32.xlu0 %v2469
        %v2485 = vpop.xlane.xlu0 %2484
        %2486 = vadd.xlane.f32.xlu0 %v2471
        %v2487 = vpop.xlane.xlu0 %2486
        %v2488 = vrcp.pop %v2473
        %v2489 = vrcp.pop %v2475
        %v2490 = vrcp.pop %v2477
        %v2491 = vrcp.pop %v2479
        %v2492 = vrcp.pop %v2481
        %v2493 = vrcp.pop %v2483
        %v2494 = vrcp.pop %v2485
        %v2495 = vrcp.pop %v2487
        %v2496 = vmul.f32 %v2457, %v2488
        %v2497 = vmul.f32 %v2459, %v2489
        %v2498 = vmul.f32 %v2461, %v2490
        %v2499 = vmul.f32 %v2463, %v2491
        %v2500 = vmul.f32 %v2465, %v2492
        %v2501 = vmul.f32 %v2467, %v2493
        %v2502 = vmul.f32 %v2469, %v2494
        %v2503 = vmul.f32 %v2471, %v2495
        %v2504 = vpack.c.bf16 %v2497, %v2496
        %v2505 = vpack.c.bf16 %v2499, %v2498
        %v2506 = vpack.c.bf16 %v2501, %v2500
        %v2507 = vpack.c.bf16 %v2503, %v2502
        %2508 = vrot.lane.b32.xlu0 %v2294, 96
        %v2509 = vpop.permute.xlu0 %2508
        %2510 = vrot.lane.b32.xlu0 %v2295, 96
        %v2511 = vpop.permute.xlu0 %2510
        %2512 = vrot.lane.b32.xlu0 %v2296, 96
        %v2513 = vpop.permute.xlu0 %2512
        %2514 = vrot.lane.b32.xlu0 %v2297, 96
        %v2515 = vpop.permute.xlu0 %2514
        %2516 = vrot.lane.b32.xlu0 %v2298, 96
        %v2517 = vpop.permute.xlu0 %2516
        %2518 = vrot.lane.b32.xlu0 %v2299, 96
        %v2519 = vpop.permute.xlu0 %2518
        %2520 = vrot.lane.b32.xlu0 %v2300, 96
        %v2521 = vpop.permute.xlu0 %2520
        %2522 = vrot.lane.b32.xlu0 %v2301, 96
        %v2523 = vpop.permute.xlu0 %2522
        %2532 = vmatpush.bf16.msra.mxu0 %v2523
        %2533 = vmatpush.bf16.msra.mxu0 %v2521
        %2534 = vmatpush.bf16.msra.mxu0 %v2519
        %2535 = vmatpush.bf16.msra.mxu0 %v2517
        %2536 = vmatpush.bf16.msra.mxu0 %v2515
        %2537 = vmatpush.bf16.msra.mxu0 %v2513
        %2538 = vmatpush.bf16.msra.mxu0 %v2511
        %2539 = vmatpush.bf16.msra.mxu0 %v2509
        %2540 = vmatmul.bf16.gmra.mxu0 %v2504
        %v2541 = vpop.f32.mrf.mxu0
        %v2542 = vadd.f32 0.0, %v2541
        %v2543 = vpop.f32.mrf.mxu0
        %v2544 = vadd.f32 0.0, %v2543
        %2545 = vmatmul.bf16.gmra.mxu0 %v2505
        %v2546 = vpop.f32.mrf.mxu0
        %v2547 = vadd.f32 0.0, %v2546
        %v2548 = vpop.f32.mrf.mxu0
        %v2549 = vadd.f32 0.0, %v2548
        %2550 = vmatmul.bf16.gmra.mxu0 %v2506
        %v2551 = vpop.f32.mrf.mxu0
        %v2552 = vadd.f32 0.0, %v2551
        %v2553 = vpop.f32.mrf.mxu0
        %v2554 = vadd.f32 0.0, %v2553
        %2555 = vmatmul.bf16.gmra.mxu0 %v2507
        %v2556 = vpop.f32.mrf.mxu0
        %v2557 = vadd.f32 0.0, %v2556
        %v2558 = vpop.f32.mrf.mxu0
        %v2559 = vadd.f32 0.0, %v2558
        %2560 = vdwg.mxu0
        %v2561 = vpack.c.bf16 %v2544, %v2542
        %v2562 = vpack.c.bf16 %v2549, %v2547
        %v2563 = vpack.c.bf16 %v2554, %v2552
        %v2564 = vpack.c.bf16 %v2559, %v2557
        %v2569 = vunpack.c.l.b16 %v1972
        %v2570 = vunpack.c.h.b16 %v1972
        %v2571 = vunpack.c.l.b16 %v1973
        %v2572 = vunpack.c.h.b16 %v1973
        %v2573 = vunpack.c.l.b16 %v1974
        %v2574 = vunpack.c.h.b16 %v1974
        %v2575 = vunpack.c.l.b16 %v1975
        %v2576 = vunpack.c.h.b16 %v1975
        %v2577 = vpack.c.b16 %v2571, %v2569
        %v2578 = vpack.c.b16 %v2572, %v2570
        %v2579 = vpack.c.b16 %v2575, %v2573
        %v2580 = vpack.c.b16 %v2576, %v2574
        %v2586 = vsel %vm2120, %v2561, 0
        %v2589 = vsel %vm2120, %v2562, 0
        %v2592 = vsel %vm2120, %v2563, 0
        %v2595 = vsel %vm2120, %v2564, 0
        %2597 = vmatpush.bf16.msra.mxu0 0
        %2598 = vmatpush.bf16.msra.mxu0 0
        %2599 = vmatpush.bf16.msra.mxu0 0
        %2600 = vmatpush.bf16.msra.mxu0 0
        %2601 = vmatpush.bf16.msra.mxu0 0
        %2602 = vmatpush.bf16.msra.mxu0 0
        %2603 = vmatpush.bf16.msra.mxu0 %v2579
        %2604 = vmatpush.bf16.msra.mxu0 %v2577
        %2605 = vmatmul.bf16.gmra.mxu0 %v2586
        %v2606 = vpop.f32.mrf.mxu0
        %v2607 = vadd.f32 0.0, %v2606
        %v2608 = vpop.f32.mrf.mxu0
        %v2609 = vadd.f32 0.0, %v2608
        %2610 = vmatmul.bf16.gmra.mxu0 %v2589
        %v2611 = vpop.f32.mrf.mxu0
        %v2612 = vadd.f32 0.0, %v2611
        %v2613 = vpop.f32.mrf.mxu0
        %v2614 = vadd.f32 0.0, %v2613
        %2615 = vmatmul.bf16.gmra.mxu0 %v2592
        %v2616 = vpop.f32.mrf.mxu0
        %v2617 = vadd.f32 0.0, %v2616
        %v2618 = vpop.f32.mrf.mxu0
        %v2619 = vadd.f32 0.0, %v2618
        %2620 = vmatmul.bf16.gmra.mxu0 %v2595
        %v2621 = vpop.f32.mrf.mxu0
        %v2622 = vadd.f32 0.0, %v2621
        %v2623 = vpop.f32.mrf.mxu0
        %v2624 = vadd.f32 0.0, %v2623
        %2625 = vdwg.mxu0
        %2626 = vmatpush.bf16.msra.mxu0 0
        %2627 = vmatpush.bf16.msra.mxu0 0
        %2628 = vmatpush.bf16.msra.mxu0 0
        %2629 = vmatpush.bf16.msra.mxu0 0
        %2630 = vmatpush.bf16.msra.mxu0 0
        %2631 = vmatpush.bf16.msra.mxu0 0
        %2632 = vmatpush.bf16.msra.mxu0 %v2580
        %2633 = vmatpush.bf16.msra.mxu0 %v2578
        %2634 = vmatmul.bf16.gmra.mxu0 %v2586
        %v2635 = vpop.f32.mrf.mxu0
        %v2636 = vadd.f32 0.0, %v2635
        %v2637 = vpop.f32.mrf.mxu0
        %v2638 = vadd.f32 0.0, %v2637
        %2639 = vmatmul.bf16.gmra.mxu0 %v2589
        %v2640 = vpop.f32.mrf.mxu0
        %v2641 = vadd.f32 0.0, %v2640
        %v2642 = vpop.f32.mrf.mxu0
        %v2643 = vadd.f32 0.0, %v2642
        %2644 = vmatmul.bf16.gmra.mxu0 %v2592
        %v2645 = vpop.f32.mrf.mxu0
        %v2646 = vadd.f32 0.0, %v2645
        %v2647 = vpop.f32.mrf.mxu0
        %v2648 = vadd.f32 0.0, %v2647
        %2649 = vmatmul.bf16.gmra.mxu0 %v2595
        %v2650 = vpop.f32.mrf.mxu0
        %v2651 = vadd.f32 0.0, %v2650
        %v2652 = vpop.f32.mrf.mxu0
        %v2653 = vadd.f32 0.0, %v2652
        %2654 = vdwg.mxu0
        %v2659 = vunpack.c.l.b16 %v1968
        %v2660 = vunpack.c.h.b16 %v1968
        %v2661 = vunpack.c.l.b16 %v1969
        %v2662 = vunpack.c.h.b16 %v1969
        %v2663 = vunpack.c.l.b16 %v1970
        %v2664 = vunpack.c.h.b16 %v1970
        %v2665 = vunpack.c.l.b16 %v1971
        %v2666 = vunpack.c.h.b16 %v1971
        %v2667 = vpack.c.b16 %v2661, %v2659
        %v2668 = vpack.c.b16 %v2662, %v2660
        %v2669 = vpack.c.b16 %v2665, %v2663
        %v2670 = vpack.c.b16 %v2666, %v2664
        %v2676 = vsel %vm2120, %v2339, 0
        %v2679 = vsel %vm2120, %v2340, 0
        %v2682 = vsel %vm2120, %v2341, 0
        %v2685 = vsel %vm2120, %v2342, 0
        %2687 = vmatpush.bf16.msra.mxu0 0
        %2688 = vmatpush.bf16.msra.mxu0 0
        %2689 = vmatpush.bf16.msra.mxu0 0
        %2690 = vmatpush.bf16.msra.mxu0 0
        %2691 = vmatpush.bf16.msra.mxu0 0
        %2692 = vmatpush.bf16.msra.mxu0 0
        %2693 = vmatpush.bf16.msra.mxu0 %v2669
        %2694 = vmatpush.bf16.msra.mxu0 %v2667
        %2695 = vmatmul.bf16.gmra.mxu0 %v2676
        %v2696 = vpop.f32.mrf.mxu0
        %v2697 = vadd.f32 %v2607, %v2696
        %v2698 = vpop.f32.mrf.mxu0
        %v2699 = vadd.f32 %v2609, %v2698
        %2700 = vmatmul.bf16.gmra.mxu0 %v2679
        %v2701 = vpop.f32.mrf.mxu0
        %v2702 = vadd.f32 %v2612, %v2701
        %v2703 = vpop.f32.mrf.mxu0
        %v2704 = vadd.f32 %v2614, %v2703
        %2705 = vmatmul.bf16.gmra.mxu0 %v2682
        %v2706 = vpop.f32.mrf.mxu0
        %v2707 = vadd.f32 %v2617, %v2706
        %v2708 = vpop.f32.mrf.mxu0
        %v2709 = vadd.f32 %v2619, %v2708
        %2710 = vmatmul.bf16.gmra.mxu0 %v2685
        %v2711 = vpop.f32.mrf.mxu0
        %v2712 = vadd.f32 %v2622, %v2711
        %v2713 = vpop.f32.mrf.mxu0
        %v2714 = vadd.f32 %v2624, %v2713
        %2715 = vdwg.mxu0
        %2716 = vmatpush.bf16.msra.mxu0 0
        %2717 = vmatpush.bf16.msra.mxu0 0
        %2718 = vmatpush.bf16.msra.mxu0 0
        %2719 = vmatpush.bf16.msra.mxu0 0
        %2720 = vmatpush.bf16.msra.mxu0 0
        %2721 = vmatpush.bf16.msra.mxu0 0
        %2722 = vmatpush.bf16.msra.mxu0 %v2670
        %2723 = vmatpush.bf16.msra.mxu0 %v2668
        %2724 = vmatmul.bf16.gmra.mxu0 %v2676
        %v2725 = vpop.f32.mrf.mxu0
        %v2726 = vadd.f32 %v2636, %v2725
        %v2727 = vpop.f32.mrf.mxu0
        %v2728 = vadd.f32 %v2638, %v2727
        %2729 = vmatmul.bf16.gmra.mxu0 %v2679
        %v2730 = vpop.f32.mrf.mxu0
        %v2731 = vadd.f32 %v2641, %v2730
        %v2732 = vpop.f32.mrf.mxu0
        %v2733 = vadd.f32 %v2643, %v2732
        %2734 = vmatmul.bf16.gmra.mxu0 %v2682
        %v2735 = vpop.f32.mrf.mxu0
        %v2736 = vadd.f32 %v2646, %v2735
        %v2737 = vpop.f32.mrf.mxu0
        %v2738 = vadd.f32 %v2648, %v2737
        %2739 = vmatmul.bf16.gmra.mxu0 %v2685
        %v2740 = vpop.f32.mrf.mxu0
        %v2741 = vadd.f32 %v2651, %v2740
        %v2742 = vpop.f32.mrf.mxu0
        %v2743 = vadd.f32 %v2653, %v2742
        %2744 = vdwg.mxu0
        %2745 = vrot.lane.b32.xlu0 %v2076, 64
        %v2746 = vpop.permute.xlu0 %2745
        %2747 = vrot.lane.b32.xlu0 %v2077, 64
        %v2748 = vpop.permute.xlu0 %2747
        %2749 = vrot.lane.b32.xlu0 %v2078, 64
        %v2750 = vpop.permute.xlu0 %2749
        %2751 = vrot.lane.b32.xlu0 %v2079, 64
        %v2752 = vpop.permute.xlu0 %2751
        %2753 = vrot.lane.b32.xlu0 %v2112, 64
        %v2754 = vpop.permute.xlu0 %2753
        %2755 = vrot.lane.b32.xlu0 %v2113, 64
        %v2756 = vpop.permute.xlu0 %2755
        %2757 = vrot.lane.b32.xlu0 %v2114, 64
        %v2758 = vpop.permute.xlu0 %2757
        %2759 = vrot.lane.b32.xlu0 %v2115, 64
        %v2760 = vpop.permute.xlu0 %2759
        %2761 = vrot.lane.b32.xlu0 %v2116, 64
        %v2762 = vpop.permute.xlu0 %2761
        %2763 = vrot.lane.b32.xlu0 %v2117, 64
        %v2764 = vpop.permute.xlu0 %2763
        %2765 = vrot.lane.b32.xlu0 %v2118, 64
        %v2766 = vpop.permute.xlu0 %2765
        %2767 = vrot.lane.b32.xlu0 %v2119, 64
        %v2768 = vpop.permute.xlu0 %2767
        %v2770 = vsel %vm2120, %v2746, 0
        %v2773 = vsel %vm2120, %v2748, 0
        %v2776 = vsel %vm2120, %v2750, 0
        %v2779 = vsel %vm2120, %v2752, 0
        %v2782 = vsel %vm2120, %v2754, 0
        %v2785 = vsel %vm2120, %v2756, 0
        %v2788 = vsel %vm2120, %v2758, 0
        %v2791 = vsel %vm2120, %v2760, 0
        %v2794 = vsel %vm2120, %v2762, 0
        %v2797 = vsel %vm2120, %v2764, 0
        %v2800 = vsel %vm2120, %v2766, 0
        %v2803 = vsel %vm2120, %v2768, 0
        %2805 = vmatpush.bf16.xpose.msra.mxu0 %v2803
        %2806 = vmatpush.bf16.xpose.msra.mxu0 %v2800
        %2807 = vmatpush.bf16.xpose.msra.mxu0 %v2797
        %2808 = vmatpush.bf16.xpose.msra.mxu0 %v2794
        %2809 = vmatpush.bf16.xpose.msra.mxu0 %v2791
        %2810 = vmatpush.bf16.xpose.msra.mxu0 %v2788
        %2811 = vmatpush.bf16.xpose.msra.mxu0 %v2785
        %2812 = vmatpush.bf16.xpose.msra.mxu0 %v2782
        %2813 = vmatmul.bf16.gmra.mxu0 %v2770
        %v2814 = vpop.f32.mrf.mxu0
        %v2815 = vadd.f32 %v2058, %v2814
        %v2816 = vpop.f32.mrf.mxu0
        %v2817 = vadd.f32 %v2058, %v2816
        %2818 = vmatmul.bf16.gmra.mxu0 %v2773
        %v2819 = vpop.f32.mrf.mxu0
        %v2820 = vadd.f32 %v2058, %v2819
        %v2821 = vpop.f32.mrf.mxu0
        %v2822 = vadd.f32 %v2058, %v2821
        %2823 = vmatmul.bf16.gmra.mxu0 %v2776
        %v2824 = vpop.f32.mrf.mxu0
        %v2825 = vadd.f32 %v2058, %v2824
        %v2826 = vpop.f32.mrf.mxu0
        %v2827 = vadd.f32 %v2058, %v2826
        %2828 = vmatmul.bf16.gmra.mxu0 %v2779
        %v2829 = vpop.f32.mrf.mxu0
        %v2830 = vadd.f32 %v2058, %v2829
        %v2831 = vpop.f32.mrf.mxu0
        %v2832 = vadd.f32 %v2058, %v2831
        %2833 = vdwg.mxu0
        %2834 = vmax.xlane.f32.xlu0 %v2815
        %v2835 = vpop.xlane.xlu0 %2834
        %2836 = vmax.xlane.f32.xlu0 %v2817
        %v2837 = vpop.xlane.xlu0 %2836
        %2838 = vmax.xlane.f32.xlu0 %v2820
        %v2839 = vpop.xlane.xlu0 %2838
        %2840 = vmax.xlane.f32.xlu0 %v2822
        %v2841 = vpop.xlane.xlu0 %2840
        %2842 = vmax.xlane.f32.xlu0 %v2825
        %v2843 = vpop.xlane.xlu0 %2842
        %2844 = vmax.xlane.f32.xlu0 %v2827
        %v2845 = vpop.xlane.xlu0 %2844
        %2846 = vmax.xlane.f32.xlu0 %v2830
        %v2847 = vpop.xlane.xlu0 %2846
        %2848 = vmax.xlane.f32.xlu0 %v2832
        %v2849 = vpop.xlane.xlu0 %2848
        %v2850 = vsub.f32 %v2815, %v2835
        %v2851 = vsub.f32 %v2817, %v2837
        %v2852 = vsub.f32 %v2820, %v2839
        %v2853 = vsub.f32 %v2822, %v2841
        %v2854 = vsub.f32 %v2825, %v2843
        %v2855 = vsub.f32 %v2827, %v2845
        %v2856 = vsub.f32 %v2830, %v2847
        %v2857 = vsub.f32 %v2832, %v2849
        %v2858 = vmul.f32 %v2850, 1.442695
        %v2859 = vpow.pop %v2858
        %v2860 = vmul.f32 %v2851, 1.442695
        %v2861 = vpow.pop %v2860
        %v2862 = vmul.f32 %v2852, 1.442695
        %v2863 = vpow.pop %v2862
        %v2864 = vmul.f32 %v2853, 1.442695
        %v2865 = vpow.pop %v2864
        %v2866 = vmul.f32 %v2854, 1.442695
        %v2867 = vpow.pop %v2866
        %v2868 = vmul.f32 %v2855, 1.442695
        %v2869 = vpow.pop %v2868
        %v2870 = vmul.f32 %v2856, 1.442695
        %v2871 = vpow.pop %v2870
        %v2872 = vmul.f32 %v2857, 1.442695
        %v2873 = vpow.pop %v2872
        %2874 = vadd.xlane.f32.xlu0 %v2859
        %v2875 = vpop.xlane.xlu0 %2874
        %2876 = vadd.xlane.f32.xlu0 %v2861
        %v2877 = vpop.xlane.xlu0 %2876
        %2878 = vadd.xlane.f32.xlu0 %v2863
        %v2879 = vpop.xlane.xlu0 %2878
        %2880 = vadd.xlane.f32.xlu0 %v2865
        %v2881 = vpop.xlane.xlu0 %2880
        %2882 = vadd.xlane.f32.xlu0 %v2867
        %v2883 = vpop.xlane.xlu0 %2882
        %2884 = vadd.xlane.f32.xlu0 %v2869
        %v2885 = vpop.xlane.xlu0 %2884
        %2886 = vadd.xlane.f32.xlu0 %v2871
        %v2887 = vpop.xlane.xlu0 %2886
        %2888 = vadd.xlane.f32.xlu0 %v2873
        %v2889 = vpop.xlane.xlu0 %2888
        %v2890 = vrcp.pop %v2875
        %v2891 = vrcp.pop %v2877
        %v2892 = vrcp.pop %v2879
        %v2893 = vrcp.pop %v2881
        %v2894 = vrcp.pop %v2883
        %v2895 = vrcp.pop %v2885
        %v2896 = vrcp.pop %v2887
        %v2897 = vrcp.pop %v2889
        %v2898 = vmul.f32 %v2859, %v2890
        %v2899 = vmul.f32 %v2861, %v2891
        %v2900 = vmul.f32 %v2863, %v2892
        %v2901 = vmul.f32 %v2865, %v2893
        %v2902 = vmul.f32 %v2867, %v2894
        %v2903 = vmul.f32 %v2869, %v2895
        %v2904 = vmul.f32 %v2871, %v2896
        %v2905 = vmul.f32 %v2873, %v2897
        %v2906 = vpack.c.bf16 %v2899, %v2898
        %v2907 = vpack.c.bf16 %v2901, %v2900
        %v2908 = vpack.c.bf16 %v2903, %v2902
        %v2909 = vpack.c.bf16 %v2905, %v2904
        %2910 = vrot.lane.b32.xlu0 %v2294, 64
        %v2911 = vpop.permute.xlu0 %2910
        %2912 = vrot.lane.b32.xlu0 %v2295, 64
        %v2913 = vpop.permute.xlu0 %2912
        %2914 = vrot.lane.b32.xlu0 %v2296, 64
        %v2915 = vpop.permute.xlu0 %2914
        %2916 = vrot.lane.b32.xlu0 %v2297, 64
        %v2917 = vpop.permute.xlu0 %2916
        %2918 = vrot.lane.b32.xlu0 %v2298, 64
        %v2919 = vpop.permute.xlu0 %2918
        %2920 = vrot.lane.b32.xlu0 %v2299, 64
        %v2921 = vpop.permute.xlu0 %2920
        %2922 = vrot.lane.b32.xlu0 %v2300, 64
        %v2923 = vpop.permute.xlu0 %2922
        %2924 = vrot.lane.b32.xlu0 %v2301, 64
        %v2925 = vpop.permute.xlu0 %2924
        %2934 = vmatpush.bf16.msra.mxu0 %v2925
        %2935 = vmatpush.bf16.msra.mxu0 %v2923
        %2936 = vmatpush.bf16.msra.mxu0 %v2921
        %2937 = vmatpush.bf16.msra.mxu0 %v2919
        %2938 = vmatpush.bf16.msra.mxu0 %v2917
        %2939 = vmatpush.bf16.msra.mxu0 %v2915
        %2940 = vmatpush.bf16.msra.mxu0 %v2913
        %2941 = vmatpush.bf16.msra.mxu0 %v2911
        %2942 = vmatmul.bf16.gmra.mxu0 %v2906
        %v2943 = vpop.f32.mrf.mxu0
        %v2944 = vadd.f32 0.0, %v2943
        %v2945 = vpop.f32.mrf.mxu0
        %v2946 = vadd.f32 0.0, %v2945
        %2947 = vmatmul.bf16.gmra.mxu0 %v2907
        %v2948 = vpop.f32.mrf.mxu0
        %v2949 = vadd.f32 0.0, %v2948
        %v2950 = vpop.f32.mrf.mxu0
        %v2951 = vadd.f32 0.0, %v2950
        %2952 = vmatmul.bf16.gmra.mxu0 %v2908
        %v2953 = vpop.f32.mrf.mxu0
        %v2954 = vadd.f32 0.0, %v2953
        %v2955 = vpop.f32.mrf.mxu0
        %v2956 = vadd.f32 0.0, %v2955
        %2957 = vmatmul.bf16.gmra.mxu0 %v2909
        %v2958 = vpop.f32.mrf.mxu0
        %v2959 = vadd.f32 0.0, %v2958
        %v2960 = vpop.f32.mrf.mxu0
        %v2961 = vadd.f32 0.0, %v2960
        %2962 = vdwg.mxu0
        %v2963 = vpack.c.bf16 %v2946, %v2944
        %v2964 = vpack.c.bf16 %v2951, %v2949
        %v2965 = vpack.c.bf16 %v2956, %v2954
        %v2966 = vpack.c.bf16 %v2961, %v2959
        %v2971 = vunpack.c.l.b16 %v1976
        %v2972 = vunpack.c.h.b16 %v1976
        %v2973 = vunpack.c.l.b16 %v1977
        %v2974 = vunpack.c.h.b16 %v1977
        %v2975 = vunpack.c.l.b16 %v1978
        %v2976 = vunpack.c.h.b16 %v1978
        %v2977 = vunpack.c.l.b16 %v1979
        %v2978 = vunpack.c.h.b16 %v1979
        %v2979 = vpack.c.b16 %v2973, %v2971
        %v2980 = vpack.c.b16 %v2974, %v2972
        %v2981 = vpack.c.b16 %v2977, %v2975
        %v2982 = vpack.c.b16 %v2978, %v2976
        %v2988 = vsel %vm2120, %v2963, 0
        %v2991 = vsel %vm2120, %v2964, 0
        %v2994 = vsel %vm2120, %v2965, 0
        %v2997 = vsel %vm2120, %v2966, 0
        %2999 = vmatpush.bf16.msra.mxu0 0
        %3000 = vmatpush.bf16.msra.mxu0 0
        %3001 = vmatpush.bf16.msra.mxu0 0
        %3002 = vmatpush.bf16.msra.mxu0 0
        %3003 = vmatpush.bf16.msra.mxu0 0
        %3004 = vmatpush.bf16.msra.mxu0 0
        %3005 = vmatpush.bf16.msra.mxu0 %v2981
        %3006 = vmatpush.bf16.msra.mxu0 %v2979
        %3007 = vmatmul.bf16.gmra.mxu0 %v2988
        %v3008 = vpop.f32.mrf.mxu0
        %v3009 = vadd.f32 0.0, %v3008
        %v3010 = vpop.f32.mrf.mxu0
        %v3011 = vadd.f32 0.0, %v3010
        %3012 = vmatmul.bf16.gmra.mxu0 %v2991
        %v3013 = vpop.f32.mrf.mxu0
        %v3014 = vadd.f32 0.0, %v3013
        %v3015 = vpop.f32.mrf.mxu0
        %v3016 = vadd.f32 0.0, %v3015
        %3017 = vmatmul.bf16.gmra.mxu0 %v2994
        %v3018 = vpop.f32.mrf.mxu0
        %v3019 = vadd.f32 0.0, %v3018
        %v3020 = vpop.f32.mrf.mxu0
        %v3021 = vadd.f32 0.0, %v3020
        %3022 = vmatmul.bf16.gmra.mxu0 %v2997
        %v3023 = vpop.f32.mrf.mxu0
        %v3024 = vadd.f32 0.0, %v3023
        %v3025 = vpop.f32.mrf.mxu0
        %v3026 = vadd.f32 0.0, %v3025
        %3027 = vdwg.mxu0
        %3028 = vmatpush.bf16.msra.mxu0 0
        %3029 = vmatpush.bf16.msra.mxu0 0
        %3030 = vmatpush.bf16.msra.mxu0 0
        %3031 = vmatpush.bf16.msra.mxu0 0
        %3032 = vmatpush.bf16.msra.mxu0 0
        %3033 = vmatpush.bf16.msra.mxu0 0
        %3034 = vmatpush.bf16.msra.mxu0 %v2982
        %3035 = vmatpush.bf16.msra.mxu0 %v2980
        %3036 = vmatmul.bf16.gmra.mxu0 %v2988
        %v3037 = vpop.f32.mrf.mxu0
        %v3038 = vadd.f32 0.0, %v3037
        %v3039 = vpop.f32.mrf.mxu0
        %v3040 = vadd.f32 0.0, %v3039
        %3041 = vmatmul.bf16.gmra.mxu0 %v2991
        %v3042 = vpop.f32.mrf.mxu0
        %v3043 = vadd.f32 0.0, %v3042
        %v3044 = vpop.f32.mrf.mxu0
        %v3045 = vadd.f32 0.0, %v3044
        %3046 = vmatmul.bf16.gmra.mxu0 %v2994
        %v3047 = vpop.f32.mrf.mxu0
        %v3048 = vadd.f32 0.0, %v3047
        %v3049 = vpop.f32.mrf.mxu0
        %v3050 = vadd.f32 0.0, %v3049
        %3051 = vmatmul.bf16.gmra.mxu0 %v2997
        %v3052 = vpop.f32.mrf.mxu0
        %v3053 = vadd.f32 0.0, %v3052
        %v3054 = vpop.f32.mrf.mxu0
        %v3055 = vadd.f32 0.0, %v3054
        %3056 = vdwg.mxu0
        %v3057 = vadd.f32 %v2697, %v3009
        %v3058 = vadd.f32 %v2726, %v3038
        %v3059 = vadd.f32 %v2699, %v3011
        %v3060 = vadd.f32 %v2728, %v3040
        %v3061 = vadd.f32 %v2702, %v3014
        %v3062 = vadd.f32 %v2731, %v3043
        %v3063 = vadd.f32 %v2704, %v3016
        %v3064 = vadd.f32 %v2733, %v3045
        %v3065 = vadd.f32 %v2707, %v3019
        %v3066 = vadd.f32 %v2736, %v3048
        %v3067 = vadd.f32 %v2709, %v3021
        %v3068 = vadd.f32 %v2738, %v3050
        %v3069 = vadd.f32 %v2712, %v3024
        %v3070 = vadd.f32 %v2741, %v3053
        %v3071 = vadd.f32 %v2714, %v3026
        %v3072 = vadd.f32 %v2743, %v3055
        %3073 = vrot.lane.b32.xlu0 %v2076, 32
        %v3074 = vpop.permute.xlu0 %3073
        %3075 = vrot.lane.b32.xlu0 %v2077, 32
        %v3076 = vpop.permute.xlu0 %3075
        %3077 = vrot.lane.b32.xlu0 %v2078, 32
        %v3078 = vpop.permute.xlu0 %3077
        %3079 = vrot.lane.b32.xlu0 %v2079, 32
        %v3080 = vpop.permute.xlu0 %3079
        %3081 = vrot.lane.b32.xlu0 %v2112, 32
        %v3082 = vpop.permute.xlu0 %3081
        %3083 = vrot.lane.b32.xlu0 %v2113, 32
        %v3084 = vpop.permute.xlu0 %3083
        %3085 = vrot.lane.b32.xlu0 %v2114, 32
        %v3086 = vpop.permute.xlu0 %3085
        %3087 = vrot.lane.b32.xlu0 %v2115, 32
        %v3088 = vpop.permute.xlu0 %3087
        %3089 = vrot.lane.b32.xlu0 %v2116, 32
        %v3090 = vpop.permute.xlu0 %3089
        %3091 = vrot.lane.b32.xlu0 %v2117, 32
        %v3092 = vpop.permute.xlu0 %3091
        %3093 = vrot.lane.b32.xlu0 %v2118, 32
        %v3094 = vpop.permute.xlu0 %3093
        %3095 = vrot.lane.b32.xlu0 %v2119, 32
        %v3096 = vpop.permute.xlu0 %3095
        %v3098 = vsel %vm2120, %v3074, 0
        %v3101 = vsel %vm2120, %v3076, 0
        %v3104 = vsel %vm2120, %v3078, 0
        %v3107 = vsel %vm2120, %v3080, 0
        %v3110 = vsel %vm2120, %v3082, 0
        %v3113 = vsel %vm2120, %v3084, 0
        %v3116 = vsel %vm2120, %v3086, 0
        %v3119 = vsel %vm2120, %v3088, 0
        %v3122 = vsel %vm2120, %v3090, 0
        %v3125 = vsel %vm2120, %v3092, 0
        %v3128 = vsel %vm2120, %v3094, 0
        %v3131 = vsel %vm2120, %v3096, 0
        %3133 = vmatpush.bf16.xpose.msra.mxu0 %v3131
        %3134 = vmatpush.bf16.xpose.msra.mxu0 %v3128
        %3135 = vmatpush.bf16.xpose.msra.mxu0 %v3125
        %3136 = vmatpush.bf16.xpose.msra.mxu0 %v3122
        %3137 = vmatpush.bf16.xpose.msra.mxu0 %v3119
        %3138 = vmatpush.bf16.xpose.msra.mxu0 %v3116
        %3139 = vmatpush.bf16.xpose.msra.mxu0 %v3113
        %3140 = vmatpush.bf16.xpose.msra.mxu0 %v3110
        %3141 = vmatmul.bf16.gmra.mxu0 %v3098
        %v3142 = vpop.f32.mrf.mxu0
        %v3143 = vadd.f32 %v2058, %v3142
        %v3144 = vpop.f32.mrf.mxu0
        %v3145 = vadd.f32 %v2058, %v3144
        %3146 = vmatmul.bf16.gmra.mxu0 %v3101
        %v3147 = vpop.f32.mrf.mxu0
        %v3148 = vadd.f32 %v2058, %v3147
        %v3149 = vpop.f32.mrf.mxu0
        %v3150 = vadd.f32 %v2058, %v3149
        %3151 = vmatmul.bf16.gmra.mxu0 %v3104
        %v3152 = vpop.f32.mrf.mxu0
        %v3153 = vadd.f32 %v2058, %v3152
        %v3154 = vpop.f32.mrf.mxu0
        %v3155 = vadd.f32 %v2058, %v3154
        %3156 = vmatmul.bf16.gmra.mxu0 %v3107
        %v3157 = vpop.f32.mrf.mxu0
        %v3158 = vadd.f32 %v2058, %v3157
        %v3159 = vpop.f32.mrf.mxu0
        %v3160 = vadd.f32 %v2058, %v3159
        %3161 = vdwg.mxu0
        %3162 = vmax.xlane.f32.xlu0 %v3143
        %v3163 = vpop.xlane.xlu0 %3162
        %3164 = vmax.xlane.f32.xlu0 %v3145
        %v3165 = vpop.xlane.xlu0 %3164
        %3166 = vmax.xlane.f32.xlu0 %v3148
        %v3167 = vpop.xlane.xlu0 %3166
        %3168 = vmax.xlane.f32.xlu0 %v3150
        %v3169 = vpop.xlane.xlu0 %3168
        %3170 = vmax.xlane.f32.xlu0 %v3153
        %v3171 = vpop.xlane.xlu0 %3170
        %3172 = vmax.xlane.f32.xlu0 %v3155
        %v3173 = vpop.xlane.xlu0 %3172
        %3174 = vmax.xlane.f32.xlu0 %v3158
        %v3175 = vpop.xlane.xlu0 %3174
        %3176 = vmax.xlane.f32.xlu0 %v3160
        %v3177 = vpop.xlane.xlu0 %3176
        %v3178 = vsub.f32 %v3143, %v3163
        %v3179 = vsub.f32 %v3145, %v3165
        %v3180 = vsub.f32 %v3148, %v3167
        %v3181 = vsub.f32 %v3150, %v3169
        %v3182 = vsub.f32 %v3153, %v3171
        %v3183 = vsub.f32 %v3155, %v3173
        %v3184 = vsub.f32 %v3158, %v3175
        %v3185 = vsub.f32 %v3160, %v3177
        %v3186 = vmul.f32 %v3178, 1.442695
        %v3187 = vpow.pop %v3186
        %v3188 = vmul.f32 %v3179, 1.442695
        %v3189 = vpow.pop %v3188
        %v3190 = vmul.f32 %v3180, 1.442695
        %v3191 = vpow.pop %v3190
        %v3192 = vmul.f32 %v3181, 1.442695
        %v3193 = vpow.pop %v3192
        %v3194 = vmul.f32 %v3182, 1.442695
        %v3195 = vpow.pop %v3194
        %v3196 = vmul.f32 %v3183, 1.442695
        %v3197 = vpow.pop %v3196
        %v3198 = vmul.f32 %v3184, 1.442695
        %v3199 = vpow.pop %v3198
        %v3200 = vmul.f32 %v3185, 1.442695
        %v3201 = vpow.pop %v3200
        %3202 = vadd.xlane.f32.xlu0 %v3187
        %v3203 = vpop.xlane.xlu0 %3202
        %3204 = vadd.xlane.f32.xlu0 %v3189
        %v3205 = vpop.xlane.xlu0 %3204
        %3206 = vadd.xlane.f32.xlu0 %v3191
        %v3207 = vpop.xlane.xlu0 %3206
        %3208 = vadd.xlane.f32.xlu0 %v3193
        %v3209 = vpop.xlane.xlu0 %3208
        %3210 = vadd.xlane.f32.xlu0 %v3195
        %v3211 = vpop.xlane.xlu0 %3210
        %3212 = vadd.xlane.f32.xlu0 %v3197
        %v3213 = vpop.xlane.xlu0 %3212
        %3214 = vadd.xlane.f32.xlu0 %v3199
        %v3215 = vpop.xlane.xlu0 %3214
        %3216 = vadd.xlane.f32.xlu0 %v3201
        %v3217 = vpop.xlane.xlu0 %3216
        %v3218 = vrcp.pop %v3203
        %v3219 = vrcp.pop %v3205
        %v3220 = vrcp.pop %v3207
        %v3221 = vrcp.pop %v3209
        %v3222 = vrcp.pop %v3211
        %v3223 = vrcp.pop %v3213
        %v3224 = vrcp.pop %v3215
        %v3225 = vrcp.pop %v3217
        %v3226 = vmul.f32 %v3187, %v3218
        %v3227 = vmul.f32 %v3189, %v3219
        %v3228 = vmul.f32 %v3191, %v3220
        %v3229 = vmul.f32 %v3193, %v3221
        %v3230 = vmul.f32 %v3195, %v3222
        %v3231 = vmul.f32 %v3197, %v3223
        %v3232 = vmul.f32 %v3199, %v3224
        %v3233 = vmul.f32 %v3201, %v3225
        %v3234 = vpack.c.bf16 %v3227, %v3226
        %v3235 = vpack.c.bf16 %v3229, %v3228
        %v3236 = vpack.c.bf16 %v3231, %v3230
        %v3237 = vpack.c.bf16 %v3233, %v3232
        %3238 = vrot.lane.b32.xlu0 %v2294, 32
        %v3239 = vpop.permute.xlu0 %3238
        %3240 = vrot.lane.b32.xlu0 %v2295, 32
        %v3241 = vpop.permute.xlu0 %3240
        %3242 = vrot.lane.b32.xlu0 %v2296, 32
        %v3243 = vpop.permute.xlu0 %3242
        %3244 = vrot.lane.b32.xlu0 %v2297, 32
        %v3245 = vpop.permute.xlu0 %3244
        %3246 = vrot.lane.b32.xlu0 %v2298, 32
        %v3247 = vpop.permute.xlu0 %3246
        %3248 = vrot.lane.b32.xlu0 %v2299, 32
        %v3249 = vpop.permute.xlu0 %3248
        %3250 = vrot.lane.b32.xlu0 %v2300, 32
        %v3251 = vpop.permute.xlu0 %3250
        %3252 = vrot.lane.b32.xlu0 %v2301, 32
        %v3253 = vpop.permute.xlu0 %3252
        %3262 = vmatpush.bf16.msra.mxu0 %v3253
        %3263 = vmatpush.bf16.msra.mxu0 %v3251
        %3264 = vmatpush.bf16.msra.mxu0 %v3249
        %3265 = vmatpush.bf16.msra.mxu0 %v3247
        %3266 = vmatpush.bf16.msra.mxu0 %v3245
        %3267 = vmatpush.bf16.msra.mxu0 %v3243
        %3268 = vmatpush.bf16.msra.mxu0 %v3241
        %3269 = vmatpush.bf16.msra.mxu0 %v3239
        %3270 = vmatmul.bf16.gmra.mxu0 %v3234
        %v3271 = vpop.f32.mrf.mxu0
        %v3272 = vadd.f32 0.0, %v3271
        %v3273 = vpop.f32.mrf.mxu0
        %v3274 = vadd.f32 0.0, %v3273
        %3275 = vmatmul.bf16.gmra.mxu0 %v3235
        %v3276 = vpop.f32.mrf.mxu0
        %v3277 = vadd.f32 0.0, %v3276
        %v3278 = vpop.f32.mrf.mxu0
        %v3279 = vadd.f32 0.0, %v3278
        %3280 = vmatmul.bf16.gmra.mxu0 %v3236
        %v3281 = vpop.f32.mrf.mxu0
        %v3282 = vadd.f32 0.0, %v3281
        %v3283 = vpop.f32.mrf.mxu0
        %v3284 = vadd.f32 0.0, %v3283
        %3285 = vmatmul.bf16.gmra.mxu0 %v3237
        %v3286 = vpop.f32.mrf.mxu0
        %v3287 = vadd.f32 0.0, %v3286
        %v3288 = vpop.f32.mrf.mxu0
        %v3289 = vadd.f32 0.0, %v3288
        %3290 = vdwg.mxu0
        %v3291 = vpack.c.bf16 %v3274, %v3272
        %v3292 = vpack.c.bf16 %v3279, %v3277
        %v3293 = vpack.c.bf16 %v3284, %v3282
        %v3294 = vpack.c.bf16 %v3289, %v3287
        %v3299 = vunpack.c.l.b16 %v1980
        %v3300 = vunpack.c.h.b16 %v1980
        %v3301 = vunpack.c.l.b16 %v1981
        %v3302 = vunpack.c.h.b16 %v1981
        %v3303 = vunpack.c.l.b16 %v1982
        %v3304 = vunpack.c.h.b16 %v1982
        %v3305 = vunpack.c.l.b16 %v1983
        %v3306 = vunpack.c.h.b16 %v1983
        %v3307 = vpack.c.b16 %v3301, %v3299
        %v3308 = vpack.c.b16 %v3302, %v3300
        %v3309 = vpack.c.b16 %v3305, %v3303
        %v3310 = vpack.c.b16 %v3306, %v3304
        %v3316 = vsel %vm2120, %v3291, 0
        %v3319 = vsel %vm2120, %v3292, 0
        %v3322 = vsel %vm2120, %v3293, 0
        %v3325 = vsel %vm2120, %v3294, 0
        %3327 = vmatpush.bf16.msra.mxu0 0
        %3328 = vmatpush.bf16.msra.mxu0 0
        %3329 = vmatpush.bf16.msra.mxu0 0
        %3330 = vmatpush.bf16.msra.mxu0 0
        %3331 = vmatpush.bf16.msra.mxu0 0
        %3332 = vmatpush.bf16.msra.mxu0 0
        %3333 = vmatpush.bf16.msra.mxu0 %v3309
        %3334 = vmatpush.bf16.msra.mxu0 %v3307
        %3335 = vmatmul.bf16.gmra.mxu0 %v3316
        %v3336 = vpop.f32.mrf.mxu0
        %v3337 = vadd.f32 0.0, %v3336
        %v3338 = vpop.f32.mrf.mxu0
        %v3339 = vadd.f32 0.0, %v3338
        %3340 = vmatmul.bf16.gmra.mxu0 %v3319
        %v3341 = vpop.f32.mrf.mxu0
        %v3342 = vadd.f32 0.0, %v3341
        %v3343 = vpop.f32.mrf.mxu0
        %v3344 = vadd.f32 0.0, %v3343
        %3345 = vmatmul.bf16.gmra.mxu0 %v3322
        %v3346 = vpop.f32.mrf.mxu0
        %v3347 = vadd.f32 0.0, %v3346
        %v3348 = vpop.f32.mrf.mxu0
        %v3349 = vadd.f32 0.0, %v3348
        %3350 = vmatmul.bf16.gmra.mxu0 %v3325
        %v3351 = vpop.f32.mrf.mxu0
        %v3352 = vadd.f32 0.0, %v3351
        %v3353 = vpop.f32.mrf.mxu0
        %v3354 = vadd.f32 0.0, %v3353
        %3355 = vdwg.mxu0
        %3356 = vmatpush.bf16.msra.mxu0 0
        %3357 = vmatpush.bf16.msra.mxu0 0
        %3358 = vmatpush.bf16.msra.mxu0 0
        %3359 = vmatpush.bf16.msra.mxu0 0
        %3360 = vmatpush.bf16.msra.mxu0 0
        %3361 = vmatpush.bf16.msra.mxu0 0
        %3362 = vmatpush.bf16.msra.mxu0 %v3310
        %3363 = vmatpush.bf16.msra.mxu0 %v3308
        %3364 = vmatmul.bf16.gmra.mxu0 %v3316
        %v3365 = vpop.f32.mrf.mxu0
        %v3366 = vadd.f32 0.0, %v3365
        %v3367 = vpop.f32.mrf.mxu0
        %v3368 = vadd.f32 0.0, %v3367
        %3369 = vmatmul.bf16.gmra.mxu0 %v3319
        %v3370 = vpop.f32.mrf.mxu0
        %v3371 = vadd.f32 0.0, %v3370
        %v3372 = vpop.f32.mrf.mxu0
        %v3373 = vadd.f32 0.0, %v3372
        %3374 = vmatmul.bf16.gmra.mxu0 %v3322
        %v3375 = vpop.f32.mrf.mxu0
        %v3376 = vadd.f32 0.0, %v3375
        %v3377 = vpop.f32.mrf.mxu0
        %v3378 = vadd.f32 0.0, %v3377
        %3379 = vmatmul.bf16.gmra.mxu0 %v3325
        %v3380 = vpop.f32.mrf.mxu0
        %v3381 = vadd.f32 0.0, %v3380
        %v3382 = vpop.f32.mrf.mxu0
        %v3383 = vadd.f32 0.0, %v3382
        %3384 = vdwg.mxu0
        %v3385 = vadd.f32 %v3057, %v3337
        %v3386 = vadd.f32 %v3058, %v3366
        %v3387 = vadd.f32 %v3059, %v3339
        %v3388 = vadd.f32 %v3060, %v3368
        %v3389 = vadd.f32 %v3061, %v3342
        %v3390 = vadd.f32 %v3062, %v3371
        %v3391 = vadd.f32 %v3063, %v3344
        %v3392 = vadd.f32 %v3064, %v3373
        %v3393 = vadd.f32 %v3065, %v3347
        %v3394 = vadd.f32 %v3066, %v3376
        %v3395 = vadd.f32 %v3067, %v3349
        %v3396 = vadd.f32 %v3068, %v3378
        %v3397 = vadd.f32 %v3069, %v3352
        %v3398 = vadd.f32 %v3070, %v3381
        %v3399 = vadd.f32 %v3071, %v3354
        %v3400 = vadd.f32 %v3072, %v3383
        %v3401 = vunpack.c.h.b16 %v2017
        %v3402 = vunpack.c.h.b16 %v2018
        %v3403 = vunpack.c.h.b16 %v2019
        %v3404 = vunpack.c.h.b16 %v2020
        %v3405 = vunpack.c.h.b16 %v2021
        %v3406 = vunpack.c.h.b16 %v2022
        %v3407 = vunpack.c.h.b16 %v2023
        %v3408 = vunpack.c.h.b16 %v2024
        %v3409 = vpack.c.b16 %v3402, %v3401
        %v3410 = vpack.c.b16 %v3404, %v3403
        %v3411 = vpack.c.b16 %v3406, %v3405
        %v3412 = vpack.c.b16 %v3408, %v3407
        %v3413 = vunpack.c.h.b16 %v2025
        %v3414 = vunpack.c.h.b16 %v2026
        %v3415 = vunpack.c.h.b16 %v2027
        %v3416 = vunpack.c.h.b16 %v2028
        %v3417 = vunpack.c.h.b16 %v2029
        %v3418 = vunpack.c.h.b16 %v2030
        %v3419 = vunpack.c.h.b16 %v2031
        %v3420 = vunpack.c.h.b16 %v2032
        %v3421 = vunpack.c.h.b16 %v2033
        %v3422 = vunpack.c.h.b16 %v2034
        %v3423 = vunpack.c.h.b16 %v2035
        %v3424 = vunpack.c.h.b16 %v2036
        %v3425 = vunpack.c.h.b16 %v2037
        %v3426 = vunpack.c.h.b16 %v2038
        %v3427 = vunpack.c.h.b16 %v2039
        %v3428 = vunpack.c.h.b16 %v2040
        %v3429 = vpack.c.b16 %v3414, %v3413
        %v3430 = vpack.c.b16 %v3416, %v3415
        %v3431 = vpack.c.b16 %v3418, %v3417
        %v3432 = vpack.c.b16 %v3420, %v3419
        %v3433 = vpack.c.b16 %v3422, %v3421
        %v3434 = vpack.c.b16 %v3424, %v3423
        %v3435 = vpack.c.b16 %v3426, %v3425
        %v3436 = vpack.c.b16 %v3428, %v3427
        %v3438 = vsel %vm2120, %v3409, 0
        %v3441 = vsel %vm2120, %v3410, 0
        %v3444 = vsel %vm2120, %v3411, 0
        %v3447 = vsel %vm2120, %v3412, 0
        %v3450 = vsel %vm2120, %v3429, 0
        %v3453 = vsel %vm2120, %v3430, 0
        %v3456 = vsel %vm2120, %v3431, 0
        %v3459 = vsel %vm2120, %v3432, 0
        %v3462 = vsel %vm2120, %v3433, 0
        %v3465 = vsel %vm2120, %v3434, 0
        %v3468 = vsel %vm2120, %v3435, 0
        %v3471 = vsel %vm2120, %v3436, 0
        %3473 = vmatpush.bf16.xpose.msra.mxu0 %v3471
        %3474 = vmatpush.bf16.xpose.msra.mxu0 %v3468
        %3475 = vmatpush.bf16.xpose.msra.mxu0 %v3465
        %3476 = vmatpush.bf16.xpose.msra.mxu0 %v3462
        %3477 = vmatpush.bf16.xpose.msra.mxu0 %v3459
        %3478 = vmatpush.bf16.xpose.msra.mxu0 %v3456
        %3479 = vmatpush.bf16.xpose.msra.mxu0 %v3453
        %3480 = vmatpush.bf16.xpose.msra.mxu0 %v3450
        %3481 = vmatmul.bf16.gmra.mxu0 %v3438
        %v3482 = vpop.f32.mrf.mxu0
        %v3483 = vadd.f32 %v2058, %v3482
        %v3484 = vpop.f32.mrf.mxu0
        %v3485 = vadd.f32 %v2058, %v3484
        %3486 = vmatmul.bf16.gmra.mxu0 %v3441
        %v3487 = vpop.f32.mrf.mxu0
        %v3488 = vadd.f32 %v2058, %v3487
        %v3489 = vpop.f32.mrf.mxu0
        %v3490 = vadd.f32 %v2058, %v3489
        %3491 = vmatmul.bf16.gmra.mxu0 %v3444
        %v3492 = vpop.f32.mrf.mxu0
        %v3493 = vadd.f32 %v2058, %v3492
        %v3494 = vpop.f32.mrf.mxu0
        %v3495 = vadd.f32 %v2058, %v3494
        %3496 = vmatmul.bf16.gmra.mxu0 %v3447
        %v3497 = vpop.f32.mrf.mxu0
        %v3498 = vadd.f32 %v2058, %v3497
        %v3499 = vpop.f32.mrf.mxu0
        %v3500 = vadd.f32 %v2058, %v3499
        %3501 = vdwg.mxu0
        %3502 = vmax.xlane.f32.xlu0 %v3483
        %v3503 = vpop.xlane.xlu0 %3502
        %3504 = vmax.xlane.f32.xlu0 %v3485
        %v3505 = vpop.xlane.xlu0 %3504
        %3506 = vmax.xlane.f32.xlu0 %v3488
        %v3507 = vpop.xlane.xlu0 %3506
        %3508 = vmax.xlane.f32.xlu0 %v3490
        %v3509 = vpop.xlane.xlu0 %3508
        %3510 = vmax.xlane.f32.xlu0 %v3493
        %v3511 = vpop.xlane.xlu0 %3510
        %3512 = vmax.xlane.f32.xlu0 %v3495
        %v3513 = vpop.xlane.xlu0 %3512
        %3514 = vmax.xlane.f32.xlu0 %v3498
        %v3515 = vpop.xlane.xlu0 %3514
        %3516 = vmax.xlane.f32.xlu0 %v3500
        %v3517 = vpop.xlane.xlu0 %3516
        %v3518 = vsub.f32 %v3483, %v3503
        %v3519 = vsub.f32 %v3485, %v3505
        %v3520 = vsub.f32 %v3488, %v3507
        %v3521 = vsub.f32 %v3490, %v3509
        %v3522 = vsub.f32 %v3493, %v3511
        %v3523 = vsub.f32 %v3495, %v3513
        %v3524 = vsub.f32 %v3498, %v3515
        %v3525 = vsub.f32 %v3500, %v3517
        %v3526 = vmul.f32 %v3518, 1.442695
        %v3527 = vpow.pop %v3526
        %v3528 = vmul.f32 %v3519, 1.442695
        %v3529 = vpow.pop %v3528
        %v3530 = vmul.f32 %v3520, 1.442695
        %v3531 = vpow.pop %v3530
        %v3532 = vmul.f32 %v3521, 1.442695
        %v3533 = vpow.pop %v3532
        %v3534 = vmul.f32 %v3522, 1.442695
        %v3535 = vpow.pop %v3534
        %v3536 = vmul.f32 %v3523, 1.442695
        %v3537 = vpow.pop %v3536
        %v3538 = vmul.f32 %v3524, 1.442695
        %v3539 = vpow.pop %v3538
        %v3540 = vmul.f32 %v3525, 1.442695
        %v3541 = vpow.pop %v3540
        %3542 = vadd.xlane.f32.xlu0 %v3527
        %v3543 = vpop.xlane.xlu0 %3542
        %3544 = vadd.xlane.f32.xlu0 %v3529
        %v3545 = vpop.xlane.xlu0 %3544
        %3546 = vadd.xlane.f32.xlu0 %v3531
        %v3547 = vpop.xlane.xlu0 %3546
        %3548 = vadd.xlane.f32.xlu0 %v3533
        %v3549 = vpop.xlane.xlu0 %3548
        %3550 = vadd.xlane.f32.xlu0 %v3535
        %v3551 = vpop.xlane.xlu0 %3550
        %3552 = vadd.xlane.f32.xlu0 %v3537
        %v3553 = vpop.xlane.xlu0 %3552
        %3554 = vadd.xlane.f32.xlu0 %v3539
        %v3555 = vpop.xlane.xlu0 %3554
        %3556 = vadd.xlane.f32.xlu0 %v3541
        %v3557 = vpop.xlane.xlu0 %3556
        %v3558 = vrcp.pop %v3543
        %v3559 = vrcp.pop %v3545
        %v3560 = vrcp.pop %v3547
        %v3561 = vrcp.pop %v3549
        %v3562 = vrcp.pop %v3551
        %v3563 = vrcp.pop %v3553
        %v3564 = vrcp.pop %v3555
        %v3565 = vrcp.pop %v3557
        %v3566 = vmul.f32 %v3527, %v3558
        %v3567 = vmul.f32 %v3529, %v3559
        %v3568 = vmul.f32 %v3531, %v3560
        %v3569 = vmul.f32 %v3533, %v3561
        %v3570 = vmul.f32 %v3535, %v3562
        %v3571 = vmul.f32 %v3537, %v3563
        %v3572 = vmul.f32 %v3539, %v3564
        %v3573 = vmul.f32 %v3541, %v3565
        %v3574 = vpack.c.bf16 %v3567, %v3566
        %v3575 = vpack.c.bf16 %v3569, %v3568
        %v3576 = vpack.c.bf16 %v3571, %v3570
        %v3577 = vpack.c.bf16 %v3573, %v3572
        %v3578 = vunpack.c.h.b16 %v2041
        %v3579 = vunpack.c.h.b16 %v2042
        %v3580 = vunpack.c.h.b16 %v2043
        %v3581 = vunpack.c.h.b16 %v2044
        %v3582 = vunpack.c.h.b16 %v2045
        %v3583 = vunpack.c.h.b16 %v2046
        %v3584 = vunpack.c.h.b16 %v2047
        %v3585 = vunpack.c.h.b16 %v2048
        %v3586 = vunpack.c.h.b16 %v2049
        %v3587 = vunpack.c.h.b16 %v2050
        %v3588 = vunpack.c.h.b16 %v2051
        %v3589 = vunpack.c.h.b16 %v2052
        %v3590 = vunpack.c.h.b16 %v2053
        %v3591 = vunpack.c.h.b16 %v2054
        %v3592 = vunpack.c.h.b16 %v2055
        %v3593 = vunpack.c.h.b16 %v2056
        %v3594 = vpack.c.b16 %v3579, %v3578
        %v3595 = vpack.c.b16 %v3581, %v3580
        %v3596 = vpack.c.b16 %v3583, %v3582
        %v3597 = vpack.c.b16 %v3585, %v3584
        %v3598 = vpack.c.b16 %v3587, %v3586
        %v3599 = vpack.c.b16 %v3589, %v3588
        %v3600 = vpack.c.b16 %v3591, %v3590
        %v3601 = vpack.c.b16 %v3593, %v3592
        %3610 = vmatpush.bf16.msra.mxu0 %v3601
        %3611 = vmatpush.bf16.msra.mxu0 %v3600
        %3612 = vmatpush.bf16.msra.mxu0 %v3599
        %3613 = vmatpush.bf16.msra.mxu0 %v3598
        %3614 = vmatpush.bf16.msra.mxu0 %v3597
        %3615 = vmatpush.bf16.msra.mxu0 %v3596
        %3616 = vmatpush.bf16.msra.mxu0 %v3595
        %3617 = vmatpush.bf16.msra.mxu0 %v3594
        %3618 = vmatmul.bf16.gmra.mxu0 %v3574
        %v3619 = vpop.f32.mrf.mxu0
        %v3620 = vadd.f32 0.0, %v3619
        %v3621 = vpop.f32.mrf.mxu0
        %v3622 = vadd.f32 0.0, %v3621
        %3623 = vmatmul.bf16.gmra.mxu0 %v3575
        %v3624 = vpop.f32.mrf.mxu0
        %v3625 = vadd.f32 0.0, %v3624
        %v3626 = vpop.f32.mrf.mxu0
        %v3627 = vadd.f32 0.0, %v3626
        %3628 = vmatmul.bf16.gmra.mxu0 %v3576
        %v3629 = vpop.f32.mrf.mxu0
        %v3630 = vadd.f32 0.0, %v3629
        %v3631 = vpop.f32.mrf.mxu0
        %v3632 = vadd.f32 0.0, %v3631
        %3633 = vmatmul.bf16.gmra.mxu0 %v3577
        %v3634 = vpop.f32.mrf.mxu0
        %v3635 = vadd.f32 0.0, %v3634
        %v3636 = vpop.f32.mrf.mxu0
        %v3637 = vadd.f32 0.0, %v3636
        %3638 = vdwg.mxu0
        %v3639 = vpack.c.bf16 %v3622, %v3620
        %v3640 = vpack.c.bf16 %v3627, %v3625
        %v3641 = vpack.c.bf16 %v3632, %v3630
        %v3642 = vpack.c.bf16 %v3637, %v3635
        %v3647 = vunpack.c.l.b16 %v1984
        %v3648 = vunpack.c.h.b16 %v1984
        %v3649 = vunpack.c.l.b16 %v1985
        %v3650 = vunpack.c.h.b16 %v1985
        %v3651 = vunpack.c.l.b16 %v1986
        %v3652 = vunpack.c.h.b16 %v1986
        %v3653 = vunpack.c.l.b16 %v1987
        %v3654 = vunpack.c.h.b16 %v1987
        %v3655 = vpack.c.b16 %v3649, %v3647
        %v3656 = vpack.c.b16 %v3650, %v3648
        %v3657 = vpack.c.b16 %v3653, %v3651
        %v3658 = vpack.c.b16 %v3654, %v3652
        %v3664 = vsel %vm2120, %v3639, 0
        %v3667 = vsel %vm2120, %v3640, 0
        %v3670 = vsel %vm2120, %v3641, 0
        %v3673 = vsel %vm2120, %v3642, 0
        %3675 = vmatpush.bf16.msra.mxu0 0
        %3676 = vmatpush.bf16.msra.mxu0 0
        %3677 = vmatpush.bf16.msra.mxu0 0
        %3678 = vmatpush.bf16.msra.mxu0 0
        %3679 = vmatpush.bf16.msra.mxu0 0
        %3680 = vmatpush.bf16.msra.mxu0 0
        %3681 = vmatpush.bf16.msra.mxu0 %v3657
        %3682 = vmatpush.bf16.msra.mxu0 %v3655
        %3683 = vmatmul.bf16.gmra.mxu0 %v3664
        %v3684 = vpop.f32.mrf.mxu0
        %v3685 = vadd.f32 0.0, %v3684
        %v3686 = vpop.f32.mrf.mxu0
        %v3687 = vadd.f32 0.0, %v3686
        %3688 = vmatmul.bf16.gmra.mxu0 %v3667
        %v3689 = vpop.f32.mrf.mxu0
        %v3690 = vadd.f32 0.0, %v3689
        %v3691 = vpop.f32.mrf.mxu0
        %v3692 = vadd.f32 0.0, %v3691
        %3693 = vmatmul.bf16.gmra.mxu0 %v3670
        %v3694 = vpop.f32.mrf.mxu0
        %v3695 = vadd.f32 0.0, %v3694
        %v3696 = vpop.f32.mrf.mxu0
        %v3697 = vadd.f32 0.0, %v3696
        %3698 = vmatmul.bf16.gmra.mxu0 %v3673
        %v3699 = vpop.f32.mrf.mxu0
        %v3700 = vadd.f32 0.0, %v3699
        %v3701 = vpop.f32.mrf.mxu0
        %v3702 = vadd.f32 0.0, %v3701
        %3703 = vdwg.mxu0
        %3704 = vmatpush.bf16.msra.mxu0 0
        %3705 = vmatpush.bf16.msra.mxu0 0
        %3706 = vmatpush.bf16.msra.mxu0 0
        %3707 = vmatpush.bf16.msra.mxu0 0
        %3708 = vmatpush.bf16.msra.mxu0 0
        %3709 = vmatpush.bf16.msra.mxu0 0
        %3710 = vmatpush.bf16.msra.mxu0 %v3658
        %3711 = vmatpush.bf16.msra.mxu0 %v3656
        %3712 = vmatmul.bf16.gmra.mxu0 %v3664
        %v3713 = vpop.f32.mrf.mxu0
        %v3714 = vadd.f32 0.0, %v3713
        %v3715 = vpop.f32.mrf.mxu0
        %v3716 = vadd.f32 0.0, %v3715
        %3717 = vmatmul.bf16.gmra.mxu0 %v3667
        %v3718 = vpop.f32.mrf.mxu0
        %v3719 = vadd.f32 0.0, %v3718
        %v3720 = vpop.f32.mrf.mxu0
        %v3721 = vadd.f32 0.0, %v3720
        %3722 = vmatmul.bf16.gmra.mxu0 %v3670
        %v3723 = vpop.f32.mrf.mxu0
        %v3724 = vadd.f32 0.0, %v3723
        %v3725 = vpop.f32.mrf.mxu0
        %v3726 = vadd.f32 0.0, %v3725
        %3727 = vmatmul.bf16.gmra.mxu0 %v3673
        %v3728 = vpop.f32.mrf.mxu0
        %v3729 = vadd.f32 0.0, %v3728
        %v3730 = vpop.f32.mrf.mxu0
        %v3731 = vadd.f32 0.0, %v3730
        %3732 = vdwg.mxu0
        %v3733 = vadd.f32 %v3385, %v3685
        %v3734 = vadd.f32 %v3386, %v3714
        %v3735 = vadd.f32 %v3387, %v3687
        %v3736 = vadd.f32 %v3388, %v3716
        %v3737 = vadd.f32 %v3389, %v3690
        %v3738 = vadd.f32 %v3390, %v3719
        %v3739 = vadd.f32 %v3391, %v3692
        %v3740 = vadd.f32 %v3392, %v3721
        %v3741 = vadd.f32 %v3393, %v3695
        %v3742 = vadd.f32 %v3394, %v3724
        %v3743 = vadd.f32 %v3395, %v3697
        %v3744 = vadd.f32 %v3396, %v3726
        %v3745 = vadd.f32 %v3397, %v3700
        %v3746 = vadd.f32 %v3398, %v3729
        %v3747 = vadd.f32 %v3399, %v3702
        %v3748 = vadd.f32 %v3400, %v3731
        %3749 = vrot.lane.b32.xlu0 %v3409, 96
        %v3750 = vpop.permute.xlu0 %3749
        %3751 = vrot.lane.b32.xlu0 %v3410, 96
        %v3752 = vpop.permute.xlu0 %3751
        %3753 = vrot.lane.b32.xlu0 %v3411, 96
        %v3754 = vpop.permute.xlu0 %3753
        %3755 = vrot.lane.b32.xlu0 %v3412, 96
        %v3756 = vpop.permute.xlu0 %3755
        %3757 = vrot.lane.b32.xlu0 %v3429, 96
        %v3758 = vpop.permute.xlu0 %3757
        %3759 = vrot.lane.b32.xlu0 %v3430, 96
        %v3760 = vpop.permute.xlu0 %3759
        %3761 = vrot.lane.b32.xlu0 %v3431, 96
        %v3762 = vpop.permute.xlu0 %3761
        %3763 = vrot.lane.b32.xlu0 %v3432, 96
        %v3764 = vpop.permute.xlu0 %3763
        %3765 = vrot.lane.b32.xlu0 %v3433, 96
        %v3766 = vpop.permute.xlu0 %3765
        %3767 = vrot.lane.b32.xlu0 %v3434, 96
        %v3768 = vpop.permute.xlu0 %3767
        %3769 = vrot.lane.b32.xlu0 %v3435, 96
        %v3770 = vpop.permute.xlu0 %3769
        %3771 = vrot.lane.b32.xlu0 %v3436, 96
        %v3772 = vpop.permute.xlu0 %3771
        %v3774 = vsel %vm2120, %v3750, 0
        %v3777 = vsel %vm2120, %v3752, 0
        %v3780 = vsel %vm2120, %v3754, 0
        %v3783 = vsel %vm2120, %v3756, 0
        %v3786 = vsel %vm2120, %v3758, 0
        %v3789 = vsel %vm2120, %v3760, 0
        %v3792 = vsel %vm2120, %v3762, 0
        %v3795 = vsel %vm2120, %v3764, 0
        %v3798 = vsel %vm2120, %v3766, 0
        %v3801 = vsel %vm2120, %v3768, 0
        %v3804 = vsel %vm2120, %v3770, 0
        %v3807 = vsel %vm2120, %v3772, 0
        %3809 = vmatpush.bf16.xpose.msra.mxu0 %v3807
        %3810 = vmatpush.bf16.xpose.msra.mxu0 %v3804
        %3811 = vmatpush.bf16.xpose.msra.mxu0 %v3801
        %3812 = vmatpush.bf16.xpose.msra.mxu0 %v3798
        %3813 = vmatpush.bf16.xpose.msra.mxu0 %v3795
        %3814 = vmatpush.bf16.xpose.msra.mxu0 %v3792
        %3815 = vmatpush.bf16.xpose.msra.mxu0 %v3789
        %3816 = vmatpush.bf16.xpose.msra.mxu0 %v3786
        %3817 = vmatmul.bf16.gmra.mxu0 %v3774
        %v3818 = vpop.f32.mrf.mxu0
        %v3819 = vadd.f32 %v2058, %v3818
        %v3820 = vpop.f32.mrf.mxu0
        %v3821 = vadd.f32 %v2058, %v3820
        %3822 = vmatmul.bf16.gmra.mxu0 %v3777
        %v3823 = vpop.f32.mrf.mxu0
        %v3824 = vadd.f32 %v2058, %v3823
        %v3825 = vpop.f32.mrf.mxu0
        %v3826 = vadd.f32 %v2058, %v3825
        %3827 = vmatmul.bf16.gmra.mxu0 %v3780
        %v3828 = vpop.f32.mrf.mxu0
        %v3829 = vadd.f32 %v2058, %v3828
        %v3830 = vpop.f32.mrf.mxu0
        %v3831 = vadd.f32 %v2058, %v3830
        %3832 = vmatmul.bf16.gmra.mxu0 %v3783
        %v3833 = vpop.f32.mrf.mxu0
        %v3834 = vadd.f32 %v2058, %v3833
        %v3835 = vpop.f32.mrf.mxu0
        %v3836 = vadd.f32 %v2058, %v3835
        %3837 = vdwg.mxu0
        %3838 = vmax.xlane.f32.xlu0 %v3819
        %v3839 = vpop.xlane.xlu0 %3838
        %3840 = vmax.xlane.f32.xlu0 %v3821
        %v3841 = vpop.xlane.xlu0 %3840
        %3842 = vmax.xlane.f32.xlu0 %v3824
        %v3843 = vpop.xlane.xlu0 %3842
        %3844 = vmax.xlane.f32.xlu0 %v3826
        %v3845 = vpop.xlane.xlu0 %3844
        %3846 = vmax.xlane.f32.xlu0 %v3829
        %v3847 = vpop.xlane.xlu0 %3846
        %3848 = vmax.xlane.f32.xlu0 %v3831
        %v3849 = vpop.xlane.xlu0 %3848
        %3850 = vmax.xlane.f32.xlu0 %v3834
        %v3851 = vpop.xlane.xlu0 %3850
        %3852 = vmax.xlane.f32.xlu0 %v3836
        %v3853 = vpop.xlane.xlu0 %3852
        %v3854 = vsub.f32 %v3819, %v3839
        %v3855 = vsub.f32 %v3821, %v3841
        %v3856 = vsub.f32 %v3824, %v3843
        %v3857 = vsub.f32 %v3826, %v3845
        %v3858 = vsub.f32 %v3829, %v3847
        %v3859 = vsub.f32 %v3831, %v3849
        %v3860 = vsub.f32 %v3834, %v3851
        %v3861 = vsub.f32 %v3836, %v3853
        %v3862 = vmul.f32 %v3854, 1.442695
        %v3863 = vpow.pop %v3862
        %v3864 = vmul.f32 %v3855, 1.442695
        %v3865 = vpow.pop %v3864
        %v3866 = vmul.f32 %v3856, 1.442695
        %v3867 = vpow.pop %v3866
        %v3868 = vmul.f32 %v3857, 1.442695
        %v3869 = vpow.pop %v3868
        %v3870 = vmul.f32 %v3858, 1.442695
        %v3871 = vpow.pop %v3870
        %v3872 = vmul.f32 %v3859, 1.442695
        %v3873 = vpow.pop %v3872
        %v3874 = vmul.f32 %v3860, 1.442695
        %v3875 = vpow.pop %v3874
        %v3876 = vmul.f32 %v3861, 1.442695
        %v3877 = vpow.pop %v3876
        %3878 = vadd.xlane.f32.xlu0 %v3863
        %v3879 = vpop.xlane.xlu0 %3878
        %3880 = vadd.xlane.f32.xlu0 %v3865
        %v3881 = vpop.xlane.xlu0 %3880
        %3882 = vadd.xlane.f32.xlu0 %v3867
        %v3883 = vpop.xlane.xlu0 %3882
        %3884 = vadd.xlane.f32.xlu0 %v3869
        %v3885 = vpop.xlane.xlu0 %3884
        %3886 = vadd.xlane.f32.xlu0 %v3871
        %v3887 = vpop.xlane.xlu0 %3886
        %3888 = vadd.xlane.f32.xlu0 %v3873
        %v3889 = vpop.xlane.xlu0 %3888
        %3890 = vadd.xlane.f32.xlu0 %v3875
        %v3891 = vpop.xlane.xlu0 %3890
        %3892 = vadd.xlane.f32.xlu0 %v3877
        %v3893 = vpop.xlane.xlu0 %3892
        %v3894 = vrcp.pop %v3879
        %v3895 = vrcp.pop %v3881
        %v3896 = vrcp.pop %v3883
        %v3897 = vrcp.pop %v3885
        %v3898 = vrcp.pop %v3887
        %v3899 = vrcp.pop %v3889
        %v3900 = vrcp.pop %v3891
        %v3901 = vrcp.pop %v3893
        %v3902 = vmul.f32 %v3863, %v3894
        %v3903 = vmul.f32 %v3865, %v3895
        %v3904 = vmul.f32 %v3867, %v3896
        %v3905 = vmul.f32 %v3869, %v3897
        %v3906 = vmul.f32 %v3871, %v3898
        %v3907 = vmul.f32 %v3873, %v3899
        %v3908 = vmul.f32 %v3875, %v3900
        %v3909 = vmul.f32 %v3877, %v3901
        %v3910 = vpack.c.bf16 %v3903, %v3902
        %v3911 = vpack.c.bf16 %v3905, %v3904
        %v3912 = vpack.c.bf16 %v3907, %v3906
        %v3913 = vpack.c.bf16 %v3909, %v3908
        %3914 = vrot.lane.b32.xlu0 %v3594, 96
        %v3915 = vpop.permute.xlu0 %3914
        %3916 = vrot.lane.b32.xlu0 %v3595, 96
        %v3917 = vpop.permute.xlu0 %3916
        %3918 = vrot.lane.b32.xlu0 %v3596, 96
        %v3919 = vpop.permute.xlu0 %3918
        %3920 = vrot.lane.b32.xlu0 %v3597, 96
        %v3921 = vpop.permute.xlu0 %3920
        %3922 = vrot.lane.b32.xlu0 %v3598, 96
        %v3923 = vpop.permute.xlu0 %3922
        %3924 = vrot.lane.b32.xlu0 %v3599, 96
        %v3925 = vpop.permute.xlu0 %3924
        %3926 = vrot.lane.b32.xlu0 %v3600, 96
        %v3927 = vpop.permute.xlu0 %3926
        %3928 = vrot.lane.b32.xlu0 %v3601, 96
        %v3929 = vpop.permute.xlu0 %3928
        %3938 = vmatpush.bf16.msra.mxu0 %v3929
        %3939 = vmatpush.bf16.msra.mxu0 %v3927
        %3940 = vmatpush.bf16.msra.mxu0 %v3925
        %3941 = vmatpush.bf16.msra.mxu0 %v3923
        %3942 = vmatpush.bf16.msra.mxu0 %v3921
        %3943 = vmatpush.bf16.msra.mxu0 %v3919
        %3944 = vmatpush.bf16.msra.mxu0 %v3917
        %3945 = vmatpush.bf16.msra.mxu0 %v3915
        %3946 = vmatmul.bf16.gmra.mxu0 %v3910
        %v3947 = vpop.f32.mrf.mxu0
        %v3948 = vadd.f32 0.0, %v3947
        %v3949 = vpop.f32.mrf.mxu0
        %v3950 = vadd.f32 0.0, %v3949
        %3951 = vmatmul.bf16.gmra.mxu0 %v3911
        %v3952 = vpop.f32.mrf.mxu0
        %v3953 = vadd.f32 0.0, %v3952
        %v3954 = vpop.f32.mrf.mxu0
        %v3955 = vadd.f32 0.0, %v3954
        %3956 = vmatmul.bf16.gmra.mxu0 %v3912
        %v3957 = vpop.f32.mrf.mxu0
        %v3958 = vadd.f32 0.0, %v3957
        %v3959 = vpop.f32.mrf.mxu0
        %v3960 = vadd.f32 0.0, %v3959
        %3961 = vmatmul.bf16.gmra.mxu0 %v3913
        %v3962 = vpop.f32.mrf.mxu0
        %v3963 = vadd.f32 0.0, %v3962
        %v3964 = vpop.f32.mrf.mxu0
        %v3965 = vadd.f32 0.0, %v3964
        %3966 = vdwg.mxu0
        %v3967 = vpack.c.bf16 %v3950, %v3948
        %v3968 = vpack.c.bf16 %v3955, %v3953
        %v3969 = vpack.c.bf16 %v3960, %v3958
        %v3970 = vpack.c.bf16 %v3965, %v3963
        %v3975 = vunpack.c.l.b16 %v1988
        %v3976 = vunpack.c.h.b16 %v1988
        %v3977 = vunpack.c.l.b16 %v1989
        %v3978 = vunpack.c.h.b16 %v1989
        %v3979 = vunpack.c.l.b16 %v1990
        %v3980 = vunpack.c.h.b16 %v1990
        %v3981 = vunpack.c.l.b16 %v1991
        %v3982 = vunpack.c.h.b16 %v1991
        %v3983 = vpack.c.b16 %v3977, %v3975
        %v3984 = vpack.c.b16 %v3978, %v3976
        %v3985 = vpack.c.b16 %v3981, %v3979
        %v3986 = vpack.c.b16 %v3982, %v3980
        %v3992 = vsel %vm2120, %v3967, 0
        %v3995 = vsel %vm2120, %v3968, 0
        %v3998 = vsel %vm2120, %v3969, 0
        %v4001 = vsel %vm2120, %v3970, 0
        %4003 = vmatpush.bf16.msra.mxu0 0
        %4004 = vmatpush.bf16.msra.mxu0 0
        %4005 = vmatpush.bf16.msra.mxu0 0
        %4006 = vmatpush.bf16.msra.mxu0 0
        %4007 = vmatpush.bf16.msra.mxu0 0
        %4008 = vmatpush.bf16.msra.mxu0 0
        %4009 = vmatpush.bf16.msra.mxu0 %v3985
        %4010 = vmatpush.bf16.msra.mxu0 %v3983
        %4011 = vmatmul.bf16.gmra.mxu0 %v3992
        %v4012 = vpop.f32.mrf.mxu0
        %v4013 = vadd.f32 0.0, %v4012
        %v4014 = vpop.f32.mrf.mxu0
        %v4015 = vadd.f32 0.0, %v4014
        %4016 = vmatmul.bf16.gmra.mxu0 %v3995
        %v4017 = vpop.f32.mrf.mxu0
        %v4018 = vadd.f32 0.0, %v4017
        %v4019 = vpop.f32.mrf.mxu0
        %v4020 = vadd.f32 0.0, %v4019
        %4021 = vmatmul.bf16.gmra.mxu0 %v3998
        %v4022 = vpop.f32.mrf.mxu0
        %v4023 = vadd.f32 0.0, %v4022
        %v4024 = vpop.f32.mrf.mxu0
        %v4025 = vadd.f32 0.0, %v4024
        %4026 = vmatmul.bf16.gmra.mxu0 %v4001
        %v4027 = vpop.f32.mrf.mxu0
        %v4028 = vadd.f32 0.0, %v4027
        %v4029 = vpop.f32.mrf.mxu0
        %v4030 = vadd.f32 0.0, %v4029
        %4031 = vdwg.mxu0
        %4032 = vmatpush.bf16.msra.mxu0 0
        %4033 = vmatpush.bf16.msra.mxu0 0
        %4034 = vmatpush.bf16.msra.mxu0 0
        %4035 = vmatpush.bf16.msra.mxu0 0
        %4036 = vmatpush.bf16.msra.mxu0 0
        %4037 = vmatpush.bf16.msra.mxu0 0
        %4038 = vmatpush.bf16.msra.mxu0 %v3986
        %4039 = vmatpush.bf16.msra.mxu0 %v3984
        %4040 = vmatmul.bf16.gmra.mxu0 %v3992
        %v4041 = vpop.f32.mrf.mxu0
        %v4042 = vadd.f32 0.0, %v4041
        %v4043 = vpop.f32.mrf.mxu0
        %v4044 = vadd.f32 0.0, %v4043
        %4045 = vmatmul.bf16.gmra.mxu0 %v3995
        %v4046 = vpop.f32.mrf.mxu0
        %v4047 = vadd.f32 0.0, %v4046
        %v4048 = vpop.f32.mrf.mxu0
        %v4049 = vadd.f32 0.0, %v4048
        %4050 = vmatmul.bf16.gmra.mxu0 %v3998
        %v4051 = vpop.f32.mrf.mxu0
        %v4052 = vadd.f32 0.0, %v4051
        %v4053 = vpop.f32.mrf.mxu0
        %v4054 = vadd.f32 0.0, %v4053
        %4055 = vmatmul.bf16.gmra.mxu0 %v4001
        %v4056 = vpop.f32.mrf.mxu0
        %v4057 = vadd.f32 0.0, %v4056
        %v4058 = vpop.f32.mrf.mxu0
        %v4059 = vadd.f32 0.0, %v4058
        %4060 = vdwg.mxu0
        %v4061 = vadd.f32 %v3733, %v4013
        %v4062 = vadd.f32 %v3734, %v4042
        %v4063 = vadd.f32 %v3735, %v4015
        %v4064 = vadd.f32 %v3736, %v4044
        %v4065 = vadd.f32 %v3737, %v4018
        %v4066 = vadd.f32 %v3738, %v4047
        %v4067 = vadd.f32 %v3739, %v4020
        %v4068 = vadd.f32 %v3740, %v4049
        %v4069 = vadd.f32 %v3741, %v4023
        %v4070 = vadd.f32 %v3742, %v4052
        %v4071 = vadd.f32 %v3743, %v4025
        %v4072 = vadd.f32 %v3744, %v4054
        %v4073 = vadd.f32 %v3745, %v4028
        %v4074 = vadd.f32 %v3746, %v4057
        %v4075 = vadd.f32 %v3747, %v4030
        %v4076 = vadd.f32 %v3748, %v4059
        %4077 = vrot.lane.b32.xlu0 %v3409, 64
        %v4078 = vpop.permute.xlu0 %4077
        %4079 = vrot.lane.b32.xlu0 %v3410, 64
        %v4080 = vpop.permute.xlu0 %4079
        %4081 = vrot.lane.b32.xlu0 %v3411, 64
        %v4082 = vpop.permute.xlu0 %4081
        %4083 = vrot.lane.b32.xlu0 %v3412, 64
        %v4084 = vpop.permute.xlu0 %4083
        %4085 = vrot.lane.b32.xlu0 %v3429, 64
        %v4086 = vpop.permute.xlu0 %4085
        %4087 = vrot.lane.b32.xlu0 %v3430, 64
        %v4088 = vpop.permute.xlu0 %4087
        %4089 = vrot.lane.b32.xlu0 %v3431, 64
        %v4090 = vpop.permute.xlu0 %4089
        %4091 = vrot.lane.b32.xlu0 %v3432, 64
        %v4092 = vpop.permute.xlu0 %4091
        %4093 = vrot.lane.b32.xlu0 %v3433, 64
        %v4094 = vpop.permute.xlu0 %4093
        %4095 = vrot.lane.b32.xlu0 %v3434, 64
        %v4096 = vpop.permute.xlu0 %4095
        %4097 = vrot.lane.b32.xlu0 %v3435, 64
        %v4098 = vpop.permute.xlu0 %4097
        %4099 = vrot.lane.b32.xlu0 %v3436, 64
        %v4100 = vpop.permute.xlu0 %4099
        %v4102 = vsel %vm2120, %v4078, 0
        %v4105 = vsel %vm2120, %v4080, 0
        %v4108 = vsel %vm2120, %v4082, 0
        %v4111 = vsel %vm2120, %v4084, 0
        %v4114 = vsel %vm2120, %v4086, 0
        %v4117 = vsel %vm2120, %v4088, 0
        %v4120 = vsel %vm2120, %v4090, 0
        %v4123 = vsel %vm2120, %v4092, 0
        %v4126 = vsel %vm2120, %v4094, 0
        %v4129 = vsel %vm2120, %v4096, 0
        %v4132 = vsel %vm2120, %v4098, 0
        %v4135 = vsel %vm2120, %v4100, 0
        %4137 = vmatpush.bf16.xpose.msra.mxu0 %v4135
        %4138 = vmatpush.bf16.xpose.msra.mxu0 %v4132
        %4139 = vmatpush.bf16.xpose.msra.mxu0 %v4129
        %4140 = vmatpush.bf16.xpose.msra.mxu0 %v4126
        %4141 = vmatpush.bf16.xpose.msra.mxu0 %v4123
        %4142 = vmatpush.bf16.xpose.msra.mxu0 %v4120
        %4143 = vmatpush.bf16.xpose.msra.mxu0 %v4117
        %4144 = vmatpush.bf16.xpose.msra.mxu0 %v4114
        %4145 = vmatmul.bf16.gmra.mxu0 %v4102
        %v4146 = vpop.f32.mrf.mxu0
        %v4147 = vadd.f32 %v2058, %v4146
        %v4148 = vpop.f32.mrf.mxu0
        %v4149 = vadd.f32 %v2058, %v4148
        %4150 = vmatmul.bf16.gmra.mxu0 %v4105
        %v4151 = vpop.f32.mrf.mxu0
        %v4152 = vadd.f32 %v2058, %v4151
        %v4153 = vpop.f32.mrf.mxu0
        %v4154 = vadd.f32 %v2058, %v4153
        %4155 = vmatmul.bf16.gmra.mxu0 %v4108
        %v4156 = vpop.f32.mrf.mxu0
        %v4157 = vadd.f32 %v2058, %v4156
        %v4158 = vpop.f32.mrf.mxu0
        %v4159 = vadd.f32 %v2058, %v4158
        %4160 = vmatmul.bf16.gmra.mxu0 %v4111
        %v4161 = vpop.f32.mrf.mxu0
        %v4162 = vadd.f32 %v2058, %v4161
        %v4163 = vpop.f32.mrf.mxu0
        %v4164 = vadd.f32 %v2058, %v4163
        %4165 = vdwg.mxu0
        %4166 = vmax.xlane.f32.xlu0 %v4147
        %v4167 = vpop.xlane.xlu0 %4166
        %4168 = vmax.xlane.f32.xlu0 %v4149
        %v4169 = vpop.xlane.xlu0 %4168
        %4170 = vmax.xlane.f32.xlu0 %v4152
        %v4171 = vpop.xlane.xlu0 %4170
        %4172 = vmax.xlane.f32.xlu0 %v4154
        %v4173 = vpop.xlane.xlu0 %4172
        %4174 = vmax.xlane.f32.xlu0 %v4157
        %v4175 = vpop.xlane.xlu0 %4174
        %4176 = vmax.xlane.f32.xlu0 %v4159
        %v4177 = vpop.xlane.xlu0 %4176
        %4178 = vmax.xlane.f32.xlu0 %v4162
        %v4179 = vpop.xlane.xlu0 %4178
        %4180 = vmax.xlane.f32.xlu0 %v4164
        %v4181 = vpop.xlane.xlu0 %4180
        %v4182 = vsub.f32 %v4147, %v4167
        %v4183 = vsub.f32 %v4149, %v4169
        %v4184 = vsub.f32 %v4152, %v4171
        %v4185 = vsub.f32 %v4154, %v4173
        %v4186 = vsub.f32 %v4157, %v4175
        %v4187 = vsub.f32 %v4159, %v4177
        %v4188 = vsub.f32 %v4162, %v4179
        %v4189 = vsub.f32 %v4164, %v4181
        %v4190 = vmul.f32 %v4182, 1.442695
        %v4191 = vpow.pop %v4190
        %v4192 = vmul.f32 %v4183, 1.442695
        %v4193 = vpow.pop %v4192
        %v4194 = vmul.f32 %v4184, 1.442695
        %v4195 = vpow.pop %v4194
        %v4196 = vmul.f32 %v4185, 1.442695
        %v4197 = vpow.pop %v4196
        %v4198 = vmul.f32 %v4186, 1.442695
        %v4199 = vpow.pop %v4198
        %v4200 = vmul.f32 %v4187, 1.442695
        %v4201 = vpow.pop %v4200
        %v4202 = vmul.f32 %v4188, 1.442695
        %v4203 = vpow.pop %v4202
        %v4204 = vmul.f32 %v4189, 1.442695
        %v4205 = vpow.pop %v4204
        %4206 = vadd.xlane.f32.xlu0 %v4191
        %v4207 = vpop.xlane.xlu0 %4206
        %4208 = vadd.xlane.f32.xlu0 %v4193
        %v4209 = vpop.xlane.xlu0 %4208
        %4210 = vadd.xlane.f32.xlu0 %v4195
        %v4211 = vpop.xlane.xlu0 %4210
        %4212 = vadd.xlane.f32.xlu0 %v4197
        %v4213 = vpop.xlane.xlu0 %4212
        %4214 = vadd.xlane.f32.xlu0 %v4199
        %v4215 = vpop.xlane.xlu0 %4214
        %4216 = vadd.xlane.f32.xlu0 %v4201
        %v4217 = vpop.xlane.xlu0 %4216
        %4218 = vadd.xlane.f32.xlu0 %v4203
        %v4219 = vpop.xlane.xlu0 %4218
        %4220 = vadd.xlane.f32.xlu0 %v4205
        %v4221 = vpop.xlane.xlu0 %4220
        %v4222 = vrcp.pop %v4207
        %v4223 = vrcp.pop %v4209
        %v4224 = vrcp.pop %v4211
        %v4225 = vrcp.pop %v4213
        %v4226 = vrcp.pop %v4215
        %v4227 = vrcp.pop %v4217
        %v4228 = vrcp.pop %v4219
        %v4229 = vrcp.pop %v4221
        %v4230 = vmul.f32 %v4191, %v4222
        %v4231 = vmul.f32 %v4193, %v4223
        %v4232 = vmul.f32 %v4195, %v4224
        %v4233 = vmul.f32 %v4197, %v4225
        %v4234 = vmul.f32 %v4199, %v4226
        %v4235 = vmul.f32 %v4201, %v4227
        %v4236 = vmul.f32 %v4203, %v4228
        %v4237 = vmul.f32 %v4205, %v4229
        %v4238 = vpack.c.bf16 %v4231, %v4230
        %v4239 = vpack.c.bf16 %v4233, %v4232
        %v4240 = vpack.c.bf16 %v4235, %v4234
        %v4241 = vpack.c.bf16 %v4237, %v4236
        %4242 = vrot.lane.b32.xlu0 %v3594, 64
        %v4243 = vpop.permute.xlu0 %4242
        %4244 = vrot.lane.b32.xlu0 %v3595, 64
        %v4245 = vpop.permute.xlu0 %4244
        %4246 = vrot.lane.b32.xlu0 %v3596, 64
        %v4247 = vpop.permute.xlu0 %4246
        %4248 = vrot.lane.b32.xlu0 %v3597, 64
        %v4249 = vpop.permute.xlu0 %4248
        %4250 = vrot.lane.b32.xlu0 %v3598, 64
        %v4251 = vpop.permute.xlu0 %4250
        %4252 = vrot.lane.b32.xlu0 %v3599, 64
        %v4253 = vpop.permute.xlu0 %4252
        %4254 = vrot.lane.b32.xlu0 %v3600, 64
        %v4255 = vpop.permute.xlu0 %4254
        %4256 = vrot.lane.b32.xlu0 %v3601, 64
        %v4257 = vpop.permute.xlu0 %4256
        %4266 = vmatpush.bf16.msra.mxu0 %v4257
        %4267 = vmatpush.bf16.msra.mxu0 %v4255
        %4268 = vmatpush.bf16.msra.mxu0 %v4253
        %4269 = vmatpush.bf16.msra.mxu0 %v4251
        %4270 = vmatpush.bf16.msra.mxu0 %v4249
        %4271 = vmatpush.bf16.msra.mxu0 %v4247
        %4272 = vmatpush.bf16.msra.mxu0 %v4245
        %4273 = vmatpush.bf16.msra.mxu0 %v4243
        %4274 = vmatmul.bf16.gmra.mxu0 %v4238
        %v4275 = vpop.f32.mrf.mxu0
        %v4276 = vadd.f32 0.0, %v4275
        %v4277 = vpop.f32.mrf.mxu0
        %v4278 = vadd.f32 0.0, %v4277
        %4279 = vmatmul.bf16.gmra.mxu0 %v4239
        %v4280 = vpop.f32.mrf.mxu0
        %v4281 = vadd.f32 0.0, %v4280
        %v4282 = vpop.f32.mrf.mxu0
        %v4283 = vadd.f32 0.0, %v4282
        %4284 = vmatmul.bf16.gmra.mxu0 %v4240
        %v4285 = vpop.f32.mrf.mxu0
        %v4286 = vadd.f32 0.0, %v4285
        %v4287 = vpop.f32.mrf.mxu0
        %v4288 = vadd.f32 0.0, %v4287
        %4289 = vmatmul.bf16.gmra.mxu0 %v4241
        %v4290 = vpop.f32.mrf.mxu0
        %v4291 = vadd.f32 0.0, %v4290
        %v4292 = vpop.f32.mrf.mxu0
        %v4293 = vadd.f32 0.0, %v4292
        %4294 = vdwg.mxu0
        %v4295 = vpack.c.bf16 %v4278, %v4276
        %v4296 = vpack.c.bf16 %v4283, %v4281
        %v4297 = vpack.c.bf16 %v4288, %v4286
        %v4298 = vpack.c.bf16 %v4293, %v4291
        %v4303 = vunpack.c.l.b16 %v1992
        %v4304 = vunpack.c.h.b16 %v1992
        %v4305 = vunpack.c.l.b16 %v1993
        %v4306 = vunpack.c.h.b16 %v1993
        %v4307 = vunpack.c.l.b16 %v1994
        %v4308 = vunpack.c.h.b16 %v1994
        %v4309 = vunpack.c.l.b16 %v1995
        %v4310 = vunpack.c.h.b16 %v1995
        %v4311 = vpack.c.b16 %v4305, %v4303
        %v4312 = vpack.c.b16 %v4306, %v4304
        %v4313 = vpack.c.b16 %v4309, %v4307
        %v4314 = vpack.c.b16 %v4310, %v4308
        %v4320 = vsel %vm2120, %v4295, 0
        %v4323 = vsel %vm2120, %v4296, 0
        %v4326 = vsel %vm2120, %v4297, 0
        %v4329 = vsel %vm2120, %v4298, 0
        %4331 = vmatpush.bf16.msra.mxu0 0
        %4332 = vmatpush.bf16.msra.mxu0 0
        %4333 = vmatpush.bf16.msra.mxu0 0
        %4334 = vmatpush.bf16.msra.mxu0 0
        %4335 = vmatpush.bf16.msra.mxu0 0
        %4336 = vmatpush.bf16.msra.mxu0 0
        %4337 = vmatpush.bf16.msra.mxu0 %v4313
        %4338 = vmatpush.bf16.msra.mxu0 %v4311
        %4339 = vmatmul.bf16.gmra.mxu0 %v4320
        %v4340 = vpop.f32.mrf.mxu0
        %v4341 = vadd.f32 0.0, %v4340
        %v4342 = vpop.f32.mrf.mxu0
        %v4343 = vadd.f32 0.0, %v4342
        %4344 = vmatmul.bf16.gmra.mxu0 %v4323
        %v4345 = vpop.f32.mrf.mxu0
        %v4346 = vadd.f32 0.0, %v4345
        %v4347 = vpop.f32.mrf.mxu0
        %v4348 = vadd.f32 0.0, %v4347
        %4349 = vmatmul.bf16.gmra.mxu0 %v4326
        %v4350 = vpop.f32.mrf.mxu0
        %v4351 = vadd.f32 0.0, %v4350
        %v4352 = vpop.f32.mrf.mxu0
        %v4353 = vadd.f32 0.0, %v4352
        %4354 = vmatmul.bf16.gmra.mxu0 %v4329
        %v4355 = vpop.f32.mrf.mxu0
        %v4356 = vadd.f32 0.0, %v4355
        %v4357 = vpop.f32.mrf.mxu0
        %v4358 = vadd.f32 0.0, %v4357
        %4359 = vdwg.mxu0
        %4360 = vmatpush.bf16.msra.mxu0 0
        %4361 = vmatpush.bf16.msra.mxu0 0
        %4362 = vmatpush.bf16.msra.mxu0 0
        %4363 = vmatpush.bf16.msra.mxu0 0
        %4364 = vmatpush.bf16.msra.mxu0 0
        %4365 = vmatpush.bf16.msra.mxu0 0
        %4366 = vmatpush.bf16.msra.mxu0 %v4314
        %4367 = vmatpush.bf16.msra.mxu0 %v4312
        %4368 = vmatmul.bf16.gmra.mxu0 %v4320
        %v4369 = vpop.f32.mrf.mxu0
        %v4370 = vadd.f32 0.0, %v4369
        %v4371 = vpop.f32.mrf.mxu0
        %v4372 = vadd.f32 0.0, %v4371
        %4373 = vmatmul.bf16.gmra.mxu0 %v4323
        %v4374 = vpop.f32.mrf.mxu0
        %v4375 = vadd.f32 0.0, %v4374
        %v4376 = vpop.f32.mrf.mxu0
        %v4377 = vadd.f32 0.0, %v4376
        %4378 = vmatmul.bf16.gmra.mxu0 %v4326
        %v4379 = vpop.f32.mrf.mxu0
        %v4380 = vadd.f32 0.0, %v4379
        %v4381 = vpop.f32.mrf.mxu0
        %v4382 = vadd.f32 0.0, %v4381
        %4383 = vmatmul.bf16.gmra.mxu0 %v4329
        %v4384 = vpop.f32.mrf.mxu0
        %v4385 = vadd.f32 0.0, %v4384
        %v4386 = vpop.f32.mrf.mxu0
        %v4387 = vadd.f32 0.0, %v4386
        %4388 = vdwg.mxu0
        %v4389 = vadd.f32 %v4061, %v4341
        %v4390 = vadd.f32 %v4062, %v4370
        %v4391 = vadd.f32 %v4063, %v4343
        %v4392 = vadd.f32 %v4064, %v4372
        %v4393 = vadd.f32 %v4065, %v4346
        %v4394 = vadd.f32 %v4066, %v4375
        %v4395 = vadd.f32 %v4067, %v4348
        %v4396 = vadd.f32 %v4068, %v4377
        %v4397 = vadd.f32 %v4069, %v4351
        %v4398 = vadd.f32 %v4070, %v4380
        %v4399 = vadd.f32 %v4071, %v4353
        %v4400 = vadd.f32 %v4072, %v4382
        %v4401 = vadd.f32 %v4073, %v4356
        %v4402 = vadd.f32 %v4074, %v4385
        %v4403 = vadd.f32 %v4075, %v4358
        %v4404 = vadd.f32 %v4076, %v4387
        %4405 = vrot.lane.b32.xlu0 %v3409, 32
        %v4406 = vpop.permute.xlu0 %4405
        %4407 = vrot.lane.b32.xlu0 %v3410, 32
        %v4408 = vpop.permute.xlu0 %4407
        %4409 = vrot.lane.b32.xlu0 %v3411, 32
        %v4410 = vpop.permute.xlu0 %4409
        %4411 = vrot.lane.b32.xlu0 %v3412, 32
        %v4412 = vpop.permute.xlu0 %4411
        %4413 = vrot.lane.b32.xlu0 %v3429, 32
        %v4414 = vpop.permute.xlu0 %4413
        %4415 = vrot.lane.b32.xlu0 %v3430, 32
        %v4416 = vpop.permute.xlu0 %4415
        %4417 = vrot.lane.b32.xlu0 %v3431, 32
        %v4418 = vpop.permute.xlu0 %4417
        %4419 = vrot.lane.b32.xlu0 %v3432, 32
        %v4420 = vpop.permute.xlu0 %4419
        %4421 = vrot.lane.b32.xlu0 %v3433, 32
        %v4422 = vpop.permute.xlu0 %4421
        %4423 = vrot.lane.b32.xlu0 %v3434, 32
        %v4424 = vpop.permute.xlu0 %4423
        %4425 = vrot.lane.b32.xlu0 %v3435, 32
        %v4426 = vpop.permute.xlu0 %4425
        %4427 = vrot.lane.b32.xlu0 %v3436, 32
        %v4428 = vpop.permute.xlu0 %4427
        %v4430 = vsel %vm2120, %v4406, 0
        %v4433 = vsel %vm2120, %v4408, 0
        %v4436 = vsel %vm2120, %v4410, 0
        %v4439 = vsel %vm2120, %v4412, 0
        %v4442 = vsel %vm2120, %v4414, 0
        %v4445 = vsel %vm2120, %v4416, 0
        %v4448 = vsel %vm2120, %v4418, 0
        %v4451 = vsel %vm2120, %v4420, 0
        %v4454 = vsel %vm2120, %v4422, 0
        %v4457 = vsel %vm2120, %v4424, 0
        %v4460 = vsel %vm2120, %v4426, 0
        %v4463 = vsel %vm2120, %v4428, 0
        %4465 = vmatpush.bf16.xpose.msra.mxu0 %v4463
        %4466 = vmatpush.bf16.xpose.msra.mxu0 %v4460
        %4467 = vmatpush.bf16.xpose.msra.mxu0 %v4457
        %4468 = vmatpush.bf16.xpose.msra.mxu0 %v4454
        %4469 = vmatpush.bf16.xpose.msra.mxu0 %v4451
        %4470 = vmatpush.bf16.xpose.msra.mxu0 %v4448
        %4471 = vmatpush.bf16.xpose.msra.mxu0 %v4445
        %4472 = vmatpush.bf16.xpose.msra.mxu0 %v4442
        %4473 = vmatmul.bf16.gmra.mxu0 %v4430
        %v4474 = vpop.f32.mrf.mxu0
        %v4475 = vadd.f32 %v2058, %v4474
        %v4476 = vpop.f32.mrf.mxu0
        %v4477 = vadd.f32 %v2058, %v4476
        %4478 = vmatmul.bf16.gmra.mxu0 %v4433
        %v4479 = vpop.f32.mrf.mxu0
        %v4480 = vadd.f32 %v2058, %v4479
        %v4481 = vpop.f32.mrf.mxu0
        %v4482 = vadd.f32 %v2058, %v4481
        %4483 = vmatmul.bf16.gmra.mxu0 %v4436
        %v4484 = vpop.f32.mrf.mxu0
        %v4485 = vadd.f32 %v2058, %v4484
        %v4486 = vpop.f32.mrf.mxu0
        %v4487 = vadd.f32 %v2058, %v4486
        %4488 = vmatmul.bf16.gmra.mxu0 %v4439
        %v4489 = vpop.f32.mrf.mxu0
        %v4490 = vadd.f32 %v2058, %v4489
        %v4491 = vpop.f32.mrf.mxu0
        %v4492 = vadd.f32 %v2058, %v4491
        %4493 = vdwg.mxu0
        %4494 = vmax.xlane.f32.xlu0 %v4475
        %v4495 = vpop.xlane.xlu0 %4494
        %4496 = vmax.xlane.f32.xlu0 %v4477
        %v4497 = vpop.xlane.xlu0 %4496
        %4498 = vmax.xlane.f32.xlu0 %v4480
        %v4499 = vpop.xlane.xlu0 %4498
        %4500 = vmax.xlane.f32.xlu0 %v4482
        %v4501 = vpop.xlane.xlu0 %4500
        %4502 = vmax.xlane.f32.xlu0 %v4485
        %v4503 = vpop.xlane.xlu0 %4502
        %4504 = vmax.xlane.f32.xlu0 %v4487
        %v4505 = vpop.xlane.xlu0 %4504
        %4506 = vmax.xlane.f32.xlu0 %v4490
        %v4507 = vpop.xlane.xlu0 %4506
        %4508 = vmax.xlane.f32.xlu0 %v4492
        %v4509 = vpop.xlane.xlu0 %4508
        %v4510 = vsub.f32 %v4475, %v4495
        %v4511 = vsub.f32 %v4477, %v4497
        %v4512 = vsub.f32 %v4480, %v4499
        %v4513 = vsub.f32 %v4482, %v4501
        %v4514 = vsub.f32 %v4485, %v4503
        %v4515 = vsub.f32 %v4487, %v4505
        %v4516 = vsub.f32 %v4490, %v4507
        %v4517 = vsub.f32 %v4492, %v4509
        %v4518 = vmul.f32 %v4510, 1.442695
        %v4519 = vpow.pop %v4518
        %v4520 = vmul.f32 %v4511, 1.442695
        %v4521 = vpow.pop %v4520
        %v4522 = vmul.f32 %v4512, 1.442695
        %v4523 = vpow.pop %v4522
        %v4524 = vmul.f32 %v4513, 1.442695
        %v4525 = vpow.pop %v4524
        %v4526 = vmul.f32 %v4514, 1.442695
        %v4527 = vpow.pop %v4526
        %v4528 = vmul.f32 %v4515, 1.442695
        %v4529 = vpow.pop %v4528
        %v4530 = vmul.f32 %v4516, 1.442695
        %v4531 = vpow.pop %v4530
        %v4532 = vmul.f32 %v4517, 1.442695
        %v4533 = vpow.pop %v4532
        %4534 = vadd.xlane.f32.xlu0 %v4519
        %v4535 = vpop.xlane.xlu0 %4534
        %4536 = vadd.xlane.f32.xlu0 %v4521
        %v4537 = vpop.xlane.xlu0 %4536
        %4538 = vadd.xlane.f32.xlu0 %v4523
        %v4539 = vpop.xlane.xlu0 %4538
        %4540 = vadd.xlane.f32.xlu0 %v4525
        %v4541 = vpop.xlane.xlu0 %4540
        %4542 = vadd.xlane.f32.xlu0 %v4527
        %v4543 = vpop.xlane.xlu0 %4542
        %4544 = vadd.xlane.f32.xlu0 %v4529
        %v4545 = vpop.xlane.xlu0 %4544
        %4546 = vadd.xlane.f32.xlu0 %v4531
        %v4547 = vpop.xlane.xlu0 %4546
        %4548 = vadd.xlane.f32.xlu0 %v4533
        %v4549 = vpop.xlane.xlu0 %4548
        %v4550 = vrcp.pop %v4535
        %v4551 = vrcp.pop %v4537
        %v4552 = vrcp.pop %v4539
        %v4553 = vrcp.pop %v4541
        %v4554 = vrcp.pop %v4543
        %v4555 = vrcp.pop %v4545
        %v4556 = vrcp.pop %v4547
        %v4557 = vrcp.pop %v4549
        %v4558 = vmul.f32 %v4519, %v4550
        %v4559 = vmul.f32 %v4521, %v4551
        %v4560 = vmul.f32 %v4523, %v4552
        %v4561 = vmul.f32 %v4525, %v4553
        %v4562 = vmul.f32 %v4527, %v4554
        %v4563 = vmul.f32 %v4529, %v4555
        %v4564 = vmul.f32 %v4531, %v4556
        %v4565 = vmul.f32 %v4533, %v4557
        %v4566 = vpack.c.bf16 %v4559, %v4558
        %v4567 = vpack.c.bf16 %v4561, %v4560
        %v4568 = vpack.c.bf16 %v4563, %v4562
        %v4569 = vpack.c.bf16 %v4565, %v4564
        %4570 = vrot.lane.b32.xlu0 %v3594, 32
        %v4571 = vpop.permute.xlu0 %4570
        %4572 = vrot.lane.b32.xlu0 %v3595, 32
        %v4573 = vpop.permute.xlu0 %4572
        %4574 = vrot.lane.b32.xlu0 %v3596, 32
        %v4575 = vpop.permute.xlu0 %4574
        %4576 = vrot.lane.b32.xlu0 %v3597, 32
        %v4577 = vpop.permute.xlu0 %4576
        %4578 = vrot.lane.b32.xlu0 %v3598, 32
        %v4579 = vpop.permute.xlu0 %4578
        %4580 = vrot.lane.b32.xlu0 %v3599, 32
        %v4581 = vpop.permute.xlu0 %4580
        %4582 = vrot.lane.b32.xlu0 %v3600, 32
        %v4583 = vpop.permute.xlu0 %4582
        %4584 = vrot.lane.b32.xlu0 %v3601, 32
        %v4585 = vpop.permute.xlu0 %4584
        %4594 = vmatpush.bf16.msra.mxu0 %v4585
        %4595 = vmatpush.bf16.msra.mxu0 %v4583
        %4596 = vmatpush.bf16.msra.mxu0 %v4581
        %4597 = vmatpush.bf16.msra.mxu0 %v4579
        %4598 = vmatpush.bf16.msra.mxu0 %v4577
        %4599 = vmatpush.bf16.msra.mxu0 %v4575
        %4600 = vmatpush.bf16.msra.mxu0 %v4573
        %4601 = vmatpush.bf16.msra.mxu0 %v4571
        %4602 = vmatmul.bf16.gmra.mxu0 %v4566
        %v4603 = vpop.f32.mrf.mxu0
        %v4604 = vadd.f32 0.0, %v4603
        %v4605 = vpop.f32.mrf.mxu0
        %v4606 = vadd.f32 0.0, %v4605
        %4607 = vmatmul.bf16.gmra.mxu0 %v4567
        %v4608 = vpop.f32.mrf.mxu0
        %v4609 = vadd.f32 0.0, %v4608
        %v4610 = vpop.f32.mrf.mxu0
        %v4611 = vadd.f32 0.0, %v4610
        %4612 = vmatmul.bf16.gmra.mxu0 %v4568
        %v4613 = vpop.f32.mrf.mxu0
        %v4614 = vadd.f32 0.0, %v4613
        %v4615 = vpop.f32.mrf.mxu0
        %v4616 = vadd.f32 0.0, %v4615
        %4617 = vmatmul.bf16.gmra.mxu0 %v4569
        %v4618 = vpop.f32.mrf.mxu0
        %v4619 = vadd.f32 0.0, %v4618
        %v4620 = vpop.f32.mrf.mxu0
        %v4621 = vadd.f32 0.0, %v4620
        %4622 = vdwg.mxu0
        %v4623 = vpack.c.bf16 %v4606, %v4604
        %v4624 = vpack.c.bf16 %v4611, %v4609
        %v4625 = vpack.c.bf16 %v4616, %v4614
        %v4626 = vpack.c.bf16 %v4621, %v4619
        %v4631 = vunpack.c.l.b16 %v1996
        %v4632 = vunpack.c.h.b16 %v1996
        %v4633 = vunpack.c.l.b16 %v1997
        %v4634 = vunpack.c.h.b16 %v1997
        %v4635 = vunpack.c.l.b16 %v1998
        %v4636 = vunpack.c.h.b16 %v1998
        %v4637 = vunpack.c.l.b16 %v1999
        %v4638 = vunpack.c.h.b16 %v1999
        %v4639 = vpack.c.b16 %v4633, %v4631
        %v4640 = vpack.c.b16 %v4634, %v4632
        %v4641 = vpack.c.b16 %v4637, %v4635
        %v4642 = vpack.c.b16 %v4638, %v4636
        %v4648 = vsel %vm2120, %v4623, 0
        %v4651 = vsel %vm2120, %v4624, 0
        %v4654 = vsel %vm2120, %v4625, 0
        %v4657 = vsel %vm2120, %v4626, 0
        %4659 = vmatpush.bf16.msra.mxu0 0
        %4660 = vmatpush.bf16.msra.mxu0 0
        %4661 = vmatpush.bf16.msra.mxu0 0
        %4662 = vmatpush.bf16.msra.mxu0 0
        %4663 = vmatpush.bf16.msra.mxu0 0
        %4664 = vmatpush.bf16.msra.mxu0 0
        %4665 = vmatpush.bf16.msra.mxu0 %v4641
        %4666 = vmatpush.bf16.msra.mxu0 %v4639
        %4667 = vmatmul.bf16.gmra.mxu0 %v4648
        %v4668 = vpop.f32.mrf.mxu0
        %v4669 = vadd.f32 0.0, %v4668
        %v4670 = vpop.f32.mrf.mxu0
        %v4671 = vadd.f32 0.0, %v4670
        %4672 = vmatmul.bf16.gmra.mxu0 %v4651
        %v4673 = vpop.f32.mrf.mxu0
        %v4674 = vadd.f32 0.0, %v4673
        %v4675 = vpop.f32.mrf.mxu0
        %v4676 = vadd.f32 0.0, %v4675
        %4677 = vmatmul.bf16.gmra.mxu0 %v4654
        %v4678 = vpop.f32.mrf.mxu0
        %v4679 = vadd.f32 0.0, %v4678
        %v4680 = vpop.f32.mrf.mxu0
        %v4681 = vadd.f32 0.0, %v4680
        %4682 = vmatmul.bf16.gmra.mxu0 %v4657
        %v4683 = vpop.f32.mrf.mxu0
        %v4684 = vadd.f32 0.0, %v4683
        %v4685 = vpop.f32.mrf.mxu0
        %v4686 = vadd.f32 0.0, %v4685
        %4687 = vdwg.mxu0
        %4688 = vmatpush.bf16.msra.mxu0 0
        %4689 = vmatpush.bf16.msra.mxu0 0
        %4690 = vmatpush.bf16.msra.mxu0 0
        %4691 = vmatpush.bf16.msra.mxu0 0
        %4692 = vmatpush.bf16.msra.mxu0 0
        %4693 = vmatpush.bf16.msra.mxu0 0
        %4694 = vmatpush.bf16.msra.mxu0 %v4642
        %4695 = vmatpush.bf16.msra.mxu0 %v4640
        %4696 = vmatmul.bf16.gmra.mxu0 %v4648
        %v4697 = vpop.f32.mrf.mxu0
        %v4698 = vadd.f32 0.0, %v4697
        %v4699 = vpop.f32.mrf.mxu0
        %v4700 = vadd.f32 0.0, %v4699
        %4701 = vmatmul.bf16.gmra.mxu0 %v4651
        %v4702 = vpop.f32.mrf.mxu0
        %v4703 = vadd.f32 0.0, %v4702
        %v4704 = vpop.f32.mrf.mxu0
        %v4705 = vadd.f32 0.0, %v4704
        %4706 = vmatmul.bf16.gmra.mxu0 %v4654
        %v4707 = vpop.f32.mrf.mxu0
        %v4708 = vadd.f32 0.0, %v4707
        %v4709 = vpop.f32.mrf.mxu0
        %v4710 = vadd.f32 0.0, %v4709
        %4711 = vmatmul.bf16.gmra.mxu0 %v4657
        %v4712 = vpop.f32.mrf.mxu0
        %v4713 = vadd.f32 0.0, %v4712
        %v4714 = vpop.f32.mrf.mxu0
        %v4715 = vadd.f32 0.0, %v4714
        %4716 = vdwg.mxu0
        %v4717 = vadd.f32 %v4389, %v4669
        %v4718 = vadd.f32 %v4390, %v4698
        %v4719 = vadd.f32 %v4391, %v4671
        %v4720 = vadd.f32 %v4392, %v4700
        %v4721 = vadd.f32 %v4393, %v4674
        %v4722 = vadd.f32 %v4394, %v4703
        %v4723 = vadd.f32 %v4395, %v4676
        %v4724 = vadd.f32 %v4396, %v4705
        %v4725 = vadd.f32 %v4397, %v4679
        %v4726 = vadd.f32 %v4398, %v4708
        %v4727 = vadd.f32 %v4399, %v4681
        %v4728 = vadd.f32 %v4400, %v4710
        %v4729 = vadd.f32 %v4401, %v4684
        %v4730 = vadd.f32 %v4402, %v4713
        %v4731 = vadd.f32 %v4403, %v4686
        %v4732 = vadd.f32 %v4404, %v4715
        %v4734 = vperm.slane %v2000, 0
        %v4735 = vperm.slane %v2000, 1
        %v4738 = vadd.f32 %v4717, %v4734
        %v4739 = vadd.f32 %v4718, %v4735
        %v4740 = vadd.f32 %v4719, %v4734
        %v4741 = vadd.f32 %v4720, %v4735
        %v4742 = vadd.f32 %v4721, %v4734
        %v4743 = vadd.f32 %v4722, %v4735
        %v4744 = vadd.f32 %v4723, %v4734
        %v4745 = vadd.f32 %v4724, %v4735
        %v4746 = vadd.f32 %v4725, %v4734
        %v4747 = vadd.f32 %v4726, %v4735
        %v4748 = vadd.f32 %v4727, %v4734
        %v4749 = vadd.f32 %v4728, %v4735
        %v4750 = vadd.f32 %v4729, %v4734
        %v4751 = vadd.f32 %v4730, %v4735
        %v4752 = vadd.f32 %v4731, %v4734
        %v4753 = vadd.f32 %v4732, %v4735
        %v4754 = vadd.f32 %v763, %v4738
        %v4755 = vadd.f32 %v764, %v4739
        %v4756 = vadd.f32 %v765, %v4740
        %v4757 = vadd.f32 %v766, %v4741
        %v4758 = vadd.f32 %v767, %v4742
        %v4759 = vadd.f32 %v768, %v4743
        %v4760 = vadd.f32 %v769, %v4744
        %v4761 = vadd.f32 %v770, %v4745
        %v4762 = vadd.f32 %v771, %v4746
        %v4763 = vadd.f32 %v772, %v4747
        %v4764 = vadd.f32 %v773, %v4748
        %v4765 = vadd.f32 %v774, %v4749
        %v4766 = vadd.f32 %v775, %v4750
        %v4767 = vadd.f32 %v776, %v4751
        %v4768 = vadd.f32 %v777, %v4752
        %v4769 = vadd.f32 %v778, %v4753
        %4770 = vst [vmem:[%s746] sm:$0xff] %v4754
        %4771 = vst [vmem:[%s746 + $0x8] sm:$0xff] %v4755
        %4772 = vst [vmem:[%s746 + $0x10] sm:$0xff] %v4756
        %4773 = vst [vmem:[%s746 + $0x18] sm:$0xff] %v4757
        %4774 = vst [vmem:[%s746 + $0x20] sm:$0xff] %v4758
        %4775 = vst [vmem:[%s746 + $0x28] sm:$0xff] %v4759
        %4776 = vst [vmem:[%s746 + $0x30] sm:$0xff] %v4760
        %4777 = vst [vmem:[%s746 + $0x38] sm:$0xff] %v4761
        %4778 = vst [vmem:[%s746 + $0x40] sm:$0xff] %v4762
        %4779 = vst [vmem:[%s746 + $0x48] sm:$0xff] %v4763
        %4780 = vst [vmem:[%s746 + $0x50] sm:$0xff] %v4764
        %4781 = vst [vmem:[%s746 + $0x58] sm:$0xff] %v4765
        %4782 = vst [vmem:[%s746 + $0x60] sm:$0xff] %v4766
        %4783 = vst [vmem:[%s746 + $0x68] sm:$0xff] %v4767
        %4784 = vst [vmem:[%s746 + $0x70] sm:$0xff] %v4768
        %4785 = vst [vmem:[%s746 + $0x78] sm:$0xff] %v4769
        %v4786 = vpack.c.bf16 %v765, %v763
        %v4787 = vpack.c.bf16 %v766, %v764
        %v4788 = vpack.c.bf16 %v769, %v767
        %v4789 = vpack.c.bf16 %v770, %v768
        %v4790 = vpack.c.bf16 %v773, %v771
        %v4791 = vpack.c.bf16 %v774, %v772
        %v4792 = vpack.c.bf16 %v777, %v775
        %v4793 = vpack.c.bf16 %v778, %v776
        %v4794 = vld [vmem:[#allocation15] sm:$0xff]
        %v4795 = vld [vmem:[#allocation15 + $0x8] sm:$0xff]
        %v4796 = vld [vmem:[#allocation15 + $0x10] sm:$0xff]
        %v4797 = vld [vmem:[#allocation15 + $0x18] sm:$0xff]
        %v4798 = vld [vmem:[#allocation15 + $0x20] sm:$0xff]
        %v4799 = vld [vmem:[#allocation15 + $0x28] sm:$0xff]
        %v4800 = vld [vmem:[#allocation15 + $0x30] sm:$0xff]
        %v4801 = vld [vmem:[#allocation15 + $0x38] sm:$0xff]
        %v4802 = vld [vmem:[#allocation15 + $0x40] sm:$0xff]
        %v4803 = vld [vmem:[#allocation15 + $0x48] sm:$0xff]
        %v4804 = vld [vmem:[#allocation15 + $0x50] sm:$0xff]
        %v4805 = vld [vmem:[#allocation15 + $0x58] sm:$0xff]
        %v4806 = vld [vmem:[#allocation15 + $0x60] sm:$0xff]
        %v4807 = vld [vmem:[#allocation15 + $0x68] sm:$0xff]
        %v4808 = vld [vmem:[#allocation15 + $0x70] sm:$0xff]
        %v4809 = vld [vmem:[#allocation15 + $0x78] sm:$0xff]
        %v4810 = vld [vmem:[#allocation15 + $0x80] sm:$0xff]
        %v4811 = vld [vmem:[#allocation15 + $0x88] sm:$0xff]
        %v4812 = vld [vmem:[#allocation15 + $0x90] sm:$0xff]
        %v4813 = vld [vmem:[#allocation15 + $0x98] sm:$0xff]
        %v4814 = vld [vmem:[#allocation15 + $0xa0] sm:$0xff]
        %v4815 = vld [vmem:[#allocation15 + $0xa8] sm:$0xff]
        %v4816 = vld [vmem:[#allocation15 + $0xb0] sm:$0xff]
        %v4817 = vld [vmem:[#allocation15 + $0xb8] sm:$0xff]
        %v4818 = vld [vmem:[#allocation15 + $0xc0] sm:$0xff]
        %v4819 = vld [vmem:[#allocation15 + $0xc8] sm:$0xff]
        %v4820 = vld [vmem:[#allocation15 + $0xd0] sm:$0xff]
        %v4821 = vld [vmem:[#allocation15 + $0xd8] sm:$0xff]
        %v4822 = vld [vmem:[#allocation15 + $0xe0] sm:$0xff]
        %v4823 = vld [vmem:[#allocation15 + $0xe8] sm:$0xff]
        %v4824 = vld [vmem:[#allocation15 + $0xf0] sm:$0xff]
        %v4825 = vld [vmem:[#allocation15 + $0xf8] sm:$0xff]
        %v4826 = vld [vmem:[%s11] sm:$0x3]
        %v4828 = vperm.slane %v4826, 0
        %v4829 = vperm.slane %v4826, 1
        %v4864 = vunpack.c.l.b16 %v4794
        %v4865 = vunpack.c.h.b16 %v4794
        %v4866 = vunpack.c.l.b16 %v4795
        %v4867 = vunpack.c.h.b16 %v4795
        %v4868 = vunpack.c.l.b16 %v4796
        %v4869 = vunpack.c.h.b16 %v4796
        %v4870 = vunpack.c.l.b16 %v4797
        %v4871 = vunpack.c.h.b16 %v4797
        %v4872 = vunpack.c.l.b16 %v4798
        %v4873 = vunpack.c.h.b16 %v4798
        %v4874 = vunpack.c.l.b16 %v4799
        %v4875 = vunpack.c.h.b16 %v4799
        %v4876 = vunpack.c.l.b16 %v4800
        %v4877 = vunpack.c.h.b16 %v4800
        %v4878 = vunpack.c.l.b16 %v4801
        %v4879 = vunpack.c.h.b16 %v4801
        %v4880 = vunpack.c.l.b16 %v4802
        %v4881 = vunpack.c.h.b16 %v4802
        %v4882 = vunpack.c.l.b16 %v4803
        %v4883 = vunpack.c.h.b16 %v4803
        %v4884 = vunpack.c.l.b16 %v4804
        %v4885 = vunpack.c.h.b16 %v4804
        %v4886 = vunpack.c.l.b16 %v4805
        %v4887 = vunpack.c.h.b16 %v4805
        %v4888 = vunpack.c.l.b16 %v4806
        %v4889 = vunpack.c.h.b16 %v4806
        %v4890 = vunpack.c.l.b16 %v4807
        %v4891 = vunpack.c.h.b16 %v4807
        %v4892 = vunpack.c.l.b16 %v4808
        %v4893 = vunpack.c.h.b16 %v4808
        %v4894 = vunpack.c.l.b16 %v4809
        %v4895 = vunpack.c.h.b16 %v4809
        %v4896 = vunpack.c.l.b16 %v4810
        %v4897 = vunpack.c.h.b16 %v4810
        %v4898 = vunpack.c.l.b16 %v4811
        %v4899 = vunpack.c.h.b16 %v4811
        %v4900 = vunpack.c.l.b16 %v4812
        %v4901 = vunpack.c.h.b16 %v4812
        %v4902 = vunpack.c.l.b16 %v4813
        %v4903 = vunpack.c.h.b16 %v4813
        %v4904 = vunpack.c.l.b16 %v4814
        %v4905 = vunpack.c.h.b16 %v4814
        %v4906 = vunpack.c.l.b16 %v4815
        %v4907 = vunpack.c.h.b16 %v4815
        %v4908 = vunpack.c.l.b16 %v4816
        %v4909 = vunpack.c.h.b16 %v4816
        %v4910 = vunpack.c.l.b16 %v4817
        %v4911 = vunpack.c.h.b16 %v4817
        %v4912 = vunpack.c.l.b16 %v4818
        %v4913 = vunpack.c.h.b16 %v4818
        %v4914 = vunpack.c.l.b16 %v4819
        %v4915 = vunpack.c.h.b16 %v4819
        %v4916 = vunpack.c.l.b16 %v4820
        %v4917 = vunpack.c.h.b16 %v4820
        %v4918 = vunpack.c.l.b16 %v4821
        %v4919 = vunpack.c.h.b16 %v4821
        %v4920 = vunpack.c.l.b16 %v4822
        %v4921 = vunpack.c.h.b16 %v4822
        %v4922 = vunpack.c.l.b16 %v4823
        %v4923 = vunpack.c.h.b16 %v4823
        %v4924 = vunpack.c.l.b16 %v4824
        %v4925 = vunpack.c.h.b16 %v4824
        %v4926 = vunpack.c.l.b16 %v4825
        %v4927 = vunpack.c.h.b16 %v4825
        %v4928 = vpack.c.b16 %v4866, %v4864
        %v4929 = vpack.c.b16 %v4867, %v4865
        %v4930 = vpack.c.b16 %v4870, %v4868
        %v4931 = vpack.c.b16 %v4871, %v4869
        %v4932 = vpack.c.b16 %v4874, %v4872
        %v4933 = vpack.c.b16 %v4875, %v4873
        %v4934 = vpack.c.b16 %v4878, %v4876
        %v4935 = vpack.c.b16 %v4879, %v4877
        %v4936 = vpack.c.b16 %v4882, %v4880
        %v4937 = vpack.c.b16 %v4883, %v4881
        %v4938 = vpack.c.b16 %v4886, %v4884
        %v4939 = vpack.c.b16 %v4887, %v4885
        %v4940 = vpack.c.b16 %v4890, %v4888
        %v4941 = vpack.c.b16 %v4891, %v4889
        %v4942 = vpack.c.b16 %v4894, %v4892
        %v4943 = vpack.c.b16 %v4895, %v4893
        %v4944 = vpack.c.b16 %v4898, %v4896
        %v4945 = vpack.c.b16 %v4899, %v4897
        %v4946 = vpack.c.b16 %v4902, %v4900
        %v4947 = vpack.c.b16 %v4903, %v4901
        %v4948 = vpack.c.b16 %v4906, %v4904
        %v4949 = vpack.c.b16 %v4907, %v4905
        %v4950 = vpack.c.b16 %v4910, %v4908
        %v4951 = vpack.c.b16 %v4911, %v4909
        %v4952 = vpack.c.b16 %v4914, %v4912
        %v4953 = vpack.c.b16 %v4915, %v4913
        %v4954 = vpack.c.b16 %v4918, %v4916
        %v4955 = vpack.c.b16 %v4919, %v4917
        %v4956 = vpack.c.b16 %v4922, %v4920
        %v4957 = vpack.c.b16 %v4923, %v4921
        %v4958 = vpack.c.b16 %v4926, %v4924
        %v4959 = vpack.c.b16 %v4927, %v4925
        %4992 = vmatpush.bf16.msra.mxu0 %v4942
        %4993 = vmatpush.bf16.msra.mxu0 %v4940
        %4994 = vmatpush.bf16.msra.mxu0 %v4938
        %4995 = vmatpush.bf16.msra.mxu0 %v4936
        %4996 = vmatpush.bf16.msra.mxu0 %v4934
        %4997 = vmatpush.bf16.msra.mxu0 %v4932
        %4998 = vmatpush.bf16.msra.mxu0 %v4930
        %4999 = vmatpush.bf16.msra.mxu0 %v4928
        %5000 = vmatmul.bf16.gmra.mxu0 %v4786
        %v5001 = vpop.f32.mrf.mxu0
        %v5002 = vadd.f32 %v4828, %v5001
        %v5003 = vpop.f32.mrf.mxu0
        %v5004 = vadd.f32 %v4828, %v5003
        %5005 = vmatmul.bf16.gmra.mxu0 %v4788
        %v5006 = vpop.f32.mrf.mxu0
        %v5007 = vadd.f32 %v4828, %v5006
        %v5008 = vpop.f32.mrf.mxu0
        %v5009 = vadd.f32 %v4828, %v5008
        %5010 = vmatmul.bf16.gmra.mxu0 %v4790
        %v5011 = vpop.f32.mrf.mxu0
        %v5012 = vadd.f32 %v4828, %v5011
        %v5013 = vpop.f32.mrf.mxu0
        %v5014 = vadd.f32 %v4828, %v5013
        %5015 = vmatmul.bf16.gmra.mxu0 %v4792
        %v5016 = vpop.f32.mrf.mxu0
        %v5017 = vadd.f32 %v4828, %v5016
        %v5018 = vpop.f32.mrf.mxu0
        %v5019 = vadd.f32 %v4828, %v5018
        %5020 = vdwg.mxu0
        %5021 = vmatpush.bf16.msra.mxu0 %v4958
        %5022 = vmatpush.bf16.msra.mxu0 %v4956
        %5023 = vmatpush.bf16.msra.mxu0 %v4954
        %5024 = vmatpush.bf16.msra.mxu0 %v4952
        %5025 = vmatpush.bf16.msra.mxu0 %v4950
        %5026 = vmatpush.bf16.msra.mxu0 %v4948
        %5027 = vmatpush.bf16.msra.mxu0 %v4946
        %5028 = vmatpush.bf16.msra.mxu0 %v4944
        %5029 = vmatmul.bf16.gmra.mxu0 %v4787
        %v5030 = vpop.f32.mrf.mxu0
        %v5031 = vadd.f32 %v5002, %v5030
        %v5032 = vpop.f32.mrf.mxu0
        %v5033 = vadd.f32 %v5004, %v5032
        %5034 = vmatmul.bf16.gmra.mxu0 %v4789
        %v5035 = vpop.f32.mrf.mxu0
        %v5036 = vadd.f32 %v5007, %v5035
        %v5037 = vpop.f32.mrf.mxu0
        %v5038 = vadd.f32 %v5009, %v5037
        %5039 = vmatmul.bf16.gmra.mxu0 %v4791
        %v5040 = vpop.f32.mrf.mxu0
        %v5041 = vadd.f32 %v5012, %v5040
        %v5042 = vpop.f32.mrf.mxu0
        %v5043 = vadd.f32 %v5014, %v5042
        %5044 = vmatmul.bf16.gmra.mxu0 %v4793
        %v5045 = vpop.f32.mrf.mxu0
        %v5046 = vadd.f32 %v5017, %v5045
        %v5047 = vpop.f32.mrf.mxu0
        %v5048 = vadd.f32 %v5019, %v5047
        %5049 = vdwg.mxu0
        %5050 = vmatpush.bf16.msra.mxu0 %v4943
        %5051 = vmatpush.bf16.msra.mxu0 %v4941
        %5052 = vmatpush.bf16.msra.mxu0 %v4939
        %5053 = vmatpush.bf16.msra.mxu0 %v4937
        %5054 = vmatpush.bf16.msra.mxu0 %v4935
        %5055 = vmatpush.bf16.msra.mxu0 %v4933
        %5056 = vmatpush.bf16.msra.mxu0 %v4931
        %5057 = vmatpush.bf16.msra.mxu0 %v4929
        %5058 = vmatmul.bf16.gmra.mxu0 %v4786
        %v5059 = vpop.f32.mrf.mxu0
        %v5060 = vadd.f32 %v4829, %v5059
        %v5061 = vpop.f32.mrf.mxu0
        %v5062 = vadd.f32 %v4829, %v5061
        %5063 = vmatmul.bf16.gmra.mxu0 %v4788
        %v5064 = vpop.f32.mrf.mxu0
        %v5065 = vadd.f32 %v4829, %v5064
        %v5066 = vpop.f32.mrf.mxu0
        %v5067 = vadd.f32 %v4829, %v5066
        %5068 = vmatmul.bf16.gmra.mxu0 %v4790
        %v5069 = vpop.f32.mrf.mxu0
        %v5070 = vadd.f32 %v4829, %v5069
        %v5071 = vpop.f32.mrf.mxu0
        %v5072 = vadd.f32 %v4829, %v5071
        %5073 = vmatmul.bf16.gmra.mxu0 %v4792
        %v5074 = vpop.f32.mrf.mxu0
        %v5075 = vadd.f32 %v4829, %v5074
        %v5076 = vpop.f32.mrf.mxu0
        %v5077 = vadd.f32 %v4829, %v5076
        %5078 = vdwg.mxu0
        %5079 = vmatpush.bf16.msra.mxu0 %v4959
        %5080 = vmatpush.bf16.msra.mxu0 %v4957
        %5081 = vmatpush.bf16.msra.mxu0 %v4955
        %5082 = vmatpush.bf16.msra.mxu0 %v4953
        %5083 = vmatpush.bf16.msra.mxu0 %v4951
        %5084 = vmatpush.bf16.msra.mxu0 %v4949
        %5085 = vmatpush.bf16.msra.mxu0 %v4947
        %5086 = vmatpush.bf16.msra.mxu0 %v4945
        %5087 = vmatmul.bf16.gmra.mxu0 %v4787
        %v5088 = vpop.f32.mrf.mxu0
        %v5089 = vadd.f32 %v5060, %v5088
        %v5090 = vpop.f32.mrf.mxu0
        %v5091 = vadd.f32 %v5062, %v5090
        %5092 = vmatmul.bf16.gmra.mxu0 %v4789
        %v5093 = vpop.f32.mrf.mxu0
        %v5094 = vadd.f32 %v5065, %v5093
        %v5095 = vpop.f32.mrf.mxu0
        %v5096 = vadd.f32 %v5067, %v5095
        %5097 = vmatmul.bf16.gmra.mxu0 %v4791
        %v5098 = vpop.f32.mrf.mxu0
        %v5099 = vadd.f32 %v5070, %v5098
        %v5100 = vpop.f32.mrf.mxu0
        %v5101 = vadd.f32 %v5072, %v5100
        %5102 = vmatmul.bf16.gmra.mxu0 %v4793
        %v5103 = vpop.f32.mrf.mxu0
        %v5104 = vadd.f32 %v5075, %v5103
        %v5105 = vpop.f32.mrf.mxu0
        %v5106 = vadd.f32 %v5077, %v5105
        %5107 = vdwg.mxu0
        %v5108 = vpack.c.bf16 %v4740, %v4738
        %v5109 = vpack.c.bf16 %v4741, %v4739
        %v5110 = vpack.c.bf16 %v4744, %v4742
        %v5111 = vpack.c.bf16 %v4745, %v4743
        %v5112 = vpack.c.bf16 %v4748, %v4746
        %v5113 = vpack.c.bf16 %v4749, %v4747
        %v5114 = vpack.c.bf16 %v4752, %v4750
        %v5115 = vpack.c.bf16 %v4753, %v4751
        %v5116 = vld [vmem:[#allocation16] sm:$0xff]
        %v5117 = vld [vmem:[#allocation16 + $0x8] sm:$0xff]
        %v5118 = vld [vmem:[#allocation16 + $0x10] sm:$0xff]
        %v5119 = vld [vmem:[#allocation16 + $0x18] sm:$0xff]
        %v5120 = vld [vmem:[#allocation16 + $0x20] sm:$0xff]
        %v5121 = vld [vmem:[#allocation16 + $0x28] sm:$0xff]
        %v5122 = vld [vmem:[#allocation16 + $0x30] sm:$0xff]
        %v5123 = vld [vmem:[#allocation16 + $0x38] sm:$0xff]
        %v5124 = vld [vmem:[#allocation16 + $0x40] sm:$0xff]
        %v5125 = vld [vmem:[#allocation16 + $0x48] sm:$0xff]
        %v5126 = vld [vmem:[#allocation16 + $0x50] sm:$0xff]
        %v5127 = vld [vmem:[#allocation16 + $0x58] sm:$0xff]
        %v5128 = vld [vmem:[#allocation16 + $0x60] sm:$0xff]
        %v5129 = vld [vmem:[#allocation16 + $0x68] sm:$0xff]
        %v5130 = vld [vmem:[#allocation16 + $0x70] sm:$0xff]
        %v5131 = vld [vmem:[#allocation16 + $0x78] sm:$0xff]
        %v5132 = vld [vmem:[#allocation16 + $0x80] sm:$0xff]
        %v5133 = vld [vmem:[#allocation16 + $0x88] sm:$0xff]
        %v5134 = vld [vmem:[#allocation16 + $0x90] sm:$0xff]
        %v5135 = vld [vmem:[#allocation16 + $0x98] sm:$0xff]
        %v5136 = vld [vmem:[#allocation16 + $0xa0] sm:$0xff]
        %v5137 = vld [vmem:[#allocation16 + $0xa8] sm:$0xff]
        %v5138 = vld [vmem:[#allocation16 + $0xb0] sm:$0xff]
        %v5139 = vld [vmem:[#allocation16 + $0xb8] sm:$0xff]
        %v5140 = vld [vmem:[#allocation16 + $0xc0] sm:$0xff]
        %v5141 = vld [vmem:[#allocation16 + $0xc8] sm:$0xff]
        %v5142 = vld [vmem:[#allocation16 + $0xd0] sm:$0xff]
        %v5143 = vld [vmem:[#allocation16 + $0xd8] sm:$0xff]
        %v5144 = vld [vmem:[#allocation16 + $0xe0] sm:$0xff]
        %v5145 = vld [vmem:[#allocation16 + $0xe8] sm:$0xff]
        %v5146 = vld [vmem:[#allocation16 + $0xf0] sm:$0xff]
        %v5147 = vld [vmem:[#allocation16 + $0xf8] sm:$0xff]
        %v5148 = vld [vmem:[%s13] sm:$0x3]
        %v5150 = vperm.slane %v5148, 0
        %v5151 = vperm.slane %v5148, 1
        %v5186 = vunpack.c.l.b16 %v5116
        %v5187 = vunpack.c.h.b16 %v5116
        %v5188 = vunpack.c.l.b16 %v5117
        %v5189 = vunpack.c.h.b16 %v5117
        %v5190 = vunpack.c.l.b16 %v5118
        %v5191 = vunpack.c.h.b16 %v5118
        %v5192 = vunpack.c.l.b16 %v5119
        %v5193 = vunpack.c.h.b16 %v5119
        %v5194 = vunpack.c.l.b16 %v5120
        %v5195 = vunpack.c.h.b16 %v5120
        %v5196 = vunpack.c.l.b16 %v5121
        %v5197 = vunpack.c.h.b16 %v5121
        %v5198 = vunpack.c.l.b16 %v5122
        %v5199 = vunpack.c.h.b16 %v5122
        %v5200 = vunpack.c.l.b16 %v5123
        %v5201 = vunpack.c.h.b16 %v5123
        %v5202 = vunpack.c.l.b16 %v5124
        %v5203 = vunpack.c.h.b16 %v5124
        %v5204 = vunpack.c.l.b16 %v5125
        %v5205 = vunpack.c.h.b16 %v5125
        %v5206 = vunpack.c.l.b16 %v5126
        %v5207 = vunpack.c.h.b16 %v5126
        %v5208 = vunpack.c.l.b16 %v5127
        %v5209 = vunpack.c.h.b16 %v5127
        %v5210 = vunpack.c.l.b16 %v5128
        %v5211 = vunpack.c.h.b16 %v5128
        %v5212 = vunpack.c.l.b16 %v5129
        %v5213 = vunpack.c.h.b16 %v5129
        %v5214 = vunpack.c.l.b16 %v5130
        %v5215 = vunpack.c.h.b16 %v5130
        %v5216 = vunpack.c.l.b16 %v5131
        %v5217 = vunpack.c.h.b16 %v5131
        %v5218 = vunpack.c.l.b16 %v5132
        %v5219 = vunpack.c.h.b16 %v5132
        %v5220 = vunpack.c.l.b16 %v5133
        %v5221 = vunpack.c.h.b16 %v5133
        %v5222 = vunpack.c.l.b16 %v5134
        %v5223 = vunpack.c.h.b16 %v5134
        %v5224 = vunpack.c.l.b16 %v5135
        %v5225 = vunpack.c.h.b16 %v5135
        %v5226 = vunpack.c.l.b16 %v5136
        %v5227 = vunpack.c.h.b16 %v5136
        %v5228 = vunpack.c.l.b16 %v5137
        %v5229 = vunpack.c.h.b16 %v5137
        %v5230 = vunpack.c.l.b16 %v5138
        %v5231 = vunpack.c.h.b16 %v5138
        %v5232 = vunpack.c.l.b16 %v5139
        %v5233 = vunpack.c.h.b16 %v5139
        %v5234 = vunpack.c.l.b16 %v5140
        %v5235 = vunpack.c.h.b16 %v5140
        %v5236 = vunpack.c.l.b16 %v5141
        %v5237 = vunpack.c.h.b16 %v5141
        %v5238 = vunpack.c.l.b16 %v5142
        %v5239 = vunpack.c.h.b16 %v5142
        %v5240 = vunpack.c.l.b16 %v5143
        %v5241 = vunpack.c.h.b16 %v5143
        %v5242 = vunpack.c.l.b16 %v5144
        %v5243 = vunpack.c.h.b16 %v5144
        %v5244 = vunpack.c.l.b16 %v5145
        %v5245 = vunpack.c.h.b16 %v5145
        %v5246 = vunpack.c.l.b16 %v5146
        %v5247 = vunpack.c.h.b16 %v5146
        %v5248 = vunpack.c.l.b16 %v5147
        %v5249 = vunpack.c.h.b16 %v5147
        %v5250 = vpack.c.b16 %v5188, %v5186
        %v5251 = vpack.c.b16 %v5189, %v5187
        %v5252 = vpack.c.b16 %v5192, %v5190
        %v5253 = vpack.c.b16 %v5193, %v5191
        %v5254 = vpack.c.b16 %v5196, %v5194
        %v5255 = vpack.c.b16 %v5197, %v5195
        %v5256 = vpack.c.b16 %v5200, %v5198
        %v5257 = vpack.c.b16 %v5201, %v5199
        %v5258 = vpack.c.b16 %v5204, %v5202
        %v5259 = vpack.c.b16 %v5205, %v5203
        %v5260 = vpack.c.b16 %v5208, %v5206
        %v5261 = vpack.c.b16 %v5209, %v5207
        %v5262 = vpack.c.b16 %v5212, %v5210
        %v5263 = vpack.c.b16 %v5213, %v5211
        %v5264 = vpack.c.b16 %v5216, %v5214
        %v5265 = vpack.c.b16 %v5217, %v5215
        %v5266 = vpack.c.b16 %v5220, %v5218
        %v5267 = vpack.c.b16 %v5221, %v5219
        %v5268 = vpack.c.b16 %v5224, %v5222
        %v5269 = vpack.c.b16 %v5225, %v5223
        %v5270 = vpack.c.b16 %v5228, %v5226
        %v5271 = vpack.c.b16 %v5229, %v5227
        %v5272 = vpack.c.b16 %v5232, %v5230
        %v5273 = vpack.c.b16 %v5233, %v5231
        %v5274 = vpack.c.b16 %v5236, %v5234
        %v5275 = vpack.c.b16 %v5237, %v5235
        %v5276 = vpack.c.b16 %v5240, %v5238
        %v5277 = vpack.c.b16 %v5241, %v5239
        %v5278 = vpack.c.b16 %v5244, %v5242
        %v5279 = vpack.c.b16 %v5245, %v5243
        %v5280 = vpack.c.b16 %v5248, %v5246
        %v5281 = vpack.c.b16 %v5249, %v5247
        %5314 = vmatpush.bf16.msra.mxu0 %v5264
        %5315 = vmatpush.bf16.msra.mxu0 %v5262
        %5316 = vmatpush.bf16.msra.mxu0 %v5260
        %5317 = vmatpush.bf16.msra.mxu0 %v5258
        %5318 = vmatpush.bf16.msra.mxu0 %v5256
        %5319 = vmatpush.bf16.msra.mxu0 %v5254
        %5320 = vmatpush.bf16.msra.mxu0 %v5252
        %5321 = vmatpush.bf16.msra.mxu0 %v5250
        %5322 = vmatmul.bf16.gmra.mxu0 %v5108
        %v5323 = vpop.f32.mrf.mxu0
        %v5324 = vadd.f32 %v5150, %v5323
        %v5325 = vpop.f32.mrf.mxu0
        %v5326 = vadd.f32 %v5150, %v5325
        %5327 = vmatmul.bf16.gmra.mxu0 %v5110
        %v5328 = vpop.f32.mrf.mxu0
        %v5329 = vadd.f32 %v5150, %v5328
        %v5330 = vpop.f32.mrf.mxu0
        %v5331 = vadd.f32 %v5150, %v5330
        %5332 = vmatmul.bf16.gmra.mxu0 %v5112
        %v5333 = vpop.f32.mrf.mxu0
        %v5334 = vadd.f32 %v5150, %v5333
        %v5335 = vpop.f32.mrf.mxu0
        %v5336 = vadd.f32 %v5150, %v5335
        %5337 = vmatmul.bf16.gmra.mxu0 %v5114
        %v5338 = vpop.f32.mrf.mxu0
        %v5339 = vadd.f32 %v5150, %v5338
        %v5340 = vpop.f32.mrf.mxu0
        %v5341 = vadd.f32 %v5150, %v5340
        %5342 = vdwg.mxu0
        %5343 = vmatpush.bf16.msra.mxu0 %v5280
        %5344 = vmatpush.bf16.msra.mxu0 %v5278
        %5345 = vmatpush.bf16.msra.mxu0 %v5276
        %5346 = vmatpush.bf16.msra.mxu0 %v5274
        %5347 = vmatpush.bf16.msra.mxu0 %v5272
        %5348 = vmatpush.bf16.msra.mxu0 %v5270
        %5349 = vmatpush.bf16.msra.mxu0 %v5268
        %5350 = vmatpush.bf16.msra.mxu0 %v5266
        %5351 = vmatmul.bf16.gmra.mxu0 %v5109
        %v5352 = vpop.f32.mrf.mxu0
        %v5353 = vadd.f32 %v5324, %v5352
        %v5354 = vpop.f32.mrf.mxu0
        %v5355 = vadd.f32 %v5326, %v5354
        %5356 = vmatmul.bf16.gmra.mxu0 %v5111
        %v5357 = vpop.f32.mrf.mxu0
        %v5358 = vadd.f32 %v5329, %v5357
        %v5359 = vpop.f32.mrf.mxu0
        %v5360 = vadd.f32 %v5331, %v5359
        %5361 = vmatmul.bf16.gmra.mxu0 %v5113
        %v5362 = vpop.f32.mrf.mxu0
        %v5363 = vadd.f32 %v5334, %v5362
        %v5364 = vpop.f32.mrf.mxu0
        %v5365 = vadd.f32 %v5336, %v5364
        %5366 = vmatmul.bf16.gmra.mxu0 %v5115
        %v5367 = vpop.f32.mrf.mxu0
        %v5368 = vadd.f32 %v5339, %v5367
        %v5369 = vpop.f32.mrf.mxu0
        %v5370 = vadd.f32 %v5341, %v5369
        %5371 = vdwg.mxu0
        %5372 = vmatpush.bf16.msra.mxu0 %v5265
        %5373 = vmatpush.bf16.msra.mxu0 %v5263
        %5374 = vmatpush.bf16.msra.mxu0 %v5261
        %5375 = vmatpush.bf16.msra.mxu0 %v5259
        %5376 = vmatpush.bf16.msra.mxu0 %v5257
        %5377 = vmatpush.bf16.msra.mxu0 %v5255
        %5378 = vmatpush.bf16.msra.mxu0 %v5253
        %5379 = vmatpush.bf16.msra.mxu0 %v5251
        %5380 = vmatmul.bf16.gmra.mxu0 %v5108
        %v5381 = vpop.f32.mrf.mxu0
        %v5382 = vadd.f32 %v5151, %v5381
        %v5383 = vpop.f32.mrf.mxu0
        %v5384 = vadd.f32 %v5151, %v5383
        %5385 = vmatmul.bf16.gmra.mxu0 %v5110
        %v5386 = vpop.f32.mrf.mxu0
        %v5387 = vadd.f32 %v5151, %v5386
        %v5388 = vpop.f32.mrf.mxu0
        %v5389 = vadd.f32 %v5151, %v5388
        %5390 = vmatmul.bf16.gmra.mxu0 %v5112
        %v5391 = vpop.f32.mrf.mxu0
        %v5392 = vadd.f32 %v5151, %v5391
        %v5393 = vpop.f32.mrf.mxu0
        %v5394 = vadd.f32 %v5151, %v5393
        %5395 = vmatmul.bf16.gmra.mxu0 %v5114
        %v5396 = vpop.f32.mrf.mxu0
        %v5397 = vadd.f32 %v5151, %v5396
        %v5398 = vpop.f32.mrf.mxu0
        %v5399 = vadd.f32 %v5151, %v5398
        %5400 = vdwg.mxu0
        %5401 = vmatpush.bf16.msra.mxu0 %v5281
        %5402 = vmatpush.bf16.msra.mxu0 %v5279
        %5403 = vmatpush.bf16.msra.mxu0 %v5277
        %5404 = vmatpush.bf16.msra.mxu0 %v5275
        %5405 = vmatpush.bf16.msra.mxu0 %v5273
        %5406 = vmatpush.bf16.msra.mxu0 %v5271
        %5407 = vmatpush.bf16.msra.mxu0 %v5269
        %5408 = vmatpush.bf16.msra.mxu0 %v5267
        %5409 = vmatmul.bf16.gmra.mxu0 %v5109
        %v5410 = vpop.f32.mrf.mxu0
        %v5411 = vadd.f32 %v5382, %v5410
        %v5412 = vpop.f32.mrf.mxu0
        %v5413 = vadd.f32 %v5384, %v5412
        %5414 = vmatmul.bf16.gmra.mxu0 %v5111
        %v5415 = vpop.f32.mrf.mxu0
        %v5416 = vadd.f32 %v5387, %v5415
        %v5417 = vpop.f32.mrf.mxu0
        %v5418 = vadd.f32 %v5389, %v5417
        %5419 = vmatmul.bf16.gmra.mxu0 %v5113
        %v5420 = vpop.f32.mrf.mxu0
        %v5421 = vadd.f32 %v5392, %v5420
        %v5422 = vpop.f32.mrf.mxu0
        %v5423 = vadd.f32 %v5394, %v5422
        %5424 = vmatmul.bf16.gmra.mxu0 %v5115
        %v5425 = vpop.f32.mrf.mxu0
        %v5426 = vadd.f32 %v5397, %v5425
        %v5427 = vpop.f32.mrf.mxu0
        %v5428 = vadd.f32 %v5399, %v5427
        %5429 = vdwg.mxu0
        %v5430 = vmul.f32 %v5031, %v5031
        %v5431 = vmul.f32 %v5089, %v5089
        %v5432 = vmul.f32 %v5033, %v5033
        %v5433 = vmul.f32 %v5091, %v5091
        %v5434 = vmul.f32 %v5036, %v5036
        %v5435 = vmul.f32 %v5094, %v5094
        %v5436 = vmul.f32 %v5038, %v5038
        %v5437 = vmul.f32 %v5096, %v5096
        %v5438 = vmul.f32 %v5041, %v5041
        %v5439 = vmul.f32 %v5099, %v5099
        %v5440 = vmul.f32 %v5043, %v5043
        %v5441 = vmul.f32 %v5101, %v5101
        %v5442 = vmul.f32 %v5046, %v5046
        %v5443 = vmul.f32 %v5104, %v5104
        %v5444 = vmul.f32 %v5048, %v5048
        %v5445 = vmul.f32 %v5106, %v5106
        %v5446 = vadd.f32 %v5430, %v5431
        %5447 = vadd.xlane.f32.xlu0 %v5446
        %v5448 = vpop.xlane.xlu0 %5447
        %v5449 = vadd.f32 %v5432, %v5433
        %5450 = vadd.xlane.f32.xlu0 %v5449
        %v5451 = vpop.xlane.xlu0 %5450
        %v5452 = vadd.f32 %v5434, %v5435
        %5453 = vadd.xlane.f32.xlu0 %v5452
        %v5454 = vpop.xlane.xlu0 %5453
        %v5455 = vadd.f32 %v5436, %v5437
        %5456 = vadd.xlane.f32.xlu0 %v5455
        %v5457 = vpop.xlane.xlu0 %5456
        %v5458 = vadd.f32 %v5438, %v5439
        %5459 = vadd.xlane.f32.xlu0 %v5458
        %v5460 = vpop.xlane.xlu0 %5459
        %v5461 = vadd.f32 %v5440, %v5441
        %5462 = vadd.xlane.f32.xlu0 %v5461
        %v5463 = vpop.xlane.xlu0 %5462
        %v5464 = vadd.f32 %v5442, %v5443
        %5465 = vadd.xlane.f32.xlu0 %v5464
        %v5466 = vpop.xlane.xlu0 %5465
        %v5467 = vadd.f32 %v5444, %v5445
        %5468 = vadd.xlane.f32.xlu0 %v5467
        %v5469 = vpop.xlane.xlu0 %5468
        %v5470 = vmax.f32 %v5448, 1e-24
        %v5471 = vmax.f32 %v5451, 1e-24
        %v5472 = vmax.f32 %v5454, 1e-24
        %v5473 = vmax.f32 %v5457, 1e-24
        %v5474 = vmax.f32 %v5460, 1e-24
        %v5475 = vmax.f32 %v5463, 1e-24
        %v5476 = vmax.f32 %v5466, 1e-24
        %v5477 = vmax.f32 %v5469, 1e-24
        %v5478 = vrsqrt.pop %v5470
        %v5479 = vmul.f32 %v5478, %v5470
        %v5480 = vmul.f32 %v5479, %v5478
        %v5481 = vmul.f32 0.5, %v5480
        %v5482 = vsub.f32 1.5, %v5481
        %v5483 = vmul.f32 %v5478, %v5482
        %vm5484 = vweird.f32 %v5470
        %vm5485 = vweird.f32 %v5478
        %vm5486 = vmor %vm5484, %vm5485
        %v5487 = vsel %vm5486, %v5478, %v5483
        %v5488 = vrsqrt.pop %v5471
        %v5489 = vmul.f32 %v5488, %v5471
        %v5490 = vmul.f32 %v5489, %v5488
        %v5491 = vmul.f32 0.5, %v5490
        %v5492 = vsub.f32 1.5, %v5491
        %v5493 = vmul.f32 %v5488, %v5492
        %vm5494 = vweird.f32 %v5471
        %vm5495 = vweird.f32 %v5488
        %vm5496 = vmor %vm5494, %vm5495
        %v5497 = vsel %vm5496, %v5488, %v5493
        %v5498 = vrsqrt.pop %v5472
        %v5499 = vmul.f32 %v5498, %v5472
        %v5500 = vmul.f32 %v5499, %v5498
        %v5501 = vmul.f32 0.5, %v5500
        %v5502 = vsub.f32 1.5, %v5501
        %v5503 = vmul.f32 %v5498, %v5502
        %vm5504 = vweird.f32 %v5472
        %vm5505 = vweird.f32 %v5498
        %vm5506 = vmor %vm5504, %vm5505
        %v5507 = vsel %vm5506, %v5498, %v5503
        %v5508 = vrsqrt.pop %v5473
        %v5509 = vmul.f32 %v5508, %v5473
        %v5510 = vmul.f32 %v5509, %v5508
        %v5511 = vmul.f32 0.5, %v5510
        %v5512 = vsub.f32 1.5, %v5511
        %v5513 = vmul.f32 %v5508, %v5512
        %vm5514 = vweird.f32 %v5473
        %vm5515 = vweird.f32 %v5508
        %vm5516 = vmor %vm5514, %vm5515
        %v5517 = vsel %vm5516, %v5508, %v5513
        %v5518 = vrsqrt.pop %v5474
        %v5519 = vmul.f32 %v5518, %v5474
        %v5520 = vmul.f32 %v5519, %v5518
        %v5521 = vmul.f32 0.5, %v5520
        %v5522 = vsub.f32 1.5, %v5521
        %v5523 = vmul.f32 %v5518, %v5522
        %vm5524 = vweird.f32 %v5474
        %vm5525 = vweird.f32 %v5518
        %vm5526 = vmor %vm5524, %vm5525
        %v5527 = vsel %vm5526, %v5518, %v5523
        %v5528 = vrsqrt.pop %v5475
        %v5529 = vmul.f32 %v5528, %v5475
        %v5530 = vmul.f32 %v5529, %v5528
        %v5531 = vmul.f32 0.5, %v5530
        %v5532 = vsub.f32 1.5, %v5531
        %v5533 = vmul.f32 %v5528, %v5532
        %vm5534 = vweird.f32 %v5475
        %vm5535 = vweird.f32 %v5528
        %vm5536 = vmor %vm5534, %vm5535
        %v5537 = vsel %vm5536, %v5528, %v5533
        %v5538 = vrsqrt.pop %v5476
        %v5539 = vmul.f32 %v5538, %v5476
        %v5540 = vmul.f32 %v5539, %v5538
        %v5541 = vmul.f32 0.5, %v5540
        %v5542 = vsub.f32 1.5, %v5541
        %v5543 = vmul.f32 %v5538, %v5542
        %vm5544 = vweird.f32 %v5476
        %vm5545 = vweird.f32 %v5538
        %vm5546 = vmor %vm5544, %vm5545
        %v5547 = vsel %vm5546, %v5538, %v5543
        %v5548 = vrsqrt.pop %v5477
        %v5549 = vmul.f32 %v5548, %v5477
        %v5550 = vmul.f32 %v5549, %v5548
        %v5551 = vmul.f32 0.5, %v5550
        %v5552 = vsub.f32 1.5, %v5551
        %v5553 = vmul.f32 %v5548, %v5552
        %vm5554 = vweird.f32 %v5477
        %vm5555 = vweird.f32 %v5548
        %vm5556 = vmor %vm5554, %vm5555
        %v5557 = vsel %vm5556, %v5548, %v5553
        %v5558 = vmul.f32 %v5031, %v5487
        %v5559 = vmul.f32 %v5089, %v5487
        %v5560 = vmul.f32 %v5033, %v5497
        %v5561 = vmul.f32 %v5091, %v5497
        %v5562 = vmul.f32 %v5036, %v5507
        %v5563 = vmul.f32 %v5094, %v5507
        %v5564 = vmul.f32 %v5038, %v5517
        %v5565 = vmul.f32 %v5096, %v5517
        %v5566 = vmul.f32 %v5041, %v5527
        %v5567 = vmul.f32 %v5099, %v5527
        %v5568 = vmul.f32 %v5043, %v5537
        %v5569 = vmul.f32 %v5101, %v5537
        %v5570 = vmul.f32 %v5046, %v5547
        %v5571 = vmul.f32 %v5104, %v5547
        %v5572 = vmul.f32 %v5048, %v5557
        %v5573 = vmul.f32 %v5106, %v5557
        %v5574 = vmul.f32 %v5353, %v5353
        %v5575 = vmul.f32 %v5411, %v5411
        %v5576 = vmul.f32 %v5355, %v5355
        %v5577 = vmul.f32 %v5413, %v5413
        %v5578 = vmul.f32 %v5358, %v5358
        %v5579 = vmul.f32 %v5416, %v5416
        %v5580 = vmul.f32 %v5360, %v5360
        %v5581 = vmul.f32 %v5418, %v5418
        %v5582 = vmul.f32 %v5363, %v5363
        %v5583 = vmul.f32 %v5421, %v5421
        %v5584 = vmul.f32 %v5365, %v5365
        %v5585 = vmul.f32 %v5423, %v5423
        %v5586 = vmul.f32 %v5368, %v5368
        %v5587 = vmul.f32 %v5426, %v5426
        %v5588 = vmul.f32 %v5370, %v5370
        %v5589 = vmul.f32 %v5428, %v5428
        %v5590 = vadd.f32 %v5574, %v5575
        %5591 = vadd.xlane.f32.xlu0 %v5590
        %v5592 = vpop.xlane.xlu0 %5591
        %v5593 = vadd.f32 %v5576, %v5577
        %5594 = vadd.xlane.f32.xlu0 %v5593
        %v5595 = vpop.xlane.xlu0 %5594
        %v5596 = vadd.f32 %v5578, %v5579
        %5597 = vadd.xlane.f32.xlu0 %v5596
        %v5598 = vpop.xlane.xlu0 %5597
        %v5599 = vadd.f32 %v5580, %v5581
        %5600 = vadd.xlane.f32.xlu0 %v5599
        %v5601 = vpop.xlane.xlu0 %5600
        %v5602 = vadd.f32 %v5582, %v5583
        %5603 = vadd.xlane.f32.xlu0 %v5602
        %v5604 = vpop.xlane.xlu0 %5603
        %v5605 = vadd.f32 %v5584, %v5585
        %5606 = vadd.xlane.f32.xlu0 %v5605
        %v5607 = vpop.xlane.xlu0 %5606
        %v5608 = vadd.f32 %v5586, %v5587
        %5609 = vadd.xlane.f32.xlu0 %v5608
        %v5610 = vpop.xlane.xlu0 %5609
        %v5611 = vadd.f32 %v5588, %v5589
        %5612 = vadd.xlane.f32.xlu0 %v5611
        %v5613 = vpop.xlane.xlu0 %5612
        %v5614 = vmax.f32 %v5592, 1e-24
        %v5615 = vmax.f32 %v5595, 1e-24
        %v5616 = vmax.f32 %v5598, 1e-24
        %v5617 = vmax.f32 %v5601, 1e-24
        %v5618 = vmax.f32 %v5604, 1e-24
        %v5619 = vmax.f32 %v5607, 1e-24
        %v5620 = vmax.f32 %v5610, 1e-24
        %v5621 = vmax.f32 %v5613, 1e-24
        %v5622 = vrsqrt.pop %v5614
        %v5623 = vmul.f32 %v5622, %v5614
        %v5624 = vmul.f32 %v5623, %v5622
        %v5625 = vmul.f32 0.5, %v5624
        %v5626 = vsub.f32 1.5, %v5625
        %v5627 = vmul.f32 %v5622, %v5626
        %vm5628 = vweird.f32 %v5614
        %vm5629 = vweird.f32 %v5622
        %vm5630 = vmor %vm5628, %vm5629
        %v5631 = vsel %vm5630, %v5622, %v5627
        %v5632 = vrsqrt.pop %v5615
        %v5633 = vmul.f32 %v5632, %v5615
        %v5634 = vmul.f32 %v5633, %v5632
        %v5635 = vmul.f32 0.5, %v5634
        %v5636 = vsub.f32 1.5, %v5635
        %v5637 = vmul.f32 %v5632, %v5636
        %vm5638 = vweird.f32 %v5615
        %vm5639 = vweird.f32 %v5632
        %vm5640 = vmor %vm5638, %vm5639
        %v5641 = vsel %vm5640, %v5632, %v5637
        %v5642 = vrsqrt.pop %v5616
        %v5643 = vmul.f32 %v5642, %v5616
        %v5644 = vmul.f32 %v5643, %v5642
        %v5645 = vmul.f32 0.5, %v5644
        %v5646 = vsub.f32 1.5, %v5645
        %v5647 = vmul.f32 %v5642, %v5646
        %vm5648 = vweird.f32 %v5616
        %vm5649 = vweird.f32 %v5642
        %vm5650 = vmor %vm5648, %vm5649
        %v5651 = vsel %vm5650, %v5642, %v5647
        %v5652 = vrsqrt.pop %v5617
        %v5653 = vmul.f32 %v5652, %v5617
        %v5654 = vmul.f32 %v5653, %v5652
        %v5655 = vmul.f32 0.5, %v5654
        %v5656 = vsub.f32 1.5, %v5655
        %v5657 = vmul.f32 %v5652, %v5656
        %vm5658 = vweird.f32 %v5617
        %vm5659 = vweird.f32 %v5652
        %vm5660 = vmor %vm5658, %vm5659
        %v5661 = vsel %vm5660, %v5652, %v5657
        %v5662 = vrsqrt.pop %v5618
        %v5663 = vmul.f32 %v5662, %v5618
        %v5664 = vmul.f32 %v5663, %v5662
        %v5665 = vmul.f32 0.5, %v5664
        %v5666 = vsub.f32 1.5, %v5665
        %v5667 = vmul.f32 %v5662, %v5666
        %vm5668 = vweird.f32 %v5618
        %vm5669 = vweird.f32 %v5662
        %vm5670 = vmor %vm5668, %vm5669
        %v5671 = vsel %vm5670, %v5662, %v5667
        %v5672 = vrsqrt.pop %v5619
        %v5673 = vmul.f32 %v5672, %v5619
        %v5674 = vmul.f32 %v5673, %v5672
        %v5675 = vmul.f32 0.5, %v5674
        %v5676 = vsub.f32 1.5, %v5675
        %v5677 = vmul.f32 %v5672, %v5676
        %vm5678 = vweird.f32 %v5619
        %vm5679 = vweird.f32 %v5672
        %vm5680 = vmor %vm5678, %vm5679
        %v5681 = vsel %vm5680, %v5672, %v5677
        %v5682 = vrsqrt.pop %v5620
        %v5683 = vmul.f32 %v5682, %v5620
        %v5684 = vmul.f32 %v5683, %v5682
        %v5685 = vmul.f32 0.5, %v5684
        %v5686 = vsub.f32 1.5, %v5685
        %v5687 = vmul.f32 %v5682, %v5686
        %vm5688 = vweird.f32 %v5620
        %vm5689 = vweird.f32 %v5682
        %vm5690 = vmor %vm5688, %vm5689
        %v5691 = vsel %vm5690, %v5682, %v5687
        %v5692 = vrsqrt.pop %v5621
        %v5693 = vmul.f32 %v5692, %v5621
        %v5694 = vmul.f32 %v5693, %v5692
        %v5695 = vmul.f32 0.5, %v5694
        %v5696 = vsub.f32 1.5, %v5695
        %v5697 = vmul.f32 %v5692, %v5696
        %vm5698 = vweird.f32 %v5621
        %vm5699 = vweird.f32 %v5692
        %vm5700 = vmor %vm5698, %vm5699
        %v5701 = vsel %vm5700, %v5692, %v5697
        %v5702 = vmul.f32 %v5353, %v5631
        %v5703 = vmul.f32 %v5411, %v5631
        %v5704 = vmul.f32 %v5355, %v5641
        %v5705 = vmul.f32 %v5413, %v5641
        %v5706 = vmul.f32 %v5358, %v5651
        %v5707 = vmul.f32 %v5416, %v5651
        %v5708 = vmul.f32 %v5360, %v5661
        %v5709 = vmul.f32 %v5418, %v5661
        %v5710 = vmul.f32 %v5363, %v5671
        %v5711 = vmul.f32 %v5421, %v5671
        %v5712 = vmul.f32 %v5365, %v5681
        %v5713 = vmul.f32 %v5423, %v5681
        %v5714 = vmul.f32 %v5368, %v5691
        %v5715 = vmul.f32 %v5426, %v5691
        %v5716 = vmul.f32 %v5370, %v5701
        %v5717 = vmul.f32 %v5428, %v5701
        %v5718 = vmul.f32 %v5558, %v5702
        %v5719 = vmul.f32 %v5559, %v5703
        %v5720 = vmul.f32 %v5560, %v5704
        %v5721 = vmul.f32 %v5561, %v5705
        %v5722 = vmul.f32 %v5562, %v5706
        %v5723 = vmul.f32 %v5563, %v5707
        %v5724 = vmul.f32 %v5564, %v5708
        %v5725 = vmul.f32 %v5565, %v5709
        %v5726 = vmul.f32 %v5566, %v5710
        %v5727 = vmul.f32 %v5567, %v5711
        %v5728 = vmul.f32 %v5568, %v5712
        %v5729 = vmul.f32 %v5569, %v5713
        %v5730 = vmul.f32 %v5570, %v5714
        %v5731 = vmul.f32 %v5571, %v5715
        %v5732 = vmul.f32 %v5572, %v5716
        %v5733 = vmul.f32 %v5573, %v5717
        %v5734 = vadd.f32 %v5718, %v5719
        %5735 = vadd.xlane.f32.xlu0 %v5734
        %v5736 = vpop.xlane.xlu0 %5735
        %v5737 = vadd.f32 %v5720, %v5721
        %5738 = vadd.xlane.f32.xlu0 %v5737
        %v5739 = vpop.xlane.xlu0 %5738
        %v5740 = vadd.f32 %v5722, %v5723
        %5741 = vadd.xlane.f32.xlu0 %v5740
        %v5742 = vpop.xlane.xlu0 %5741
        %v5743 = vadd.f32 %v5724, %v5725
        %5744 = vadd.xlane.f32.xlu0 %v5743
        %v5745 = vpop.xlane.xlu0 %5744
        %v5746 = vadd.f32 %v5726, %v5727
        %5747 = vadd.xlane.f32.xlu0 %v5746
        %v5748 = vpop.xlane.xlu0 %5747
        %v5749 = vadd.f32 %v5728, %v5729
        %5750 = vadd.xlane.f32.xlu0 %v5749
        %v5751 = vpop.xlane.xlu0 %5750
        %v5752 = vadd.f32 %v5730, %v5731
        %5753 = vadd.xlane.f32.xlu0 %v5752
        %v5754 = vpop.xlane.xlu0 %5753
        %v5755 = vadd.f32 %v5732, %v5733
        %5756 = vadd.xlane.f32.xlu0 %v5755
        %v5757 = vpop.xlane.xlu0 %5756
        %s5758 = sld [smem:[#allocation2]]
        %s5759 = sld [smem:[#allocation3]]
        %v5760 = vsub.f32 1.0, %v5736
        %v5761 = vsub.f32 1.0, %v5739
        %v5762 = vsub.f32 1.0, %v5742
        %v5763 = vsub.f32 1.0, %v5745
        %v5764 = vsub.f32 1.0, %v5748
        %v5765 = vsub.f32 1.0, %v5751
        %v5766 = vsub.f32 1.0, %v5754
        %v5767 = vsub.f32 1.0, %v5757
        %v5768 = vmul.f32 %v5760, %v5760
        %v5769 = vmul.f32 %v5761, %v5761
        %v5770 = vmul.f32 %v5762, %v5762
        %v5771 = vmul.f32 %v5763, %v5763
        %v5772 = vmul.f32 %v5764, %v5764
        %v5773 = vmul.f32 %v5765, %v5765
        %v5774 = vmul.f32 %v5766, %v5766
        %v5775 = vmul.f32 %v5767, %v5767
        %v5776 = vsub.f32 0.0, %v5768
        %v5777 = vsub.f32 0.0, %v5769
        %v5778 = vsub.f32 0.0, %v5770
        %v5779 = vsub.f32 0.0, %v5771
        %v5780 = vsub.f32 0.0, %v5772
        %v5781 = vsub.f32 0.0, %v5773
        %v5782 = vsub.f32 0.0, %v5774
        %v5783 = vsub.f32 0.0, %v5775
        %s5784 = smul.f32 %s5759, 2.0
        %s5785 = smul.f32 %s5784, %s5759
        %v5786 = vstv %s5785
        %v5787 = vrcp.pop %v5786
        %v5788 = vmul.f32 %v5786, %v5787
        %v5789 = vsub.f32 1.0, %v5788
        %v5790 = vmul.f32 %v5787, %v5789
        %v5791 = vadd.f32 %v5787, %v5790
        %vm5792 = vweird.f32 %v5786
        %vm5793 = vweird.f32 %v5787
        %vm5794 = vmor %vm5792, %vm5793
        %v5795 = vsel %vm5794, %v5787, %v5791
        %v5796 = vand.u32 2147483647, %v5786
        %vm5797 = vcmp.eq.f32.partialorder %v5796, 8.507059e+37
        %v5798 = vand.u32 %v5786, 2147483648
        %v5799 = vor.u32 1.1754944e-38, %v5798
        %v5800 = vsel %vm5797, %v5799, %v5795
        %v5801 = vmul.f32 %v5776, %v5800
        %v5802 = vmul.f32 %v5777, %v5800
        %v5803 = vmul.f32 %v5778, %v5800
        %v5804 = vmul.f32 %v5779, %v5800
        %v5805 = vmul.f32 %v5780, %v5800
        %v5806 = vmul.f32 %v5781, %v5800
        %v5807 = vmul.f32 %v5782, %v5800
        %v5808 = vmul.f32 %v5783, %v5800
        %v5809 = vmul.f32 %v5801, 1.442695
        %v5810 = vpow.pop %v5809
        %v5811 = vmul.f32 %v5802, 1.442695
        %v5812 = vpow.pop %v5811
        %v5813 = vmul.f32 %v5803, 1.442695
        %v5814 = vpow.pop %v5813
        %v5815 = vmul.f32 %v5804, 1.442695
        %v5816 = vpow.pop %v5815
        %v5817 = vmul.f32 %v5805, 1.442695
        %v5818 = vpow.pop %v5817
        %v5819 = vmul.f32 %v5806, 1.442695
        %v5820 = vpow.pop %v5819
        %v5821 = vmul.f32 %v5807, 1.442695
        %v5822 = vpow.pop %v5821
        %v5823 = vmul.f32 %v5808, 1.442695
        %v5824 = vpow.pop %v5823
        %v5825 = vstv %s5758
        %v5826 = vmul.f32 %v5825, %v5810
        %v5827 = vmul.f32 %v5825, %v5812
        %v5828 = vmul.f32 %v5825, %v5814
        %v5829 = vmul.f32 %v5825, %v5816
        %v5830 = vmul.f32 %v5825, %v5818
        %v5831 = vmul.f32 %v5825, %v5820
        %v5832 = vmul.f32 %v5825, %v5822
        %v5833 = vmul.f32 %v5825, %v5824
        %vm5834 = vcmask 7168
        %5835 = vst.msk [vmem:[%s761] sm:$0xff] %vm5834, %v5826
        %5836 = vst.msk [vmem:[%s761 + $0x8] sm:$0xff] %vm5834, %v5827
        %5837 = vst.msk [vmem:[%s761 + $0x10] sm:$0xff] %vm5834, %v5828
        %5838 = vst.msk [vmem:[%s761 + $0x18] sm:$0xff] %vm5834, %v5829
        %5839 = vst.msk [vmem:[%s761 + $0x20] sm:$0xff] %vm5834, %v5830
        %5840 = vst.msk [vmem:[%s761 + $0x28] sm:$0xff] %vm5834, %v5831
        %5841 = vst.msk [vmem:[%s761 + $0x30] sm:$0xff] %vm5834, %v5832
        %5842 = vst.msk [vmem:[%s761 + $0x38] sm:$0xff] %vm5834, %v5833
        %s5843 = sand.u32 %s407, 1
        %s5844 = scalar_lea.sflag [#allocation6], %s5843
        %s5845 = sand.u32 %s407, 1
        %s5846 = smul.addr %s5845, 128
        %s5847 = scalar_lea.vmem [#allocation18], %s5846
        %p5848 = scmp.lt.s32.totalorder %s43, 1
        %s5849 = scalar_select %p5848, %s43, 1
        %s5850 = smul.addr %s5849, 8
        %s5851 = smul.addr %s5850, 8
        %s5852 = scalar_lea.vmem %s17, %s5851
        // Predicated region
        $region117: #{tpu_custom_call.1} parent=83 // pred_check
          %p5853 = pneg %p417
        $region118: #{tpu_custom_call.1} parent=83 // pred_check_branch
          %5855 = sbr.rel (%p5853) target = $region120
        $region119: #{tpu_custom_call.1} parent=83 // pred_region
          %5857 = vsyncadd %s5844, 0
          %s5858 = smul.addr %s43, 16
          %s5859 = smul.addr %s5858, 8
          %s5860 = scalar_lea.hbm %s16, %s5859
          %s5861 = sshll.u32 %s5847, 4
          %s5862 = int_to_ptr.vmem [resolvable:$true] %s5861
          %s5863 = sshll.u32 %s5860, 4
          %s5864 = int_to_ptr.hbm [resolvable:$true] %s5863
          %5869 = dma.vmem_to_hbm [thread:$0]  %s5862, 2048, %s5864, %s5844, 256, 256, 16
        $region120: #{tpu_custom_call.1} parent=83 // pred_fallthru
          _
        // Predicated region
        $region121: #{tpu_custom_call.1} parent=83 // pred_check
          %p5870 = pneg %p443
        $region122: #{tpu_custom_call.1} parent=83 // pred_check_branch
          %5872 = sbr.rel (%p5870) target = $region124
        $region123: #{tpu_custom_call.1} parent=83 // pred_region
          _
        $region124: #{tpu_custom_call.1} parent=83 // pred_fallthru
          _
      $region84: #{tpu_custom_call.1} parent=5 // pred_fallthru
        _
      %p5873 = scmp.le.s32.totalorder 2, %s38
      // Predicated region
      $region125: #{tpu_custom_call.1} parent=5 // pred_check
        %p5874 = pneg %p5873
      $region126: #{tpu_custom_call.1} parent=5 // pred_check_branch
        %5876 = sbr.rel (%p5874) target = $region128
      $region127: #{tpu_custom_call.1} parent=5 // pred_region
        %s5877 = ssub.s32 %s38, 2
        // Predicated region
        $region129: #{tpu_custom_call.1} parent=127 // pred_check
          %p5878 = pneg %p423
        $region130: #{tpu_custom_call.1} parent=127 // pred_check_branch
          %5880 = sbr.rel (%p5878) target = $region132
        $region131: #{tpu_custom_call.1} parent=127 // pred_region
          %s5881 = sand.u32 %s408, 1
          %s5882 = scalar_lea.sflag [#allocation6], %s5881
          %s5883 = sand.u32 %s408, 1
          %s5884 = smul.addr %s5883, 128
          %s5885 = scalar_lea.vmem [#allocation18], %s5884
          %5887 = dma.done %s5882, 2048
        $region132: #{tpu_custom_call.1} parent=127 // pred_fallthru
          _
        // Predicated region
        $region133: #{tpu_custom_call.1} parent=127 // pred_check
          %p5888 = pneg %p449
        $region134: #{tpu_custom_call.1} parent=127 // pred_check_branch
          %5890 = sbr.rel (%p5888) target = $region136
        $region135: #{tpu_custom_call.1} parent=127 // pred_region
          %p5891 = scmp.lt.s32.totalorder %s44, 1
          %s5892 = scalar_select %p5891, %s44, 1
          %s5893 = smul.addr %s5892, 8
          %s5894 = smul.addr %s5893, 8
          %s5895 = scalar_lea.vmem %s17, %s5894
        $region136: #{tpu_custom_call.1} parent=127 // pred_fallthru
          _
      $region128: #{tpu_custom_call.1} parent=5 // pred_fallthru
        _
    $region6: #{tpu_custom_call.1} parent=1 // loop_footer
      %s42 = sadd.s32 1, %s38
    $region7: #{tpu_custom_call.1} parent=1 // loop_footer_branch
      %37 = sbr.rel target = $region3
    $region8: #{tpu_custom_call.1} parent=1 // loop_exit
      _
    %5896 = vsyncpa [#allocation5], 1
    %s5897 = scalar_lea.sflag [#allocation5], 1
    %5898 = vsyncpa %s5897, 1
    %5899 = vsyncpa [#allocation8], 1
    %s5900 = scalar_lea.sflag [#allocation8], 1
    %5901 = vsyncpa %s5900, 1
    %5902 = vsyncpa [#allocation11], 1
    %5903 = vsyncpa [#allocation14], 1
    %5904 = vsyncpa [#allocation17], 1
    %5905 = vsyncpa [#allocation6], 1
    %s5906 = scalar_lea.sflag [#allocation6], 1
    %5907 = vsyncpa %s5906, 1

</llo_original>
